<compile_context>
chip_gen: v6e
topology: v6e:2x2x1
jax: 0.10.0
libtpu: 0.0.40
codegen_flags: <defaults>
</compile_context>

<pallas_src>
import math
from functools import partial

import numpy as np
import jax
import jax.numpy as jnp
from jax.experimental import pallas as pl
from jax.experimental.pallas import tpu as pltpu


# ----------------------------- in-kernel helpers ---------------------------

def _mm(a, b_bf16):
    """bf16 MXU matmul with f32 accumulation. `b_bf16` is already bf16."""
    return jnp.dot(a.astype(jnp.bfloat16), b_bf16,
                   preferred_element_type=jnp.float32)


def _layernorm(x, g, b, eps=1e-5):
    mu = jnp.mean(x, axis=-1, keepdims=True)
    var = jnp.mean((x - mu) ** 2, axis=-1, keepdims=True)
    return (x - mu) * jax.lax.rsqrt(var + eps) * g + b


def _fft_block(h, wqkv, bqkv, wo, vecs, w1, b1, w2, N, T, n_heads):
    """FastSpeech FFT block (MHSA + position-wise FFN + 2x LayerNorm), eval mode.

    h: (N*T, D) f32.  The 1/sqrt(dh) scale is folded into the Q columns of wqkv.
    Padding mask is identically zero (lengths == T) and dropout is identity, so
    both are constant-folded away.
    """
    NT, D = h.shape
    dh = D // n_heads

    bo, g1, be1 = vecs[0:1, :], vecs[1:2, :], vecs[2:3, :]
    b2, g2, be2 = vecs[3:4, :], vecs[4:5, :], vecs[5:6, :]

    # fused QKV projection; cast to bf16 ONCE, slice heads from the bf16 tensor
    qkv = _mm(h, wqkv) + bqkv                                  # (N*T, 3D) f32
    qkv_bf = qkv.reshape(N, T, 3 * D).astype(jnp.bfloat16)     # (N, T, 3D) bf16

    heads = []
    for hd in range(n_heads):
        c = hd * dh                                            # multiples of 128
        qh = qkv_bf[:, :, c:c + dh]                            # (N, T, dh)
        kh = qkv_bf[:, :, D + c:D + c + dh]
        vh = qkv_bf[:, :, 2 * D + c:2 * D + c + dh]
        s = jnp.einsum('nqd,nkd->nqk', qh, kh,
                       preferred_element_type=jnp.float32)     # (N, T, T)
        s = s - jnp.max(s, axis=-1, keepdims=True)
        p = jnp.exp(s)
        p = p * pl.reciprocal(jnp.sum(p, axis=-1, keepdims=True), approx=True)
        heads.append(jnp.einsum('nqk,nkd->nqd', p.astype(jnp.bfloat16), vh,
                                preferred_element_type=jnp.float32))  # (N,T,dh)
    ctx = jnp.concatenate(heads, axis=-1).reshape(NT, D)       # (N*T, D)

    attn_out = _mm(ctx, wo) + bo
    h1 = _layernorm(attn_out + h, g1, be1)

    ff = jnp.maximum(_mm(h1, w1) + b1, 0.0)
    ff2 = _mm(ff, w2) + b2
    return _layernorm(ff2 + h1, g2, be2)


# ------------------------------ fused kernel -------------------------------

def _disc_kernel(x_ref, pos_ref, bin_ref, win_ref,
                 wqkv_ref, bqkv_ref, wo_ref, vecs_ref, w1_ref, b1_ref, w2_ref,
                 midw_ref, midb_ref, clsw_ref, clsb_ref,
                 o_ref, h_ref,
                 *, n_heads, n_enc, n_layers, pool_k, N, T):
    li = pl.program_id(0)
    D = win_ref.shape[1]

    # ---- first grid step: input projection + encoder positional encoding ----
    @pl.when(li == 0)
    def _():
        h_ref[...] = _mm(x_ref[...], win_ref[...]) + bin_ref[...] + pos_ref[...]

    # ---- first decoder layer re-adds the positional encoding ----
    if n_enc > 0:
        @pl.when(li == n_enc)
        def _():
            h_ref[...] = h_ref[...] + pos_ref[...]

    # ---- this grid step's FFT block (weights streamed / prefetched per layer) ----
    h_new = _fft_block(h_ref[...],
                       wqkv_ref[0], bqkv_ref[0], wo_ref[0], vecs_ref[0],
                       w1_ref[0], b1_ref[0], w2_ref[0],
                       N, T, n_heads)
    h_ref[...] = h_new

    # ---- last layer: mid_linear + MaxPool1d(pool_k) + classify_linear + sigmoid ----
    @pl.when(li == n_layers - 1)
    def _():
        M2 = midw_ref.shape[2]
        h3 = h_new.reshape(N, T, D)
        # flatten(h3, 1) @ mid_w  ==  sum_t h3[:, t, :] @ mid_w[t]
        mid = jnp.zeros((N, M2), jnp.float32)
        for t in range(T):
            mid = mid + _mm(h3[:, t, :], midw_ref[t])
        mid = mid + midb_ref[...]

        n_win = M2 // pool_k
        pooled = jnp.concatenate(
            [jnp.max(mid[:, j * pool_k:(j + 1) * pool_k], axis=-1, keepdims=True)
             for j in range(n_win)], axis=-1)                      # (N, n_win)

        y = jnp.dot(pooled, clsw_ref[...],
                    preferred_element_type=jnp.float32) + clsb_ref[...]
        o_ref[...] = jax.nn.sigmoid(y)


# ------------------------------- model glue --------------------------------

def disc_forward(x, params, n_heads):
    """x: (N, n_mels, T) — same layout as the PyTorch module's input."""
    N, C, T = x.shape
    D = params["enc_in_w"].shape[1]
    dh = D // n_heads
    scale = 1.0 / math.sqrt(dh)
    bf16, f32 = jnp.bfloat16, jnp.float32
    NT = N * T

    # ---- layout prep in XLA (outside the kernel): flatten batch, tile pos ----
    x2 = jnp.transpose(x, (0, 2, 1)).reshape(NT, C).astype(f32)          # (N*T, C)
    pos_rows = jnp.tile(params["pos_enc"][:T], (N, 1)).astype(f32)       # (N*T, D)
    bin_ = params["enc_in_b"].reshape(1, D).astype(f32)
    win = params["enc_in_w"].astype(bf16)

    # ---- stack per-layer params: a handful of DMAs instead of 12 per layer ----
    layers = list(params["enc_layers"]) + list(params["dec_layers"])
    L = len(layers)
    wqkv = jnp.stack([jnp.concatenate([p["wq"] * scale, p["wk"], p["wv"]], axis=1)
                      for p in layers]).astype(bf16)                     # (L, D, 3D)
    bqkv = jnp.stack([jnp.concatenate([p["bq"] * scale, p["bk"], p["bv"]])[None, :]
                      for p in layers]).astype(f32)                      # (L, 1, 3D)
    wo = jnp.stack([p["wo"] for p in layers]).astype(bf16)               # (L, D, D)
    vecs = jnp.stack([jnp.stack([p["bo"], p["ln1_g"], p["ln1_b"],
                                 p["b2"], p["ln2_g"], p["ln2_b"]])
                      for p in layers]).astype(f32)                      # (L, 6, D)
    w1 = jnp.stack([p["w1"] for p in layers]).astype(bf16)               # (L, D, Dff)
    b1 = jnp.stack([p["b1"][None, :] for p in layers]).astype(f32)       # (L, 1, Dff)
    w2 = jnp.stack([p["w2"] for p in layers]).astype(bf16)               # (L, Dff, D)
    Dff = w1.shape[2]

    M2 = params["mid_w"].shape[1]
    midw = params["mid_w"].reshape(T, D, M2).astype(bf16)                # (T, D, M2)
    midb = params["mid_b"].reshape(1, M2).astype(f32)
    clsw = params["cls_w"].astype(f32)                                   # (16, 1)
    clsb = params["cls_b"].reshape(1, 1).astype(f32)

    n_enc = len(params["enc_layers"])
    kernel = partial(_disc_kernel, n_heads=n_heads, n_enc=n_enc,
                     n_layers=L, pool_k=16, N=N, T=T)

    c2 = lambda l: (0, 0)
    c3 = lambda l: (0, 0, 0)
    lyr = lambda l: (l, 0, 0)

    grid_spec = pltpu.PrefetchScalarGridSpec(
        num_scalar_prefetch=0,
        grid=(L,),
        in_specs=[
            pl.BlockSpec((NT, C), c2),             # x2              (constant)
            pl.BlockSpec((NT, D), c2),             # pos_rows        (constant)
            pl.BlockSpec((1, D), c2),              # enc_in bias     (constant)
            pl.BlockSpec((C, D), c2),              # enc_in weight   (constant)
            pl.BlockSpec((1, D, 3 * D), lyr),      # wqkv            (per layer)
            pl.BlockSpec((1, 1, 3 * D), lyr),      # bqkv            (per layer)
            pl.BlockSpec((1, D, D), lyr),          # wo              (per layer)
            pl.BlockSpec((1, 6, D), lyr),          # bo/ln1/b2/ln2   (per layer)
            pl.BlockSpec((1, D, Dff), lyr),        # w1              (per layer)
            pl.BlockSpec((1, 1, Dff), lyr),        # b1              (per layer)
            pl.BlockSpec((1, Dff, D), lyr),        # w2              (per layer)
            pl.BlockSpec((T, D, M2), c3),          # mid_w           (constant)
            pl.BlockSpec((1, M2), c2),             # mid_b           (constant)
            pl.BlockSpec(tuple(clsw.shape), c2),   # cls_w           (constant)
            pl.BlockSpec((1, 1), c2),              # cls_b           (constant)
        ],
        out_specs=pl.BlockSpec((N, 1), c2),
        scratch_shapes=[pltpu.VMEM((NT, D), jnp.float32)],   # carried hidden state
    )

    return pl.pallas_call(
        kernel,
        out_shape=jax.ShapeDtypeStruct((N, 1), jnp.float32),
        grid_spec=grid_spec,
        compiler_params=pltpu.CompilerParams(
            dimension_semantics=("arbitrary",),
            vmem_limit_bytes=32 * 1024 * 1024,
        ),
    )(x2, pos_rows, bin_, win, wqkv, bqkv, wo, vecs, w1, b1, w2,
      midw, midb, clsw, clsb)


# ------------------------------- parameters --------------------------------

def sinusoid_table(T, D):
    pos = np.arange(T)[:, None].astype(np.float64)
    i = np.arange(D)[None, :]
    angle = pos / np.power(10000.0, (2 * (i // 2)) / D)
    tbl = np.zeros((T, D), np.float32)
    tbl[:, 0::2] = np.sin(angle[:, 0::2])
    tbl[:, 1::2] = np.cos(angle[:, 1::2])
    return jnp.asarray(tbl)


def init_params(key, n_mels, d_model, d_ff, n_enc, n_dec, seq_len):
    keys = iter(jax.random.split(key, 256))

    def dense(fan_in, fan_out):
        return jax.random.normal(next(keys), (fan_in, fan_out), jnp.float32) * 0.02

    def block():
        return {
            "wq": dense(d_model, d_model), "bq": jnp.zeros((d_model,), jnp.float32),
            "wk": dense(d_model, d_model), "bk": jnp.zeros((d_model,), jnp.float32),
            "wv": dense(d_model, d_model), "bv": jnp.zeros((d_model,), jnp.float32),
            "wo": dense(d_model, d_model), "bo": jnp.zeros((d_model,), jnp.float32),
            "ln1_g": jnp.ones((d_model,), jnp.float32),
            "ln1_b": jnp.zeros((d_model,), jnp.float32),
            "w1": dense(d_model, d_ff), "b1": jnp.zeros((d_ff,), jnp.float32),
            "w2": dense(d_ff, d_model), "b2": jnp.zeros((d_model,), jnp.float32),
            "ln2_g": jnp.ones((d_model,), jnp.float32),
            "ln2_b": jnp.zeros((d_model,), jnp.float32),
        }

    return {
        "pos_enc": sinusoid_table(seq_len, d_model),
        "enc_in_w": dense(n_mels, d_model),
        "enc_in_b": jnp.zeros((d_model,), jnp.float32),
        "enc_layers": [block() for _ in range(n_enc)],
        "dec_layers": [block() for _ in range(n_dec)],
        # mid_linear: in_features = seq_len * 256, out_features = 256
        "mid_w": dense(seq_len * d_model, 256),
        "mid_b": jnp.zeros((256,), jnp.float32),
        # classify_linear: in_features = 16 (after MaxPool1d(16) on 256), out = 1
        "cls_w": dense(16, 1),
        "cls_b": jnp.zeros((1,), jnp.float32),
    }


# ---------------------------------- main ------------------------------------

if __name__ == "__main__":
    key = jax.random.PRNGKey(0)
    k_x, k_p = jax.random.split(key)

    N, C, T = 2, 16, 8            # batch, n_mels (feature channels), seq_len
    D_MODEL, D_FF, N_HEADS = 256, 256, 2

    x = jax.random.normal(k_x, (N, C, T), jnp.float32)
    params = init_params(k_p, n_mels=C, d_model=D_MODEL, d_ff=D_FF,
                         n_enc=1, n_dec=1, seq_len=T)

    fwd = jax.jit(partial(disc_forward, n_heads=N_HEADS))
    out = fwd(x, params)
    out = jax.block_until_ready(out)

    assert out.shape == (N, 1)
    assert bool(jnp.all(jnp.isfinite(out)))
    assert bool(jnp.all((out >= 0.0) & (out <= 1.0)))
    print("KERNEL_OK")
</pallas_src>

<mosaic_0001>
module attributes {stable_mosaic.version = 11 : i64} {
  func.func @_disc_kernel(%arg0: i32, %arg1: memref<16x16xf32, #tpu.memory_space<vmem>>, %arg2: memref<16x256xf32, #tpu.memory_space<vmem>>, %arg3: memref<1x256xf32, #tpu.memory_space<vmem>>, %arg4: memref<16x256xbf16, #tpu.memory_space<vmem>>, %arg5: memref<1x256x768xbf16, #tpu.memory_space<vmem>>, %arg6: memref<1x1x768xf32, #tpu.memory_space<vmem>>, %arg7: memref<1x256x256xbf16, #tpu.memory_space<vmem>>, %arg8: memref<1x6x256xf32, #tpu.memory_space<vmem>>, %arg9: memref<1x256x256xbf16, #tpu.memory_space<vmem>>, %arg10: memref<1x1x256xf32, #tpu.memory_space<vmem>>, %arg11: memref<1x256x256xbf16, #tpu.memory_space<vmem>>, %arg12: memref<8x256x256xbf16, #tpu.memory_space<vmem>>, %arg13: memref<1x256xf32, #tpu.memory_space<vmem>>, %arg14: memref<16x1xf32, #tpu.memory_space<vmem>>, %arg15: memref<1x1xf32, #tpu.memory_space<vmem>>, %arg16: memref<2x1xf32, #tpu.memory_space<vmem>>, %arg17: memref<16x256xf32, #tpu.memory_space<vmem>>) attributes {dimension_semantics = [#tpu.dimension_semantics<arbitrary>], iteration_bounds = array<i64: 2>, scalar_prefetch = 0 : i64, scratch_operands = 1 : i64, tpu.core_type = #tpu.core_type<tc>, window_params = [{pipeline_mode = #tpu.pipeline_mode<synchronous>, transform_indices = @transform_0, window_bounds = array<i64: 16, 16>}, {pipeline_mode = #tpu.pipeline_mode<synchronous>, transform_indices = @transform_1, window_bounds = array<i64: 16, 256>}, {pipeline_mode = #tpu.pipeline_mode<synchronous>, transform_indices = @transform_2, window_bounds = array<i64: 1, 256>}, {pipeline_mode = #tpu.pipeline_mode<synchronous>, transform_indices = @transform_3, window_bounds = array<i64: 16, 256>}, {transform_indices = @transform_4, window_bounds = array<i64: 1, 256, 768>}, {transform_indices = @transform_5, window_bounds = array<i64: 1, 1, 768>}, {transform_indices = @transform_6, window_bounds = array<i64: 1, 256, 256>}, {transform_indices = @transform_7, window_bounds = array<i64: 1, 6, 256>}, {transform_indices = @transform_8, window_bounds = array<i64: 1, 256, 256>}, {transform_indices = @transform_9, window_bounds = array<i64: 1, 1, 256>}, {transform_indices = @transform_10, window_bounds = array<i64: 1, 256, 256>}, {pipeline_mode = #tpu.pipeline_mode<synchronous>, transform_indices = @transform_11, window_bounds = array<i64: 8, 256, 256>}, {pipeline_mode = #tpu.pipeline_mode<synchronous>, transform_indices = @transform_12, window_bounds = array<i64: 1, 256>}, {pipeline_mode = #tpu.pipeline_mode<synchronous>, transform_indices = @transform_13, window_bounds = array<i64: 16, 1>}, {pipeline_mode = #tpu.pipeline_mode<synchronous>, transform_indices = @transform_14, window_bounds = array<i64: 1, 1>}, {pipeline_mode = #tpu.pipeline_mode<synchronous>, transform_indices = @transform_15, window_bounds = array<i64: 2, 1>}]} {
    %c0_i32 = arith.constant 0 : i32
    %0 = arith.cmpi eq, %arg0, %c0_i32 : i32
    %1 = arith.extui %0 : i1 to i32
    %c0_i32_0 = arith.constant 0 : i32
    %2 = arith.cmpi ne, %1, %c0_i32_0 : i32
    scf.if %2 {
      %c0_50 = arith.constant 0 : index
      %c0_51 = arith.constant 0 : index
      %131 = vector.load %arg1[%c0_50, %c0_51] : memref<16x16xf32, #tpu.memory_space<vmem>>, vector<16x16xf32>
      %c0_52 = arith.constant 0 : index
      %c0_53 = arith.constant 0 : index
      %132 = vector.load %arg4[%c0_52, %c0_53] : memref<16x256xbf16, #tpu.memory_space<vmem>>, vector<16x256xbf16>
      %133 = arith.truncf %131 : vector<16x16xf32> to vector<16x16xbf16>
      %cst_54 = arith.constant dense<0.000000e+00> : vector<16x256xf32>
      %134 = tpu.matmul %133, %132, %cst_54 {dimension_numbers = #tpu.dot_dimension_numbers<[1], [0], [0], [1], [0, 0, 1, 1], [], []>} : vector<16x16xbf16>, vector<16x256xbf16>, vector<16x256xf32> -> vector<16x256xf32>
      %c0_55 = arith.constant 0 : index
      %c0_56 = arith.constant 0 : index
      %135 = vector.load %arg3[%c0_55, %c0_56] : memref<1x256xf32, #tpu.memory_space<vmem>>, vector<1x256xf32>
      %136 = vector.broadcast %135 : vector<1x256xf32> to vector<16x256xf32>
      %137 = arith.addf %134, %136 : vector<16x256xf32>
      %c0_57 = arith.constant 0 : index
      %c0_58 = arith.constant 0 : index
      %138 = vector.load %arg2[%c0_57, %c0_58] : memref<16x256xf32, #tpu.memory_space<vmem>>, vector<16x256xf32>
      %139 = arith.addf %137, %138 : vector<16x256xf32>
      %c0_59 = arith.constant 0 : index
      %c0_60 = arith.constant 0 : index
      %140 = vector.load %arg17[%c0_59, %c0_60] : memref<16x256xf32, #tpu.memory_space<vmem>>, vector<16x256xf32>
      tpu.vector_store %arg17[%c0_59, %c0_60], %139 {strides = array<i32>} : memref<16x256xf32, #tpu.memory_space<vmem>>, vector<16x256xf32>,
    } else {
    }
    %c1_i32 = arith.constant 1 : i32
    %3 = arith.cmpi eq, %arg0, %c1_i32 : i32
    %4 = arith.extui %3 : i1 to i32
    %c0_i32_1 = arith.constant 0 : i32
    %5 = arith.cmpi ne, %4, %c0_i32_1 : i32
    scf.if %5 {
      %c0_50 = arith.constant 0 : index
      %c0_51 = arith.constant 0 : index
      %131 = vector.load %arg17[%c0_50, %c0_51] : memref<16x256xf32, #tpu.memory_space<vmem>>, vector<16x256xf32>
      %c0_52 = arith.constant 0 : index
      %c0_53 = arith.constant 0 : index
      %132 = vector.load %arg2[%c0_52, %c0_53] : memref<16x256xf32, #tpu.memory_space<vmem>>, vector<16x256xf32>
      %133 = arith.addf %131, %132 : vector<16x256xf32>
      %c0_54 = arith.constant 0 : index
      %c0_55 = arith.constant 0 : index
      %134 = vector.load %arg17[%c0_54, %c0_55] : memref<16x256xf32, #tpu.memory_space<vmem>>, vector<16x256xf32>
      tpu.vector_store %arg17[%c0_54, %c0_55], %133 {strides = array<i32>} : memref<16x256xf32, #tpu.memory_space<vmem>>, vector<16x256xf32>,
    } else {
    }
    %c0 = arith.constant 0 : index
    %c0_2 = arith.constant 0 : index
    %6 = vector.load %arg17[%c0, %c0_2] : memref<16x256xf32, #tpu.memory_space<vmem>>, vector<16x256xf32>
    %c0_3 = arith.constant 0 : index
    %c0_4 = arith.constant 0 : index
    %c0_5 = arith.constant 0 : index
    %7 = vector.load %arg5[%c0_3, %c0_4, %c0_5] : memref<1x256x768xbf16, #tpu.memory_space<vmem>>, vector<1x256x768xbf16>
    %8 = vector.shape_cast %7 : vector<1x256x768xbf16> to vector<256x768xbf16>
    %c0_6 = arith.constant 0 : index
    %c0_7 = arith.constant 0 : index
    %c0_8 = arith.constant 0 : index
    %9 = vector.load %arg6[%c0_6, %c0_7, %c0_8] : memref<1x1x768xf32, #tpu.memory_space<vmem>>, vector<1x1x768xf32>
    %10 = vector.shape_cast %9 : vector<1x1x768xf32> to vector<1x768xf32>
    %c0_9 = arith.constant 0 : index
    %c0_10 = arith.constant 0 : index
    %c0_11 = arith.constant 0 : index
    %11 = vector.load %arg7[%c0_9, %c0_10, %c0_11] : memref<1x256x256xbf16, #tpu.memory_space<vmem>>, vector<1x256x256xbf16>
    %12 = vector.shape_cast %11 : vector<1x256x256xbf16> to vector<256x256xbf16>
    %c0_12 = arith.constant 0 : index
    %c0_13 = arith.constant 0 : index
    %c0_14 = arith.constant 0 : index
    %13 = vector.load %arg8[%c0_12, %c0_13, %c0_14] : memref<1x6x256xf32, #tpu.memory_space<vmem>>, vector<1x6x256xf32>
    %14 = vector.shape_cast %13 : vector<1x6x256xf32> to vector<6x256xf32>
    %c0_15 = arith.constant 0 : index
    %c0_16 = arith.constant 0 : index
    %c0_17 = arith.constant 0 : index
    %15 = vector.load %arg9[%c0_15, %c0_16, %c0_17] : memref<1x256x256xbf16, #tpu.memory_space<vmem>>, vector<1x256x256xbf16>
    %16 = vector.shape_cast %15 : vector<1x256x256xbf16> to vector<256x256xbf16>
    %c0_18 = arith.constant 0 : index
    %c0_19 = arith.constant 0 : index
    %c0_20 = arith.constant 0 : index
    %17 = vector.load %arg10[%c0_18, %c0_19, %c0_20] : memref<1x1x256xf32, #tpu.memory_space<vmem>>, vector<1x1x256xf32>
    %18 = vector.shape_cast %17 : vector<1x1x256xf32> to vector<1x256xf32>
    %c0_21 = arith.constant 0 : index
    %c0_22 = arith.constant 0 : index
    %c0_23 = arith.constant 0 : index
    %19 = vector.load %arg11[%c0_21, %c0_22, %c0_23] : memref<1x256x256xbf16, #tpu.memory_space<vmem>>, vector<1x256x256xbf16>
    %20 = vector.shape_cast %19 : vector<1x256x256xbf16> to vector<256x256xbf16>
    %21 = vector.extract_strided_slice %14 {offsets = [0, 0], sizes = [1, 256], strides = [1, 1]} : vector<6x256xf32> to vector<1x256xf32>
    %22 = vector.extract_strided_slice %14 {offsets = [1, 0], sizes = [1, 256], strides = [1, 1]} : vector<6x256xf32> to vector<1x256xf32>
    %23 = vector.extract_strided_slice %14 {offsets = [2, 0], sizes = [1, 256], strides = [1, 1]} : vector<6x256xf32> to vector<1x256xf32>
    %24 = vector.extract_strided_slice %14 {offsets = [3, 0], sizes = [1, 256], strides = [1, 1]} : vector<6x256xf32> to vector<1x256xf32>
    %25 = vector.extract_strided_slice %14 {offsets = [4, 0], sizes = [1, 256], strides = [1, 1]} : vector<6x256xf32> to vector<1x256xf32>
    %26 = vector.extract_strided_slice %14 {offsets = [5, 0], sizes = [1, 256], strides = [1, 1]} : vector<6x256xf32> to vector<1x256xf32>
    %27 = arith.truncf %6 : vector<16x256xf32> to vector<16x256xbf16>
    %cst = arith.constant dense<0.000000e+00> : vector<16x768xf32>
    %28 = tpu.matmul %27, %8, %cst {dimension_numbers = #tpu.dot_dimension_numbers<[1], [0], [0], [1], [0, 0, 1, 1], [], []>} : vector<16x256xbf16>, vector<256x768xbf16>, vector<16x768xf32> -> vector<16x768xf32>
    %29 = vector.broadcast %10 : vector<1x768xf32> to vector<16x768xf32>
    %30 = arith.addf %28, %29 : vector<16x768xf32>
    %31 = vector.shape_cast %30 : vector<16x768xf32> to vector<2x8x768xf32>
    %32 = arith.truncf %31 : vector<2x8x768xf32> to vector<2x8x768xbf16>
    %33 = vector.extract_strided_slice %32 {offsets = [0, 0, 0], sizes = [2, 8, 128], strides = [1, 1, 1]} : vector<2x8x768xbf16> to vector<2x8x128xbf16>
    %34 = vector.extract_strided_slice %32 {offsets = [0, 0, 256], sizes = [2, 8, 128], strides = [1, 1, 1]} : vector<2x8x768xbf16> to vector<2x8x128xbf16>
    %35 = vector.extract_strided_slice %32 {offsets = [0, 0, 512], sizes = [2, 8, 128], strides = [1, 1, 1]} : vector<2x8x768xbf16> to vector<2x8x128xbf16>
    "tpu.trace_start"() <{level = 10 : i32, message = "nqd,nkd->nqk"}> : () -> ()
    %cst_24 = arith.constant dense<0.000000e+00> : vector<2x8x8xf32>
    %36 = tpu.matmul %33, %34, %cst_24 {dimension_numbers = #tpu.dot_dimension_numbers<[2], [2], [1], [1], [0, 0, 0, 1, 1, 1], [0], [0]>} : vector<2x8x128xbf16>, vector<2x8x128xbf16>, vector<2x8x8xf32> -> vector<2x8x8xf32>
    "tpu.trace_stop"() : () -> ()
    %cst_25 = arith.constant dense<0xFF800000> : vector<2x8xf32>
    %37 = vector.multi_reduction <maximumf>, %36, %cst_25 [2] : vector<2x8x8xf32> to vector<2x8xf32>
    %38 = vector.shape_cast %37 : vector<2x8xf32> to vector<2x8x1xf32>
    %39 = vector.broadcast %38 : vector<2x8x1xf32> to vector<2x8x8xf32>
    %40 = arith.subf %36, %39 : vector<2x8x8xf32>
    %41 = math.exp %40 : vector<2x8x8xf32>
    %cst_26 = arith.constant dense<0.000000e+00> : vector<2x8xf32>
    %42 = vector.multi_reduction <add>, %41, %cst_26 [2] : vector<2x8x8xf32> to vector<2x8xf32>
    %43 = vector.shape_cast %42 : vector<2x8xf32> to vector<2x8x1xf32>
    %44 = tpu.reciprocal %43 {approx = true} : vector<2x8x1xf32> -> vector<2x8x1xf32>
    %45 = vector.broadcast %44 : vector<2x8x1xf32> to vector<2x8x8xf32>
    %46 = arith.mulf %41, %45 : vector<2x8x8xf32>
    %47 = arith.truncf %46 : vector<2x8x8xf32> to vector<2x8x8xbf16>
    "tpu.trace_start"() <{level = 10 : i32, message = "nqk,nkd->nqd"}> : () -> ()
    %cst_27 = arith.constant dense<0.000000e+00> : vector<2x8x128xf32>
    %48 = tpu.matmul %47, %35, %cst_27 {dimension_numbers = #tpu.dot_dimension_numbers<[2], [1], [1], [2], [0, 0, 0, 1, 1, 2], [0], [0]>} : vector<2x8x8xbf16>, vector<2x8x128xbf16>, vector<2x8x128xf32> -> vector<2x8x128xf32>
    "tpu.trace_stop"() : () -> ()
    %49 = vector.extract_strided_slice %32 {offsets = [0, 0, 128], sizes = [2, 8, 128], strides = [1, 1, 1]} : vector<2x8x768xbf16> to vector<2x8x128xbf16>
    %50 = vector.extract_strided_slice %32 {offsets = [0, 0, 384], sizes = [2, 8, 128], strides = [1, 1, 1]} : vector<2x8x768xbf16> to vector<2x8x128xbf16>
    %51 = vector.extract_strided_slice %32 {offsets = [0, 0, 640], sizes = [2, 8, 128], strides = [1, 1, 1]} : vector<2x8x768xbf16> to vector<2x8x128xbf16>
    "tpu.trace_start"() <{level = 10 : i32, message = "nqd,nkd->nqk"}> : () -> ()
    %cst_28 = arith.constant dense<0.000000e+00> : vector<2x8x8xf32>
    %52 = tpu.matmul %49, %50, %cst_28 {dimension_numbers = #tpu.dot_dimension_numbers<[2], [2], [1], [1], [0, 0, 0, 1, 1, 1], [0], [0]>} : vector<2x8x128xbf16>, vector<2x8x128xbf16>, vector<2x8x8xf32> -> vector<2x8x8xf32>
    "tpu.trace_stop"() : () -> ()
    %cst_29 = arith.constant dense<0xFF800000> : vector<2x8xf32>
    %53 = vector.multi_reduction <maximumf>, %52, %cst_29 [2] : vector<2x8x8xf32> to vector<2x8xf32>
    %54 = vector.shape_cast %53 : vector<2x8xf32> to vector<2x8x1xf32>
    %55 = vector.broadcast %54 : vector<2x8x1xf32> to vector<2x8x8xf32>
    %56 = arith.subf %52, %55 : vector<2x8x8xf32>
    %57 = math.exp %56 : vector<2x8x8xf32>
    %cst_30 = arith.constant dense<0.000000e+00> : vector<2x8xf32>
    %58 = vector.multi_reduction <add>, %57, %cst_30 [2] : vector<2x8x8xf32> to vector<2x8xf32>
    %59 = vector.shape_cast %58 : vector<2x8xf32> to vector<2x8x1xf32>
    %60 = tpu.reciprocal %59 {approx = true} : vector<2x8x1xf32> -> vector<2x8x1xf32>
    %61 = vector.broadcast %60 : vector<2x8x1xf32> to vector<2x8x8xf32>
    %62 = arith.mulf %57, %61 : vector<2x8x8xf32>
    %63 = arith.truncf %62 : vector<2x8x8xf32> to vector<2x8x8xbf16>
    "tpu.trace_start"() <{level = 10 : i32, message = "nqk,nkd->nqd"}> : () -> ()
    %cst_31 = arith.constant dense<0.000000e+00> : vector<2x8x128xf32>
    %64 = tpu.matmul %63, %51, %cst_31 {dimension_numbers = #tpu.dot_dimension_numbers<[2], [1], [1], [2], [0, 0, 0, 1, 1, 2], [0], [0]>} : vector<2x8x8xbf16>, vector<2x8x128xbf16>, vector<2x8x128xf32> -> vector<2x8x128xf32>
    "tpu.trace_stop"() : () -> ()
    %65 = tpu.concatenate %48, %64 in 2 : vector<2x8x128xf32>, vector<2x8x128xf32> -> vector<2x8x256xf32>
    %66 = vector.shape_cast %65 : vector<2x8x256xf32> to vector<16x256xf32>
    %67 = arith.truncf %66 : vector<16x256xf32> to vector<16x256xbf16>
    %cst_32 = arith.constant dense<0.000000e+00> : vector<16x256xf32>
    %68 = tpu.matmul %67, %12, %cst_32 {dimension_numbers = #tpu.dot_dimension_numbers<[1], [0], [0], [1], [0, 0, 1, 1], [], []>} : vector<16x256xbf16>, vector<256x256xbf16>, vector<16x256xf32> -> vector<16x256xf32>
    %69 = vector.broadcast %21 : vector<1x256xf32> to vector<16x256xf32>
    %70 = arith.addf %68, %69 : vector<16x256xf32>
    %71 = arith.addf %70, %6 : vector<16x256xf32>
    %cst_33 = arith.constant dense<0.000000e+00> : vector<16xf32>
    %72 = vector.multi_reduction <add>, %71, %cst_33 [1] : vector<16x256xf32> to vector<16xf32>
    %73 = vector.shape_cast %72 : vector<16xf32> to vector<16x1xf32>
    %cst_34 = arith.constant 2.560000e+02 : f32
    %74 = vector.broadcast %cst_34 : f32 to vector<16x1xf32>
    %75 = arith.divf %73, %74 : vector<16x1xf32>
    %76 = vector.broadcast %75 : vector<16x1xf32> to vector<16x256xf32>
    %77 = arith.subf %71, %76 : vector<16x256xf32>
    %78 = arith.mulf %77, %77 : vector<16x256xf32>
    %cst_35 = arith.constant dense<0.000000e+00> : vector<16xf32>
    %79 = vector.multi_reduction <add>, %78, %cst_35 [1] : vector<16x256xf32> to vector<16xf32>
    %80 = vector.shape_cast %79 : vector<16xf32> to vector<16x1xf32>
    %cst_36 = arith.constant 2.560000e+02 : f32
    %81 = vector.broadcast %cst_36 : f32 to vector<16x1xf32>
    %82 = arith.divf %80, %81 : vector<16x1xf32>
    %83 = vector.broadcast %75 : vector<16x1xf32> to vector<16x256xf32>
    %84 = arith.subf %71, %83 : vector<16x256xf32>
    %cst_37 = arith.constant 9.99999974E-6 : f32
    %85 = vector.broadcast %cst_37 : f32 to vector<16x1xf32>
    %86 = arith.addf %82, %85 : vector<16x1xf32>
    %87 = math.rsqrt %86 : vector<16x1xf32>
    %88 = vector.broadcast %87 : vector<16x1xf32> to vector<16x256xf32>
    %89 = arith.mulf %84, %88 : vector<16x256xf32>
    %90 = vector.broadcast %22 : vector<1x256xf32> to vector<16x256xf32>
    %91 = arith.mulf %89, %90 : vector<16x256xf32>
    %92 = vector.broadcast %23 : vector<1x256xf32> to vector<16x256xf32>
    %93 = arith.addf %91, %92 : vector<16x256xf32>
    %94 = arith.truncf %93 : vector<16x256xf32> to vector<16x256xbf16>
    %cst_38 = arith.constant dense<0.000000e+00> : vector<16x256xf32>
    %95 = tpu.matmul %94, %16, %cst_38 {dimension_numbers = #tpu.dot_dimension_numbers<[1], [0], [0], [1], [0, 0, 1, 1], [], []>} : vector<16x256xbf16>, vector<256x256xbf16>, vector<16x256xf32> -> vector<16x256xf32>
    %96 = vector.broadcast %18 : vector<1x256xf32> to vector<16x256xf32>
    %97 = arith.addf %95, %96 : vector<16x256xf32>
    %cst_39 = arith.constant 0.000000e+00 : f32
    %98 = vector.broadcast %cst_39 : f32 to vector<16x256xf32>
    %99 = arith.maximumf %97, %98 : vector<16x256xf32>
    %100 = arith.truncf %99 : vector<16x256xf32> to vector<16x256xbf16>
    %cst_40 = arith.constant dense<0.000000e+00> : vector<16x256xf32>
    %101 = tpu.matmul %100, %20, %cst_40 {dimension_numbers = #tpu.dot_dimension_numbers<[1], [0], [0], [1], [0, 0, 1, 1], [], []>} : vector<16x256xbf16>, vector<256x256xbf16>, vector<16x256xf32> -> vector<16x256xf32>
    %102 = vector.broadcast %24 : vector<1x256xf32> to vector<16x256xf32>
    %103 = arith.addf %101, %102 : vector<16x256xf32>
    %104 = arith.addf %103, %93 : vector<16x256xf32>
    %cst_41 = arith.constant dense<0.000000e+00> : vector<16xf32>
    %105 = vector.multi_reduction <add>, %104, %cst_41 [1] : vector<16x256xf32> to vector<16xf32>
    %106 = vector.shape_cast %105 : vector<16xf32> to vector<16x1xf32>
    %cst_42 = arith.constant 2.560000e+02 : f32
    %107 = vector.broadcast %cst_42 : f32 to vector<16x1xf32>
    %108 = arith.divf %106, %107 : vector<16x1xf32>
    %109 = vector.broadcast %108 : vector<16x1xf32> to vector<16x256xf32>
    %110 = arith.subf %104, %109 : vector<16x256xf32>
    %111 = arith.mulf %110, %110 : vector<16x256xf32>
    %cst_43 = arith.constant dense<0.000000e+00> : vector<16xf32>
    %112 = vector.multi_reduction <add>, %111, %cst_43 [1] : vector<16x256xf32> to vector<16xf32>
    %113 = vector.shape_cast %112 : vector<16xf32> to vector<16x1xf32>
    %cst_44 = arith.constant 2.560000e+02 : f32
    %114 = vector.broadcast %cst_44 : f32 to vector<16x1xf32>
    %115 = arith.divf %113, %114 : vector<16x1xf32>
    %116 = vector.broadcast %108 : vector<16x1xf32> to vector<16x256xf32>
    %117 = arith.subf %104, %116 : vector<16x256xf32>
    %cst_45 = arith.constant 9.99999974E-6 : f32
    %118 = vector.broadcast %cst_45 : f32 to vector<16x1xf32>
    %119 = arith.addf %115, %118 : vector<16x1xf32>
    %120 = math.rsqrt %119 : vector<16x1xf32>
    %121 = vector.broadcast %120 : vector<16x1xf32> to vector<16x256xf32>
    %122 = arith.mulf %117, %121 : vector<16x256xf32>
    %123 = vector.broadcast %25 : vector<1x256xf32> to vector<16x256xf32>
    %124 = arith.mulf %122, %123 : vector<16x256xf32>
    %125 = vector.broadcast %26 : vector<1x256xf32> to vector<16x256xf32>
    %126 = arith.addf %124, %125 : vector<16x256xf32>
    %c0_46 = arith.constant 0 : index
    %c0_47 = arith.constant 0 : index
    %127 = vector.load %arg17[%c0_46, %c0_47] : memref<16x256xf32, #tpu.memory_space<vmem>>, vector<16x256xf32>
    tpu.vector_store %arg17[%c0_46, %c0_47], %126 {strides = array<i32>} : memref<16x256xf32, #tpu.memory_space<vmem>>, vector<16x256xf32>,
    %c1_i32_48 = arith.constant 1 : i32
    %128 = arith.cmpi eq, %arg0, %c1_i32_48 : i32
    %129 = arith.extui %128 : i1 to i32
    %c0_i32_49 = arith.constant 0 : i32
    %130 = arith.cmpi ne, %129, %c0_i32_49 : i32
    scf.if %130 {
      %131 = vector.shape_cast %126 : vector<16x256xf32> to vector<2x8x256xf32>
      %cst_50 = arith.constant 0.000000e+00 : f32
      %132 = vector.broadcast %cst_50 : f32 to vector<2x256xf32>
      %133 = vector.extract_strided_slice %131 {offsets = [0, 0, 0], sizes = [2, 1, 256], strides = [1, 1, 1]} : vector<2x8x256xf32> to vector<2x1x256xf32>
      %134 = vector.shape_cast %133 : vector<2x1x256xf32> to vector<2x256xf32>
      %c0_51 = arith.constant 0 : index
      %c0_52 = arith.constant 0 : index
      %c0_53 = arith.constant 0 : index
      %135 = vector.load %arg12[%c0_51, %c0_52, %c0_53] : memref<8x256x256xbf16, #tpu.memory_space<vmem>>, vector<1x256x256xbf16>
      %136 = vector.shape_cast %135 : vector<1x256x256xbf16> to vector<256x256xbf16>
      %137 = arith.truncf %134 : vector<2x256xf32> to vector<2x256xbf16>
      %cst_54 = arith.constant dense<0.000000e+00> : vector<2x256xf32>
      %138 = tpu.matmul %137, %136, %cst_54 {dimension_numbers = #tpu.dot_dimension_numbers<[1], [0], [0], [1], [0, 0, 1, 1], [], []>} : vector<2x256xbf16>, vector<256x256xbf16>, vector<2x256xf32> -> vector<2x256xf32>
      %139 = arith.addf %132, %138 : vector<2x256xf32>
      %140 = vector.extract_strided_slice %131 {offsets = [0, 1, 0], sizes = [2, 1, 256], strides = [1, 1, 1]} : vector<2x8x256xf32> to vector<2x1x256xf32>
      %141 = vector.shape_cast %140 : vector<2x1x256xf32> to vector<2x256xf32>
      %c1 = arith.constant 1 : index
      %c0_55 = arith.constant 0 : index
      %c0_56 = arith.constant 0 : index
      %142 = vector.load %arg12[%c1, %c0_55, %c0_56] : memref<8x256x256xbf16, #tpu.memory_space<vmem>>, vector<1x256x256xbf16>
      %143 = vector.shape_cast %142 : vector<1x256x256xbf16> to vector<256x256xbf16>
      %144 = arith.truncf %141 : vector<2x256xf32> to vector<2x256xbf16>
      %cst_57 = arith.constant dense<0.000000e+00> : vector<2x256xf32>
      %145 = tpu.matmul %144, %143, %cst_57 {dimension_numbers = #tpu.dot_dimension_numbers<[1], [0], [0], [1], [0, 0, 1, 1], [], []>} : vector<2x256xbf16>, vector<256x256xbf16>, vector<2x256xf32> -> vector<2x256xf32>
      %146 = arith.addf %139, %145 : vector<2x256xf32>
      %147 = vector.extract_strided_slice %131 {offsets = [0, 2, 0], sizes = [2, 1, 256], strides = [1, 1, 1]} : vector<2x8x256xf32> to vector<2x1x256xf32>
      %148 = vector.shape_cast %147 : vector<2x1x256xf32> to vector<2x256xf32>
      %c2 = arith.constant 2 : index
      %c0_58 = arith.constant 0 : index
      %c0_59 = arith.constant 0 : index
      %149 = vector.load %arg12[%c2, %c0_58, %c0_59] : memref<8x256x256xbf16, #tpu.memory_space<vmem>>, vector<1x256x256xbf16>
      %150 = vector.shape_cast %149 : vector<1x256x256xbf16> to vector<256x256xbf16>
      %151 = arith.truncf %148 : vector<2x256xf32> to vector<2x256xbf16>
      %cst_60 = arith.constant dense<0.000000e+00> : vector<2x256xf32>
      %152 = tpu.matmul %151, %150, %cst_60 {dimension_numbers = #tpu.dot_dimension_numbers<[1], [0], [0], [1], [0, 0, 1, 1], [], []>} : vector<2x256xbf16>, vector<256x256xbf16>, vector<2x256xf32> -> vector<2x256xf32>
      %153 = arith.addf %146, %152 : vector<2x256xf32>
      %154 = vector.extract_strided_slice %131 {offsets = [0, 3, 0], sizes = [2, 1, 256], strides = [1, 1, 1]} : vector<2x8x256xf32> to vector<2x1x256xf32>
      %155 = vector.shape_cast %154 : vector<2x1x256xf32> to vector<2x256xf32>
      %c3 = arith.constant 3 : index
      %c0_61 = arith.constant 0 : index
      %c0_62 = arith.constant 0 : index
      %156 = vector.load %arg12[%c3, %c0_61, %c0_62] : memref<8x256x256xbf16, #tpu.memory_space<vmem>>, vector<1x256x256xbf16>
      %157 = vector.shape_cast %156 : vector<1x256x256xbf16> to vector<256x256xbf16>
      %158 = arith.truncf %155 : vector<2x256xf32> to vector<2x256xbf16>
      %cst_63 = arith.constant dense<0.000000e+00> : vector<2x256xf32>
      %159 = tpu.matmul %158, %157, %cst_63 {dimension_numbers = #tpu.dot_dimension_numbers<[1], [0], [0], [1], [0, 0, 1, 1], [], []>} : vector<2x256xbf16>, vector<256x256xbf16>, vector<2x256xf32> -> vector<2x256xf32>
      %160 = arith.addf %153, %159 : vector<2x256xf32>
      %161 = vector.extract_strided_slice %131 {offsets = [0, 4, 0], sizes = [2, 1, 256], strides = [1, 1, 1]} : vector<2x8x256xf32> to vector<2x1x256xf32>
      %162 = vector.shape_cast %161 : vector<2x1x256xf32> to vector<2x256xf32>
      %c4 = arith.constant 4 : index
      %c0_64 = arith.constant 0 : index
      %c0_65 = arith.constant 0 : index
      %163 = vector.load %arg12[%c4, %c0_64, %c0_65] : memref<8x256x256xbf16, #tpu.memory_space<vmem>>, vector<1x256x256xbf16>
      %164 = vector.shape_cast %163 : vector<1x256x256xbf16> to vector<256x256xbf16>
      %165 = arith.truncf %162 : vector<2x256xf32> to vector<2x256xbf16>
      %cst_66 = arith.constant dense<0.000000e+00> : vector<2x256xf32>
      %166 = tpu.matmul %165, %164, %cst_66 {dimension_numbers = #tpu.dot_dimension_numbers<[1], [0], [0], [1], [0, 0, 1, 1], [], []>} : vector<2x256xbf16>, vector<256x256xbf16>, vector<2x256xf32> -> vector<2x256xf32>
      %167 = arith.addf %160, %166 : vector<2x256xf32>
      %168 = vector.extract_strided_slice %131 {offsets = [0, 5, 0], sizes = [2, 1, 256], strides = [1, 1, 1]} : vector<2x8x256xf32> to vector<2x1x256xf32>
      %169 = vector.shape_cast %168 : vector<2x1x256xf32> to vector<2x256xf32>
      %c5 = arith.constant 5 : index
      %c0_67 = arith.constant 0 : index
      %c0_68 = arith.constant 0 : index
      %170 = vector.load %arg12[%c5, %c0_67, %c0_68] : memref<8x256x256xbf16, #tpu.memory_space<vmem>>, vector<1x256x256xbf16>
      %171 = vector.shape_cast %170 : vector<1x256x256xbf16> to vector<256x256xbf16>
      %172 = arith.truncf %169 : vector<2x256xf32> to vector<2x256xbf16>
      %cst_69 = arith.constant dense<0.000000e+00> : vector<2x256xf32>
      %173 = tpu.matmul %172, %171, %cst_69 {dimension_numbers = #tpu.dot_dimension_numbers<[1], [0], [0], [1], [0, 0, 1, 1], [], []>} : vector<2x256xbf16>, vector<256x256xbf16>, vector<2x256xf32> -> vector<2x256xf32>
      %174 = arith.addf %167, %173 : vector<2x256xf32>
      %175 = vector.extract_strided_slice %131 {offsets = [0, 6, 0], sizes = [2, 1, 256], strides = [1, 1, 1]} : vector<2x8x256xf32> to vector<2x1x256xf32>
      %176 = vector.shape_cast %175 : vector<2x1x256xf32> to vector<2x256xf32>
      %c6 = arith.constant 6 : index
      %c0_70 = arith.constant 0 : index
      %c0_71 = arith.constant 0 : index
      %177 = vector.load %arg12[%c6, %c0_70, %c0_71] : memref<8x256x256xbf16, #tpu.memory_space<vmem>>, vector<1x256x256xbf16>
      %178 = vector.shape_cast %177 : vector<1x256x256xbf16> to vector<256x256xbf16>
      %179 = arith.truncf %176 : vector<2x256xf32> to vector<2x256xbf16>
      %cst_72 = arith.constant dense<0.000000e+00> : vector<2x256xf32>
      %180 = tpu.matmul %179, %178, %cst_72 {dimension_numbers = #tpu.dot_dimension_numbers<[1], [0], [0], [1], [0, 0, 1, 1], [], []>} : vector<2x256xbf16>, vector<256x256xbf16>, vector<2x256xf32> -> vector<2x256xf32>
      %181 = arith.addf %174, %180 : vector<2x256xf32>
      %182 = vector.extract_strided_slice %131 {offsets = [0, 7, 0], sizes = [2, 1, 256], strides = [1, 1, 1]} : vector<2x8x256xf32> to vector<2x1x256xf32>
      %183 = vector.shape_cast %182 : vector<2x1x256xf32> to vector<2x256xf32>
      %c7 = arith.constant 7 : index
      %c0_73 = arith.constant 0 : index
      %c0_74 = arith.constant 0 : index
      %184 = vector.load %arg12[%c7, %c0_73, %c0_74] : memref<8x256x256xbf16, #tpu.memory_space<vmem>>, vector<1x256x256xbf16>
      %185 = vector.shape_cast %184 : vector<1x256x256xbf16> to vector<256x256xbf16>
      %186 = arith.truncf %183 : vector<2x256xf32> to vector<2x256xbf16>
      %cst_75 = arith.constant dense<0.000000e+00> : vector<2x256xf32>
      %187 = tpu.matmul %186, %185, %cst_75 {dimension_numbers = #tpu.dot_dimension_numbers<[1], [0], [0], [1], [0, 0, 1, 1], [], []>} : vector<2x256xbf16>, vector<256x256xbf16>, vector<2x256xf32> -> vector<2x256xf32>
      %188 = arith.addf %181, %187 : vector<2x256xf32>
      %c0_76 = arith.constant 0 : index
      %c0_77 = arith.constant 0 : index
      %189 = vector.load %arg13[%c0_76, %c0_77] : memref<1x256xf32, #tpu.memory_space<vmem>>, vector<1x256xf32>
      %190 = vector.broadcast %189 : vector<1x256xf32> to vector<2x256xf32>
      %191 = arith.addf %188, %190 : vector<2x256xf32>
      %192 = vector.extract_strided_slice %191 {offsets = [0, 0], sizes = [2, 16], strides = [1, 1]} : vector<2x256xf32> to vector<2x16xf32>
      %cst_78 = arith.constant dense<0xFF800000> : vector<2xf32>
      %193 = vector.multi_reduction <maximumf>, %192, %cst_78 [1] : vector<2x16xf32> to vector<2xf32>
      %194 = vector.shape_cast %193 : vector<2xf32> to vector<2x1xf32>
      %195 = vector.extract_strided_slice %191 {offsets = [0, 16], sizes = [2, 16], strides = [1, 1]} : vector<2x256xf32> to vector<2x16xf32>
      %cst_79 = arith.constant dense<0xFF800000> : vector<2xf32>
      %196 = vector.multi_reduction <maximumf>, %195, %cst_79 [1] : vector<2x16xf32> to vector<2xf32>
      %197 = vector.shape_cast %196 : vector<2xf32> to vector<2x1xf32>
      %198 = vector.extract_strided_slice %191 {offsets = [0, 32], sizes = [2, 16], strides = [1, 1]} : vector<2x256xf32> to vector<2x16xf32>
      %cst_80 = arith.constant dense<0xFF800000> : vector<2xf32>
      %199 = vector.multi_reduction <maximumf>, %198, %cst_80 [1] : vector<2x16xf32> to vector<2xf32>
      %200 = vector.shape_cast %199 : vector<2xf32> to vector<2x1xf32>
      %201 = vector.extract_strided_slice %191 {offsets = [0, 48], sizes = [2, 16], strides = [1, 1]} : vector<2x256xf32> to vector<2x16xf32>
      %cst_81 = arith.constant dense<0xFF800000> : vector<2xf32>
      %202 = vector.multi_reduction <maximumf>, %201, %cst_81 [1] : vector<2x16xf32> to vector<2xf32>
      %203 = vector.shape_cast %202 : vector<2xf32> to vector<2x1xf32>
      %204 = vector.extract_strided_slice %191 {offsets = [0, 64], sizes = [2, 16], strides = [1, 1]} : vector<2x256xf32> to vector<2x16xf32>
      %cst_82 = arith.constant dense<0xFF800000> : vector<2xf32>
      %205 = vector.multi_reduction <maximumf>, %204, %cst_82 [1] : vector<2x16xf32> to vector<2xf32>
      %206 = vector.shape_cast %205 : vector<2xf32> to vector<2x1xf32>
      %207 = vector.extract_strided_slice %191 {offsets = [0, 80], sizes = [2, 16], strides = [1, 1]} : vector<2x256xf32> to vector<2x16xf32>
      %cst_83 = arith.constant dense<0xFF800000> : vector<2xf32>
      %208 = vector.multi_reduction <maximumf>, %207, %cst_83 [1] : vector<2x16xf32> to vector<2xf32>
      %209 = vector.shape_cast %208 : vector<2xf32> to vector<2x1xf32>
      %210 = vector.extract_strided_slice %191 {offsets = [0, 96], sizes = [2, 16], strides = [1, 1]} : vector<2x256xf32> to vector<2x16xf32>
      %cst_84 = arith.constant dense<0xFF800000> : vector<2xf32>
      %211 = vector.multi_reduction <maximumf>, %210, %cst_84 [1] : vector<2x16xf32> to vector<2xf32>
      %212 = vector.shape_cast %211 : vector<2xf32> to vector<2x1xf32>
      %213 = vector.extract_strided_slice %191 {offsets = [0, 112], sizes = [2, 16], strides = [1, 1]} : vector<2x256xf32> to vector<2x16xf32>
      %cst_85 = arith.constant dense<0xFF800000> : vector<2xf32>
      %214 = vector.multi_reduction <maximumf>, %213, %cst_85 [1] : vector<2x16xf32> to vector<2xf32>
      %215 = vector.shape_cast %214 : vector<2xf32> to vector<2x1xf32>
      %216 = vector.extract_strided_slice %191 {offsets = [0, 128], sizes = [2, 16], strides = [1, 1]} : vector<2x256xf32> to vector<2x16xf32>
      %cst_86 = arith.constant dense<0xFF800000> : vector<2xf32>
      %217 = vector.multi_reduction <maximumf>, %216, %cst_86 [1] : vector<2x16xf32> to vector<2xf32>
      %218 = vector.shape_cast %217 : vector<2xf32> to vector<2x1xf32>
      %219 = vector.extract_strided_slice %191 {offsets = [0, 144], sizes = [2, 16], strides = [1, 1]} : vector<2x256xf32> to vector<2x16xf32>
      %cst_87 = arith.constant dense<0xFF800000> : vector<2xf32>
      %220 = vector.multi_reduction <maximumf>, %219, %cst_87 [1] : vector<2x16xf32> to vector<2xf32>
      %221 = vector.shape_cast %220 : vector<2xf32> to vector<2x1xf32>
      %222 = vector.extract_strided_slice %191 {offsets = [0, 160], sizes = [2, 16], strides = [1, 1]} : vector<2x256xf32> to vector<2x16xf32>
      %cst_88 = arith.constant dense<0xFF800000> : vector<2xf32>
      %223 = vector.multi_reduction <maximumf>, %222, %cst_88 [1] : vector<2x16xf32> to vector<2xf32>
      %224 = vector.shape_cast %223 : vector<2xf32> to vector<2x1xf32>
      %225 = vector.extract_strided_slice %191 {offsets = [0, 176], sizes = [2, 16], strides = [1, 1]} : vector<2x256xf32> to vector<2x16xf32>
      %cst_89 = arith.constant dense<0xFF800000> : vector<2xf32>
      %226 = vector.multi_reduction <maximumf>, %225, %cst_89 [1] : vector<2x16xf32> to vector<2xf32>
      %227 = vector.shape_cast %226 : vector<2xf32> to vector<2x1xf32>
      %228 = vector.extract_strided_slice %191 {offsets = [0, 192], sizes = [2, 16], strides = [1, 1]} : vector<2x256xf32> to vector<2x16xf32>
      %cst_90 = arith.constant dense<0xFF800000> : vector<2xf32>
      %229 = vector.multi_reduction <maximumf>, %228, %cst_90 [1] : vector<2x16xf32> to vector<2xf32>
      %230 = vector.shape_cast %229 : vector<2xf32> to vector<2x1xf32>
      %231 = vector.extract_strided_slice %191 {offsets = [0, 208], sizes = [2, 16], strides = [1, 1]} : vector<2x256xf32> to vector<2x16xf32>
      %cst_91 = arith.constant dense<0xFF800000> : vector<2xf32>
      %232 = vector.multi_reduction <maximumf>, %231, %cst_91 [1] : vector<2x16xf32> to vector<2xf32>
      %233 = vector.shape_cast %232 : vector<2xf32> to vector<2x1xf32>
      %234 = vector.extract_strided_slice %191 {offsets = [0, 224], sizes = [2, 16], strides = [1, 1]} : vector<2x256xf32> to vector<2x16xf32>
      %cst_92 = arith.constant dense<0xFF800000> : vector<2xf32>
      %235 = vector.multi_reduction <maximumf>, %234, %cst_92 [1] : vector<2x16xf32> to vector<2xf32>
      %236 = vector.shape_cast %235 : vector<2xf32> to vector<2x1xf32>
      %237 = vector.extract_strided_slice %191 {offsets = [0, 240], sizes = [2, 16], strides = [1, 1]} : vector<2x256xf32> to vector<2x16xf32>
      %cst_93 = arith.constant dense<0xFF800000> : vector<2xf32>
      %238 = vector.multi_reduction <maximumf>, %237, %cst_93 [1] : vector<2x16xf32> to vector<2xf32>
      %239 = vector.shape_cast %238 : vector<2xf32> to vector<2x1xf32>
      %240 = tpu.concatenate %194, %197, %200, %203, %206, %209, %212, %215, %218, %221, %224, %227, %230, %233, %236, %239 in 1 : vector<2x1xf32>, vector<2x1xf32>, vector<2x1xf32>, vector<2x1xf32>, vector<2x1xf32>, vector<2x1xf32>, vector<2x1xf32>, vector<2x1xf32>, vector<2x1xf32>, vector<2x1xf32>, vector<2x1xf32>, vector<2x1xf32>, vector<2x1xf32>, vector<2x1xf32>, vector<2x1xf32>, vector<2x1xf32> -> vector<2x16xf32>
      %c0_94 = arith.constant 0 : index
      %c0_95 = arith.constant 0 : index
      %241 = vector.load %arg14[%c0_94, %c0_95] : memref<16x1xf32, #tpu.memory_space<vmem>>, vector<16x1xf32>
      %cst_96 = arith.constant dense<0.000000e+00> : vector<2x1xf32>
      %242 = tpu.matmul %240, %241, %cst_96 {dimension_numbers = #tpu.dot_dimension_numbers<[1], [0], [0], [1], [0, 0, 1, 1], [], []>} : vector<2x16xf32>, vector<16x1xf32>, vector<2x1xf32> -> vector<2x1xf32>
      %c0_97 = arith.constant 0 : index
      %c0_98 = arith.constant 0 : index
      %243 = vector.load %arg15[%c0_97, %c0_98] : memref<1x1xf32, #tpu.memory_space<vmem>>, vector<1x1xf32>
      %244 = vector.broadcast %243 : vector<1x1xf32> to vector<2x1xf32>
      %245 = arith.addf %242, %244 : vector<2x1xf32>
      %246 = arith.negf %245 : vector<2x1xf32>
      %247 = math.exp %246 : vector<2x1xf32>
      %cst_99 = arith.constant 1.000000e+00 : f32
      %248 = vector.broadcast %cst_99 : f32 to vector<2x1xf32>
      %249 = arith.addf %248, %247 : vector<2x1xf32>
      %250 = arith.divf %248, %249 : vector<2x1xf32>
      %c0_100 = arith.constant 0 : index
      %c0_101 = arith.constant 0 : index
      %251 = vector.load %arg16[%c0_100, %c0_101] : memref<2x1xf32, #tpu.memory_space<vmem>>, vector<2x1xf32>
      tpu.vector_store %arg16[%c0_100, %c0_101], %250 {strides = array<i32>} : memref<2x1xf32, #tpu.memory_space<vmem>>, vector<2x1xf32>,
    } else {
    }
    return
  }
  func.func @transform_0(%arg0: i32) -> (i32, i32) {
    %c0_i32 = arith.constant 0 : i32
    %c0_i32_0 = arith.constant 0 : i32
    %c0_i32_1 = arith.constant 0 : i32
    return %c0_i32, %c0_i32_0 : i32, i32
  }
  func.func @transform_1(%arg0: i32) -> (i32, i32) {
    %c0_i32 = arith.constant 0 : i32
    %c0_i32_0 = arith.constant 0 : i32
    %c0_i32_1 = arith.constant 0 : i32
    return %c0_i32, %c0_i32_0 : i32, i32
  }
  func.func @transform_2(%arg0: i32) -> (i32, i32) {
    %c0_i32 = arith.constant 0 : i32
    %c0_i32_0 = arith.constant 0 : i32
    %c0_i32_1 = arith.constant 0 : i32
    return %c0_i32, %c0_i32_0 : i32, i32
  }
  func.func @transform_3(%arg0: i32) -> (i32, i32) {
    %c0_i32 = arith.constant 0 : i32
    %c0_i32_0 = arith.constant 0 : i32
    %c0_i32_1 = arith.constant 0 : i32
    return %c0_i32, %c0_i32_0 : i32, i32
  }
  func.func @transform_4(%arg0: i32) -> (i32, i32, i32) {
    %c0_i32 = arith.constant 0 : i32
    %c0_i32_0 = arith.constant 0 : i32
    %c0_i32_1 = arith.constant 0 : i32
    return %arg0, %c0_i32, %c0_i32_0 : i32, i32, i32
  }
  func.func @transform_5(%arg0: i32) -> (i32, i32, i32) {
    %c0_i32 = arith.constant 0 : i32
    %c0_i32_0 = arith.constant 0 : i32
    %c0_i32_1 = arith.constant 0 : i32
    return %arg0, %c0_i32, %c0_i32_0 : i32, i32, i32
  }
  func.func @transform_6(%arg0: i32) -> (i32, i32, i32) {
    %c0_i32 = arith.constant 0 : i32
    %c0_i32_0 = arith.constant 0 : i32
    %c0_i32_1 = arith.constant 0 : i32
    return %arg0, %c0_i32, %c0_i32_0 : i32, i32, i32
  }
  func.func @transform_7(%arg0: i32) -> (i32, i32, i32) {
    %c0_i32 = arith.constant 0 : i32
    %c0_i32_0 = arith.constant 0 : i32
    %c0_i32_1 = arith.constant 0 : i32
    return %arg0, %c0_i32, %c0_i32_0 : i32, i32, i32
  }
  func.func @transform_8(%arg0: i32) -> (i32, i32, i32) {
    %c0_i32 = arith.constant 0 : i32
    %c0_i32_0 = arith.constant 0 : i32
    %c0_i32_1 = arith.constant 0 : i32
    return %arg0, %c0_i32, %c0_i32_0 : i32, i32, i32
  }
  func.func @transform_9(%arg0: i32) -> (i32, i32, i32) {
    %c0_i32 = arith.constant 0 : i32
    %c0_i32_0 = arith.constant 0 : i32
    %c0_i32_1 = arith.constant 0 : i32
    return %arg0, %c0_i32, %c0_i32_0 : i32, i32, i32
  }
  func.func @transform_10(%arg0: i32) -> (i32, i32, i32) {
    %c0_i32 = arith.constant 0 : i32
    %c0_i32_0 = arith.constant 0 : i32
    %c0_i32_1 = arith.constant 0 : i32
    return %arg0, %c0_i32, %c0_i32_0 : i32, i32, i32
  }
  func.func @transform_11(%arg0: i32) -> (i32, i32, i32) {
    %c0_i32 = arith.constant 0 : i32
    %c0_i32_0 = arith.constant 0 : i32
    %c0_i32_1 = arith.constant 0 : i32
    %c0_i32_2 = arith.constant 0 : i32
    return %c0_i32, %c0_i32_0, %c0_i32_1 : i32, i32, i32
  }
  func.func @transform_12(%arg0: i32) -> (i32, i32) {
    %c0_i32 = arith.constant 0 : i32
    %c0_i32_0 = arith.constant 0 : i32
    %c0_i32_1 = arith.constant 0 : i32
    return %c0_i32, %c0_i32_0 : i32, i32
  }
  func.func @transform_13(%arg0: i32) -> (i32, i32) {
    %c0_i32 = arith.constant 0 : i32
    %c0_i32_0 = arith.constant 0 : i32
    %c0_i32_1 = arith.constant 0 : i32
    return %c0_i32, %c0_i32_0 : i32, i32
  }
  func.func @transform_14(%arg0: i32) -> (i32, i32) {
    %c0_i32 = arith.constant 0 : i32
    %c0_i32_0 = arith.constant 0 : i32
    %c0_i32_1 = arith.constant 0 : i32
    return %c0_i32, %c0_i32_0 : i32, i32
  }
  func.func @transform_15(%arg0: i32) -> (i32, i32) {
    %c0_i32 = arith.constant 0 : i32
    %c0_i32_0 = arith.constant 0 : i32
    %c0_i32_1 = arith.constant 0 : i32
    return %c0_i32, %c0_i32_0 : i32, i32
  }
}

</mosaic_0001>

<llo_original>
// kernel: disc_forward.1
$region0: #{disc_forward.1}
  #allocation0 [shape = 'u32[]', space=smem, size = 0x4, offset = 0x4, fixed_abs, tag = 'smem constant byte address 0x4 - core index']
  #allocation1 [shape = 'u32[144,128]{1,0:T(1,128)}', space=vmem, size = 0x12000, scoped, tag = 'internal scratch']
  #allocation2 [shape = 'f32[16,256]{1,0:T(8,128)}', space=vmem, size = 0x4000, scoped, tag = 'scratch operand']
  #allocation3 [shape = 'f32[1,1]{1,0:T(1,128)S(1)}', space=vmem, size = 0x200, scoped, tag = 'scoped memory for disc_forward.1']
  %s0 = inlined_call_operand.vmem [shape: f32[16,16], index: 0, kind: input, shape index: {}]
  %s1 = inlined_call_operand.vmem [shape: f32[16,256], index: 1, kind: input, shape index: {}]
  %s2 = inlined_call_operand.vmem [shape: f32[1,256], index: 2, kind: input, shape index: {}]
  %s3 = inlined_call_operand.vmem [shape: bf16[16,256], index: 3, kind: input, shape index: {}]
  %s4 = inlined_call_operand.vmem [shape: bf16[2,256,768], index: 4, kind: input, shape index: {}]
  %s5 = inlined_call_operand.vmem [shape: f32[2,1,768], index: 5, kind: input, shape index: {}]
  %s6 = inlined_call_operand.vmem [shape: bf16[2,256,256], index: 6, kind: input, shape index: {}]
  %s7 = inlined_call_operand.vmem [shape: f32[2,6,256], index: 7, kind: input, shape index: {}]
  %s8 = inlined_call_operand.vmem [shape: bf16[2,256,256], index: 8, kind: input, shape index: {}]
  %s9 = inlined_call_operand.vmem [shape: f32[2,1,256], index: 9, kind: input, shape index: {}]
  %s10 = inlined_call_operand.vmem [shape: bf16[2,256,256], index: 10, kind: input, shape index: {}]
  %s11 = inlined_call_operand.vmem [shape: bf16[8,256,256], index: 11, kind: input, shape index: {}]
  %s12 = inlined_call_operand.vmem [shape: f32[1,256], index: 12, kind: input, shape index: {}]
  %s13 = inlined_call_operand.vmem [shape: f32[16,1], index: 13, kind: input, shape index: {}]
  %s14 = inlined_call_operand.<no memory space> [shape: f32[1,1], index: 14, kind: input, shape index: {}]
  %s15 = inlined_call_operand.vmem [shape: f32[2,1], index: 15, kind: output, shape index: {}]
  %s16 = sld [smem:[#allocation0]]
  $region105: #{disc_forward.1} parent=0
    _
  %s18 = ssub.s32 1, %s16
  %s19 = scalar_select 0, %s18, %s16
  %v20 = vstv %s14
  %21 = vst [vmem:[#allocation3] sm:$0x1] %v20
  loop: start=0, step=1, limit=4
  $region2: #{disc_forward.1} parent=0 // loop_pre_header
    _
  $region3: #{disc_forward.1} parent=0 // loop_header
    %s23 = sphi 0, %s27
    %p24 = scmp.ge.s32.totalorder %s23, 4
    %s31 = sphi 0, %s31
    %s33 = sphi 0, %s31
    %s34 = sphi 0, %s33
    %s48 = sphi 0, %s34
    %s52 = sphi 0, %s52
    %s54 = sphi 0, %s52
    %s55 = sphi 0, %s54
    %s69 = sphi 0, %s55
    %s73 = sphi 0, %s73
    %s75 = sphi 0, %s73
    %s76 = sphi 0, %s75
    %s90 = sphi 0, %s76
    %s94 = sphi 0, %s94
    %s96 = sphi 0, %s94
    %s97 = sphi 0, %s96
    %s111 = sphi 0, %s97
    %s117 = sphi 0, %s119
    %s120 = sphi 0, %s117
    %s121 = sphi 0, %s120
    %s137 = sphi 0, %s121
    %s143 = sphi 0, %s145
    %s146 = sphi 0, %s143
    %s147 = sphi 0, %s146
    %s163 = sphi 0, %s147
    %s169 = sphi 0, %s171
    %s172 = sphi 0, %s169
    %s173 = sphi 0, %s172
    %s189 = sphi 0, %s173
    %s195 = sphi 0, %s197
    %s198 = sphi 0, %s195
    %s199 = sphi 0, %s198
    %s215 = sphi 0, %s199
    %s221 = sphi 0, %s223
    %s224 = sphi 0, %s221
    %s225 = sphi 0, %s224
    %s241 = sphi 0, %s225
    %s247 = sphi 0, %s249
    %s250 = sphi 0, %s247
    %s251 = sphi 0, %s250
    %s267 = sphi 0, %s251
    %s273 = sphi 0, %s275
    %s276 = sphi 0, %s273
    %s277 = sphi 0, %s276
    %s293 = sphi 0, %s277
    %s297 = sphi 0, %s297
    %s299 = sphi 0, %s297
    %s300 = sphi 0, %s299
    %s314 = sphi 0, %s300
    %s318 = sphi 0, %s318
    %s320 = sphi 0, %s318
    %s321 = sphi 0, %s320
    %s335 = sphi 0, %s321
    %s339 = sphi 0, %s339
    %s341 = sphi 0, %s339
    %s342 = sphi 0, %s341
    %s356 = sphi 0, %s342
    %s360 = sphi 0, %s360
    %s362 = sphi 0, %s360
    %s363 = sphi 0, %s362
    %s377 = sphi 0, %s363
    %s381 = sphi 0, %s381
    %s383 = sphi 0, %s381
    %s384 = sphi 0, %s383
    %s398 = sphi 0, %s384
  $region4: #{disc_forward.1} parent=0 // loop_header_branch
    %26 = sbr.rel (%p24) target = $region8
  $region5: #{disc_forward.1} parent=0 // loop_body
    %s28 = ssub.s32 %s23, 1
    %s29 = ssub.s32 %s23, 2
    %s30 = sadd.s32 %s23, 1
    %s32 = sadd.s32 %s31, 1
    %p35 = scmp.eq.s32.totalorder %s23, 1
    %p36 = scmp.ne.s32.totalorder %s31, %s33
    %p37 = scmp.eq.s32.totalorder %s23, 0
    %p38 = por %p36, %p37
    %p39 = scmp.ne.s32.totalorder %s31, %s33
    %p40 = scmp.eq.s32.totalorder %s28, 1
    %p41 = por %p39, %p40
    %p42 = scmp.ne.s32.totalorder %s33, %s34
    %p43 = scmp.eq.s32.totalorder %s28, 0
    %p44 = por %p42, %p43
    %p45 = scmp.ne.s32.totalorder %s33, %s34
    %p46 = scmp.eq.s32.totalorder %s29, 1
    %p47 = por %p45, %p46
    %p49 = scmp.ne.s32.totalorder %s34, %s48
    %p50 = scmp.eq.s32.totalorder %s29, 0
    %p51 = por %p49, %p50
    %s53 = sadd.s32 %s52, 1
    %p56 = scmp.eq.s32.totalorder %s23, 1
    %p57 = scmp.ne.s32.totalorder %s52, %s54
    %p58 = scmp.eq.s32.totalorder %s23, 0
    %p59 = por %p57, %p58
    %p60 = scmp.ne.s32.totalorder %s52, %s54
    %p61 = scmp.eq.s32.totalorder %s28, 1
    %p62 = por %p60, %p61
    %p63 = scmp.ne.s32.totalorder %s54, %s55
    %p64 = scmp.eq.s32.totalorder %s28, 0
    %p65 = por %p63, %p64
    %p66 = scmp.ne.s32.totalorder %s54, %s55
    %p67 = scmp.eq.s32.totalorder %s29, 1
    %p68 = por %p66, %p67
    %p70 = scmp.ne.s32.totalorder %s55, %s69
    %p71 = scmp.eq.s32.totalorder %s29, 0
    %p72 = por %p70, %p71
    %s74 = sadd.s32 %s73, 1
    %p77 = scmp.eq.s32.totalorder %s23, 1
    %p78 = scmp.ne.s32.totalorder %s73, %s75
    %p79 = scmp.eq.s32.totalorder %s23, 0
    %p80 = por %p78, %p79
    %p81 = scmp.ne.s32.totalorder %s73, %s75
    %p82 = scmp.eq.s32.totalorder %s28, 1
    %p83 = por %p81, %p82
    %p84 = scmp.ne.s32.totalorder %s75, %s76
    %p85 = scmp.eq.s32.totalorder %s28, 0
    %p86 = por %p84, %p85
    %p87 = scmp.ne.s32.totalorder %s75, %s76
    %p88 = scmp.eq.s32.totalorder %s29, 1
    %p89 = por %p87, %p88
    %p91 = scmp.ne.s32.totalorder %s76, %s90
    %p92 = scmp.eq.s32.totalorder %s29, 0
    %p93 = por %p91, %p92
    %s95 = sadd.s32 %s94, 1
    %p98 = scmp.eq.s32.totalorder %s23, 1
    %p99 = scmp.ne.s32.totalorder %s94, %s96
    %p100 = scmp.eq.s32.totalorder %s23, 0
    %p101 = por %p99, %p100
    %p102 = scmp.ne.s32.totalorder %s94, %s96
    %p103 = scmp.eq.s32.totalorder %s28, 1
    %p104 = por %p102, %p103
    %p105 = scmp.ne.s32.totalorder %s96, %s97
    %p106 = scmp.eq.s32.totalorder %s28, 0
    %p107 = por %p105, %p106
    %p108 = scmp.ne.s32.totalorder %s96, %s97
    %p109 = scmp.eq.s32.totalorder %s29, 1
    %p110 = por %p108, %p109
    %p112 = scmp.ne.s32.totalorder %s97, %s111
    %p113 = scmp.eq.s32.totalorder %s29, 0
    %p114 = por %p112, %p113
    %s115 = ssub.s32 %s23, %s30
    %p116 = scmp.eq.s32.totalorder %s115, 0
    %s118 = sadd.s32 %s117, 1
    %s119 = scalar_select %p116, %s117, %s118
    %p122 = pneg %p116
    %p123 = scmp.eq.s32.totalorder %s23, 1
    %p124 = por %p122, %p123
    %p125 = scmp.ne.s32.totalorder %s117, %s120
    %p126 = scmp.eq.s32.totalorder %s23, 0
    %p127 = por %p125, %p126
    %p128 = scmp.ne.s32.totalorder %s117, %s120
    %p129 = scmp.eq.s32.totalorder %s28, 1
    %p130 = por %p128, %p129
    %p131 = scmp.ne.s32.totalorder %s120, %s121
    %p132 = scmp.eq.s32.totalorder %s28, 0
    %p133 = por %p131, %p132
    %p134 = scmp.ne.s32.totalorder %s120, %s121
    %p135 = scmp.eq.s32.totalorder %s29, 1
    %p136 = por %p134, %p135
    %p138 = scmp.ne.s32.totalorder %s121, %s137
    %p139 = scmp.eq.s32.totalorder %s29, 0
    %p140 = por %p138, %p139
    %s141 = ssub.s32 %s23, %s30
    %p142 = scmp.eq.s32.totalorder %s141, 0
    %s144 = sadd.s32 %s143, 1
    %s145 = scalar_select %p142, %s143, %s144
    %p148 = pneg %p142
    %p149 = scmp.eq.s32.totalorder %s23, 1
    %p150 = por %p148, %p149
    %p151 = scmp.ne.s32.totalorder %s143, %s146
    %p152 = scmp.eq.s32.totalorder %s23, 0
    %p153 = por %p151, %p152
    %p154 = scmp.ne.s32.totalorder %s143, %s146
    %p155 = scmp.eq.s32.totalorder %s28, 1
    %p156 = por %p154, %p155
    %p157 = scmp.ne.s32.totalorder %s146, %s147
    %p158 = scmp.eq.s32.totalorder %s28, 0
    %p159 = por %p157, %p158
    %p160 = scmp.ne.s32.totalorder %s146, %s147
    %p161 = scmp.eq.s32.totalorder %s29, 1
    %p162 = por %p160, %p161
    %p164 = scmp.ne.s32.totalorder %s147, %s163
    %p165 = scmp.eq.s32.totalorder %s29, 0
    %p166 = por %p164, %p165
    %s167 = ssub.s32 %s23, %s30
    %p168 = scmp.eq.s32.totalorder %s167, 0
    %s170 = sadd.s32 %s169, 1
    %s171 = scalar_select %p168, %s169, %s170
    %p174 = pneg %p168
    %p175 = scmp.eq.s32.totalorder %s23, 1
    %p176 = por %p174, %p175
    %p177 = scmp.ne.s32.totalorder %s169, %s172
    %p178 = scmp.eq.s32.totalorder %s23, 0
    %p179 = por %p177, %p178
    %p180 = scmp.ne.s32.totalorder %s169, %s172
    %p181 = scmp.eq.s32.totalorder %s28, 1
    %p182 = por %p180, %p181
    %p183 = scmp.ne.s32.totalorder %s172, %s173
    %p184 = scmp.eq.s32.totalorder %s28, 0
    %p185 = por %p183, %p184
    %p186 = scmp.ne.s32.totalorder %s172, %s173
    %p187 = scmp.eq.s32.totalorder %s29, 1
    %p188 = por %p186, %p187
    %p190 = scmp.ne.s32.totalorder %s173, %s189
    %p191 = scmp.eq.s32.totalorder %s29, 0
    %p192 = por %p190, %p191
    %s193 = ssub.s32 %s23, %s30
    %p194 = scmp.eq.s32.totalorder %s193, 0
    %s196 = sadd.s32 %s195, 1
    %s197 = scalar_select %p194, %s195, %s196
    %p200 = pneg %p194
    %p201 = scmp.eq.s32.totalorder %s23, 1
    %p202 = por %p200, %p201
    %p203 = scmp.ne.s32.totalorder %s195, %s198
    %p204 = scmp.eq.s32.totalorder %s23, 0
    %p205 = por %p203, %p204
    %p206 = scmp.ne.s32.totalorder %s195, %s198
    %p207 = scmp.eq.s32.totalorder %s28, 1
    %p208 = por %p206, %p207
    %p209 = scmp.ne.s32.totalorder %s198, %s199
    %p210 = scmp.eq.s32.totalorder %s28, 0
    %p211 = por %p209, %p210
    %p212 = scmp.ne.s32.totalorder %s198, %s199
    %p213 = scmp.eq.s32.totalorder %s29, 1
    %p214 = por %p212, %p213
    %p216 = scmp.ne.s32.totalorder %s199, %s215
    %p217 = scmp.eq.s32.totalorder %s29, 0
    %p218 = por %p216, %p217
    %s219 = ssub.s32 %s23, %s30
    %p220 = scmp.eq.s32.totalorder %s219, 0
    %s222 = sadd.s32 %s221, 1
    %s223 = scalar_select %p220, %s221, %s222
    %p226 = pneg %p220
    %p227 = scmp.eq.s32.totalorder %s23, 1
    %p228 = por %p226, %p227
    %p229 = scmp.ne.s32.totalorder %s221, %s224
    %p230 = scmp.eq.s32.totalorder %s23, 0
    %p231 = por %p229, %p230
    %p232 = scmp.ne.s32.totalorder %s221, %s224
    %p233 = scmp.eq.s32.totalorder %s28, 1
    %p234 = por %p232, %p233
    %p235 = scmp.ne.s32.totalorder %s224, %s225
    %p236 = scmp.eq.s32.totalorder %s28, 0
    %p237 = por %p235, %p236
    %p238 = scmp.ne.s32.totalorder %s224, %s225
    %p239 = scmp.eq.s32.totalorder %s29, 1
    %p240 = por %p238, %p239
    %p242 = scmp.ne.s32.totalorder %s225, %s241
    %p243 = scmp.eq.s32.totalorder %s29, 0
    %p244 = por %p242, %p243
    %s245 = ssub.s32 %s23, %s30
    %p246 = scmp.eq.s32.totalorder %s245, 0
    %s248 = sadd.s32 %s247, 1
    %s249 = scalar_select %p246, %s247, %s248
    %p252 = pneg %p246
    %p253 = scmp.eq.s32.totalorder %s23, 1
    %p254 = por %p252, %p253
    %p255 = scmp.ne.s32.totalorder %s247, %s250
    %p256 = scmp.eq.s32.totalorder %s23, 0
    %p257 = por %p255, %p256
    %p258 = scmp.ne.s32.totalorder %s247, %s250
    %p259 = scmp.eq.s32.totalorder %s28, 1
    %p260 = por %p258, %p259
    %p261 = scmp.ne.s32.totalorder %s250, %s251
    %p262 = scmp.eq.s32.totalorder %s28, 0
    %p263 = por %p261, %p262
    %p264 = scmp.ne.s32.totalorder %s250, %s251
    %p265 = scmp.eq.s32.totalorder %s29, 1
    %p266 = por %p264, %p265
    %p268 = scmp.ne.s32.totalorder %s251, %s267
    %p269 = scmp.eq.s32.totalorder %s29, 0
    %p270 = por %p268, %p269
    %s271 = ssub.s32 %s23, %s30
    %p272 = scmp.eq.s32.totalorder %s271, 0
    %s274 = sadd.s32 %s273, 1
    %s275 = scalar_select %p272, %s273, %s274
    %p278 = pneg %p272
    %p279 = scmp.eq.s32.totalorder %s23, 1
    %p280 = por %p278, %p279
    %p281 = scmp.ne.s32.totalorder %s273, %s276
    %p282 = scmp.eq.s32.totalorder %s23, 0
    %p283 = por %p281, %p282
    %p284 = scmp.ne.s32.totalorder %s273, %s276
    %p285 = scmp.eq.s32.totalorder %s28, 1
    %p286 = por %p284, %p285
    %p287 = scmp.ne.s32.totalorder %s276, %s277
    %p288 = scmp.eq.s32.totalorder %s28, 0
    %p289 = por %p287, %p288
    %p290 = scmp.ne.s32.totalorder %s276, %s277
    %p291 = scmp.eq.s32.totalorder %s29, 1
    %p292 = por %p290, %p291
    %p294 = scmp.ne.s32.totalorder %s277, %s293
    %p295 = scmp.eq.s32.totalorder %s29, 0
    %p296 = por %p294, %p295
    %s298 = sadd.s32 %s297, 1
    %p301 = scmp.eq.s32.totalorder %s23, 1
    %p302 = scmp.ne.s32.totalorder %s297, %s299
    %p303 = scmp.eq.s32.totalorder %s23, 0
    %p304 = por %p302, %p303
    %p305 = scmp.ne.s32.totalorder %s297, %s299
    %p306 = scmp.eq.s32.totalorder %s28, 1
    %p307 = por %p305, %p306
    %p308 = scmp.ne.s32.totalorder %s299, %s300
    %p309 = scmp.eq.s32.totalorder %s28, 0
    %p310 = por %p308, %p309
    %p311 = scmp.ne.s32.totalorder %s299, %s300
    %p312 = scmp.eq.s32.totalorder %s29, 1
    %p313 = por %p311, %p312
    %p315 = scmp.ne.s32.totalorder %s300, %s314
    %p316 = scmp.eq.s32.totalorder %s29, 0
    %p317 = por %p315, %p316
    %s319 = sadd.s32 %s318, 1
    %p322 = scmp.eq.s32.totalorder %s23, 1
    %p323 = scmp.ne.s32.totalorder %s318, %s320
    %p324 = scmp.eq.s32.totalorder %s23, 0
    %p325 = por %p323, %p324
    %p326 = scmp.ne.s32.totalorder %s318, %s320
    %p327 = scmp.eq.s32.totalorder %s28, 1
    %p328 = por %p326, %p327
    %p329 = scmp.ne.s32.totalorder %s320, %s321
    %p330 = scmp.eq.s32.totalorder %s28, 0
    %p331 = por %p329, %p330
    %p332 = scmp.ne.s32.totalorder %s320, %s321
    %p333 = scmp.eq.s32.totalorder %s29, 1
    %p334 = por %p332, %p333
    %p336 = scmp.ne.s32.totalorder %s321, %s335
    %p337 = scmp.eq.s32.totalorder %s29, 0
    %p338 = por %p336, %p337
    %s340 = sadd.s32 %s339, 1
    %p343 = scmp.eq.s32.totalorder %s23, 1
    %p344 = scmp.ne.s32.totalorder %s339, %s341
    %p345 = scmp.eq.s32.totalorder %s23, 0
    %p346 = por %p344, %p345
    %p347 = scmp.ne.s32.totalorder %s339, %s341
    %p348 = scmp.eq.s32.totalorder %s28, 1
    %p349 = por %p347, %p348
    %p350 = scmp.ne.s32.totalorder %s341, %s342
    %p351 = scmp.eq.s32.totalorder %s28, 0
    %p352 = por %p350, %p351
    %p353 = scmp.ne.s32.totalorder %s341, %s342
    %p354 = scmp.eq.s32.totalorder %s29, 1
    %p355 = por %p353, %p354
    %p357 = scmp.ne.s32.totalorder %s342, %s356
    %p358 = scmp.eq.s32.totalorder %s29, 0
    %p359 = por %p357, %p358
    %s361 = sadd.s32 %s360, 1
    %p364 = scmp.eq.s32.totalorder %s23, 1
    %p365 = scmp.ne.s32.totalorder %s360, %s362
    %p366 = scmp.eq.s32.totalorder %s23, 0
    %p367 = por %p365, %p366
    %p368 = scmp.ne.s32.totalorder %s360, %s362
    %p369 = scmp.eq.s32.totalorder %s28, 1
    %p370 = por %p368, %p369
    %p371 = scmp.ne.s32.totalorder %s362, %s363
    %p372 = scmp.eq.s32.totalorder %s28, 0
    %p373 = por %p371, %p372
    %p374 = scmp.ne.s32.totalorder %s362, %s363
    %p375 = scmp.eq.s32.totalorder %s29, 1
    %p376 = por %p374, %p375
    %p378 = scmp.ne.s32.totalorder %s363, %s377
    %p379 = scmp.eq.s32.totalorder %s29, 0
    %p380 = por %p378, %p379
    %s382 = sadd.s32 %s381, 1
    %p385 = scmp.eq.s32.totalorder %s23, 1
    %p386 = scmp.ne.s32.totalorder %s381, %s383
    %p387 = scmp.eq.s32.totalorder %s23, 0
    %p388 = por %p386, %p387
    %p389 = scmp.ne.s32.totalorder %s381, %s383
    %p390 = scmp.eq.s32.totalorder %s28, 1
    %p391 = por %p389, %p390
    %p392 = scmp.ne.s32.totalorder %s383, %s384
    %p393 = scmp.eq.s32.totalorder %s28, 0
    %p394 = por %p392, %p393
    %p395 = scmp.ne.s32.totalorder %s383, %s384
    %p396 = scmp.eq.s32.totalorder %s29, 1
    %p397 = por %p395, %p396
    %p399 = scmp.ne.s32.totalorder %s384, %s398
    %p400 = scmp.eq.s32.totalorder %s29, 0
    %p401 = por %p399, %p400
    %p402 = scmp.le.s32.totalorder 1, %s23
    %p403 = scmp.lt.s32.totalorder %s23, 3
    %p404 = pnand %p402, %p403
    %p405 = pneg %p404
    // Predicated region
    $region9: #{disc_forward.1} parent=5 // pred_check
      _
    $region10: #{disc_forward.1} parent=5 // pred_check_branch
      %407 = sbr.rel (%p404) target = $region12
    $region11: #{disc_forward.1} parent=5 // pred_region
      %s408 = ssub.s32 %s23, 1
      // Predicated region
      $region13: #{disc_forward.1} parent=11 // pred_check
        %p409 = pneg %p44
      $region14: #{disc_forward.1} parent=11 // pred_check_branch
        %411 = sbr.rel (%p409) target = $region16
      $region15: #{disc_forward.1} parent=11 // pred_region
        _
      $region16: #{disc_forward.1} parent=11 // pred_fallthru
        _
      // Predicated region
      $region17: #{disc_forward.1} parent=11 // pred_check
        %p412 = pneg %p65
      $region18: #{disc_forward.1} parent=11 // pred_check_branch
        %414 = sbr.rel (%p412) target = $region20
      $region19: #{disc_forward.1} parent=11 // pred_region
        _
      $region20: #{disc_forward.1} parent=11 // pred_fallthru
        _
      // Predicated region
      $region21: #{disc_forward.1} parent=11 // pred_check
        %p415 = pneg %p86
      $region22: #{disc_forward.1} parent=11 // pred_check_branch
        %417 = sbr.rel (%p415) target = $region24
      $region23: #{disc_forward.1} parent=11 // pred_region
        _
      $region24: #{disc_forward.1} parent=11 // pred_fallthru
        _
      // Predicated region
      $region25: #{disc_forward.1} parent=11 // pred_check
        %p418 = pneg %p107
      $region26: #{disc_forward.1} parent=11 // pred_check_branch
        %420 = sbr.rel (%p418) target = $region28
      $region27: #{disc_forward.1} parent=11 // pred_region
        _
      $region28: #{disc_forward.1} parent=11 // pred_fallthru
        _
      // Predicated region
      $region29: #{disc_forward.1} parent=11 // pred_check
        %p421 = pneg %p310
      $region30: #{disc_forward.1} parent=11 // pred_check_branch
        %423 = sbr.rel (%p421) target = $region32
      $region31: #{disc_forward.1} parent=11 // pred_region
        _
      $region32: #{disc_forward.1} parent=11 // pred_fallthru
        _
      // Predicated region
      $region33: #{disc_forward.1} parent=11 // pred_check
        %p424 = pneg %p331
      $region34: #{disc_forward.1} parent=11 // pred_check_branch
        %426 = sbr.rel (%p424) target = $region36
      $region35: #{disc_forward.1} parent=11 // pred_region
        _
      $region36: #{disc_forward.1} parent=11 // pred_fallthru
        _
      // Predicated region
      $region37: #{disc_forward.1} parent=11 // pred_check
        %p427 = pneg %p352
      $region38: #{disc_forward.1} parent=11 // pred_check_branch
        %429 = sbr.rel (%p427) target = $region40
      $region39: #{disc_forward.1} parent=11 // pred_region
        _
      $region40: #{disc_forward.1} parent=11 // pred_fallthru
        _
      // Predicated region
      $region41: #{disc_forward.1} parent=11 // pred_check
        %p430 = pneg %p373
      $region42: #{disc_forward.1} parent=11 // pred_check_branch
        %432 = sbr.rel (%p430) target = $region44
      $region43: #{disc_forward.1} parent=11 // pred_region
        _
      $region44: #{disc_forward.1} parent=11 // pred_fallthru
        _
    $region12: #{disc_forward.1} parent=5 // pred_fallthru
      _
    %p433 = scmp.lt.s32.totalorder %s23, 2
    // Predicated region
    $region45: #{disc_forward.1} parent=5 // pred_check
      %p434 = pneg %p433
    $region46: #{disc_forward.1} parent=5 // pred_check_branch
      %436 = sbr.rel (%p434) target = $region48
    $region47: #{disc_forward.1} parent=5 // pred_region
      // Predicated region
      $region49: #{disc_forward.1} parent=47 // pred_check
        %p437 = pneg %p127
      $region50: #{disc_forward.1} parent=47 // pred_check_branch
        %439 = sbr.rel (%p437) target = $region52
      $region51: #{disc_forward.1} parent=47 // pred_region
        %p440 = scmp.lt.s32.totalorder %s23, 1
        %s441 = scalar_select %p440, %s23, 1
        %s442 = smul.addr %s441, 192
        %s443 = smul.addr %s442, 4
        %s444 = scalar_lea.vmem %s4, %s443
      $region52: #{disc_forward.1} parent=47 // pred_fallthru
        _
      // Predicated region
      $region53: #{disc_forward.1} parent=47 // pred_check
        %p445 = pneg %p153
      $region54: #{disc_forward.1} parent=47 // pred_check_branch
        %447 = sbr.rel (%p445) target = $region56
      $region55: #{disc_forward.1} parent=47 // pred_region
        %p448 = scmp.lt.s32.totalorder %s23, 1
        %s449 = scalar_select %p448, %s23, 1
        %s450 = smul.addr %s449, 6
        %s451 = scalar_lea.vmem %s5, %s450
      $region56: #{disc_forward.1} parent=47 // pred_fallthru
        _
      // Predicated region
      $region57: #{disc_forward.1} parent=47 // pred_check
        %p452 = pneg %p179
      $region58: #{disc_forward.1} parent=47 // pred_check_branch
        %454 = sbr.rel (%p452) target = $region60
      $region59: #{disc_forward.1} parent=47 // pred_region
        %p455 = scmp.lt.s32.totalorder %s23, 1
        %s456 = scalar_select %p455, %s23, 1
        %s457 = smul.addr %s456, 64
        %s458 = smul.addr %s457, 4
        %s459 = scalar_lea.vmem %s6, %s458
      $region60: #{disc_forward.1} parent=47 // pred_fallthru
        _
      // Predicated region
      $region61: #{disc_forward.1} parent=47 // pred_check
        %p460 = pneg %p205
      $region62: #{disc_forward.1} parent=47 // pred_check_branch
        %462 = sbr.rel (%p460) target = $region64
      $region63: #{disc_forward.1} parent=47 // pred_region
        %p463 = scmp.lt.s32.totalorder %s23, 1
        %s464 = scalar_select %p463, %s23, 1
        %s465 = smul.addr %s464, 2
        %s466 = smul.addr %s465, 8
        %s467 = scalar_lea.vmem %s7, %s466
      $region64: #{disc_forward.1} parent=47 // pred_fallthru
        _
      // Predicated region
      $region65: #{disc_forward.1} parent=47 // pred_check
        %p468 = pneg %p231
      $region66: #{disc_forward.1} parent=47 // pred_check_branch
        %470 = sbr.rel (%p468) target = $region68
      $region67: #{disc_forward.1} parent=47 // pred_region
        %p471 = scmp.lt.s32.totalorder %s23, 1
        %s472 = scalar_select %p471, %s23, 1
        %s473 = smul.addr %s472, 64
        %s474 = smul.addr %s473, 4
        %s475 = scalar_lea.vmem %s8, %s474
      $region68: #{disc_forward.1} parent=47 // pred_fallthru
        _
      // Predicated region
      $region69: #{disc_forward.1} parent=47 // pred_check
        %p476 = pneg %p257
      $region70: #{disc_forward.1} parent=47 // pred_check_branch
        %478 = sbr.rel (%p476) target = $region72
      $region71: #{disc_forward.1} parent=47 // pred_region
        %p479 = scmp.lt.s32.totalorder %s23, 1
        %s480 = scalar_select %p479, %s23, 1
        %s481 = smul.addr %s480, 2
        %s482 = scalar_lea.vmem %s9, %s481
      $region72: #{disc_forward.1} parent=47 // pred_fallthru
        _
      // Predicated region
      $region73: #{disc_forward.1} parent=47 // pred_check
        %p483 = pneg %p283
      $region74: #{disc_forward.1} parent=47 // pred_check_branch
        %485 = sbr.rel (%p483) target = $region76
      $region75: #{disc_forward.1} parent=47 // pred_region
        %p486 = scmp.lt.s32.totalorder %s23, 1
        %s487 = scalar_select %p486, %s23, 1
        %s488 = smul.addr %s487, 64
        %s489 = smul.addr %s488, 4
        %s490 = scalar_lea.vmem %s10, %s489
      $region76: #{disc_forward.1} parent=47 // pred_fallthru
        _
    $region48: #{disc_forward.1} parent=5 // pred_fallthru
      _
    %p491 = scmp.le.s32.totalorder 1, %s23
    %p492 = scmp.lt.s32.totalorder %s23, 3
    %p493 = pnand %p491, %p492
    %p494 = pneg %p493
    // Predicated region
    $region77: #{disc_forward.1} parent=5 // pred_check
      _
    $region78: #{disc_forward.1} parent=5 // pred_check_branch
      %496 = sbr.rel (%p493) target = $region80
    $region79: #{disc_forward.1} parent=5 // pred_region
      %s497 = ssub.s32 %s23, 1
      %p498 = pneg %p44
      %p499 = pneg %p41
      %p500 = pneg %p65
      %p501 = pneg %p62
      %p502 = pneg %p86
      %p503 = pneg %p83
      %p504 = pneg %p107
      %p505 = pneg %p104
      %p506 = scmp.lt.s32.totalorder %s28, 1
      %s507 = scalar_select %p506, %s28, 1
      %s508 = smul.addr %s507, 192
      %s509 = smul.addr %s508, 4
      %s510 = scalar_lea.vmem %s4, %s509
      %p511 = pneg %p133
      %p512 = pneg %p130
      %p513 = scmp.lt.s32.totalorder %s28, 1
      %s514 = scalar_select %p513, %s28, 1
      %s515 = smul.addr %s514, 6
      %s516 = scalar_lea.vmem %s5, %s515
      %p517 = pneg %p159
      %p518 = pneg %p156
      %p519 = scmp.lt.s32.totalorder %s28, 1
      %s520 = scalar_select %p519, %s28, 1
      %s521 = smul.addr %s520, 64
      %s522 = smul.addr %s521, 4
      %s523 = scalar_lea.vmem %s6, %s522
      %p524 = pneg %p185
      %p525 = pneg %p182
      %p526 = scmp.lt.s32.totalorder %s28, 1
      %s527 = scalar_select %p526, %s28, 1
      %s528 = smul.addr %s527, 2
      %s529 = smul.addr %s528, 8
      %s530 = scalar_lea.vmem %s7, %s529
      %p531 = pneg %p211
      %p532 = pneg %p208
      %p533 = scmp.lt.s32.totalorder %s28, 1
      %s534 = scalar_select %p533, %s28, 1
      %s535 = smul.addr %s534, 64
      %s536 = smul.addr %s535, 4
      %s537 = scalar_lea.vmem %s8, %s536
      %p538 = pneg %p237
      %p539 = pneg %p234
      %p540 = scmp.lt.s32.totalorder %s28, 1
      %s541 = scalar_select %p540, %s28, 1
      %s542 = smul.addr %s541, 2
      %s543 = scalar_lea.vmem %s9, %s542
      %p544 = pneg %p263
      %p545 = pneg %p260
      %p546 = scmp.lt.s32.totalorder %s28, 1
      %s547 = scalar_select %p546, %s28, 1
      %s548 = smul.addr %s547, 64
      %s549 = smul.addr %s548, 4
      %s550 = scalar_lea.vmem %s10, %s549
      %p551 = pneg %p289
      %p552 = pneg %p286
      %p553 = pneg %p310
      %p554 = pneg %p307
      %p555 = pneg %p331
      %p556 = pneg %p328
      %p557 = pneg %p352
      %p558 = pneg %p349
      %p559 = pneg %p373
      %p560 = pneg %p370
      %p561 = pneg %p394
      %p562 = pneg %p391
      %p563 = scmp.lt.s32.totalorder %s28, 1
      %s564 = scalar_select %p563, %s28, 1
      %s565 = smul.addr %s564, 192
      %s566 = smul.addr %s565, 4
      %s567 = scalar_lea.vmem %s4, %s566
      %p568 = scmp.lt.s32.totalorder %s28, 1
      %s569 = scalar_select %p568, %s28, 1
      %s570 = smul.addr %s569, 6
      %s571 = scalar_lea.vmem %s5, %s570
      %p572 = scmp.lt.s32.totalorder %s28, 1
      %s573 = scalar_select %p572, %s28, 1
      %s574 = smul.addr %s573, 64
      %s575 = smul.addr %s574, 4
      %s576 = scalar_lea.vmem %s6, %s575
      %p577 = scmp.lt.s32.totalorder %s28, 1
      %s578 = scalar_select %p577, %s28, 1
      %s579 = smul.addr %s578, 2
      %s580 = smul.addr %s579, 8
      %s581 = scalar_lea.vmem %s7, %s580
      %p582 = scmp.lt.s32.totalorder %s28, 1
      %s583 = scalar_select %p582, %s28, 1
      %s584 = smul.addr %s583, 64
      %s585 = smul.addr %s584, 4
      %s586 = scalar_lea.vmem %s8, %s585
      %p587 = scmp.lt.s32.totalorder %s28, 1
      %s588 = scalar_select %p587, %s28, 1
      %s589 = smul.addr %s588, 2
      %s590 = scalar_lea.vmem %s9, %s589
      %p591 = scmp.lt.s32.totalorder %s28, 1
      %s592 = scalar_select %p591, %s28, 1
      %s593 = smul.addr %s592, 64
      %s594 = smul.addr %s593, 4
      %s595 = scalar_lea.vmem %s10, %s594
      %p597 = scmp.eq.s32.totalorder %s28, 0
      // Predicated region
      $region81: #{disc_forward.1} parent=79 // pred_check
        %p598 = pneg %p597
      $region82: #{disc_forward.1} parent=79 // pred_check_branch
        %600 = sbr.rel (%p598) target = $region84
      $region83: #{disc_forward.1} parent=79 // pred_region
        %v601 = vld [vmem:[%s0] sm:$0xff]
        %v602 = vld [vmem:[%s0 + $0x8] sm:$0xff]
        %v603 = vld [vmem:[%s3] sm:$0xff]
        %v604 = vld [vmem:[%s3 + $0x8] sm:$0xff]
        %v605 = vpack.c.bf16 %v602, %v601
        %v606 = vld [vmem:[%s2] sm:$0x3]
        %v608 = vlaneseq
        %v609 = vshrl.u32 %v608, 7
        %v610 = vsub.s32 0, %v609
        %v611 = vrot.slane %v606, %v610
        %v612 = vlaneseq
        %v613 = vshrl.u32 %v612, 7
        %v614 = vsub.s32 1, %v613
        %v615 = vrot.slane %v606, %v614
        %v620 = vunpack.c.l.b16 %v603
        %v621 = vunpack.c.h.b16 %v603
        %v622 = vunpack.c.l.b16 %v604
        %v623 = vunpack.c.h.b16 %v604
        %v624 = vpack.c.b16 %v622, %v620
        %v625 = vpack.c.b16 %v623, %v621
        %vm628 = vcmask 130048
        %v630 = vsel %vm628, %v605, 0
        %632 = vmatprep.subr.bf16.mxu0 0
        %633 = vmatpush1.bf16.msra.mxu0 0
        %634 = vmatprep.subr.bf16.mxu0 0
        %635 = vmatpush1.bf16.msra.mxu0 0
        %636 = vmatprep.subr.bf16.mxu0 0
        %637 = vmatpush1.bf16.msra.mxu0 0
        %638 = vmatprep.subr.bf16.mxu0 0
        %639 = vmatpush1.bf16.msra.mxu0 0
        %640 = vmatprep.subr.bf16.mxu0 0
        %641 = vmatpush1.bf16.msra.mxu0 0
        %642 = vmatprep.subr.bf16.mxu0 0
        %643 = vmatpush1.bf16.msra.mxu0 0
        %644 = vmatprep.subr.bf16.mxu0 0
        %645 = vmatpush1.bf16.msra.mxu0 0
        %646 = vmatprep.subr.bf16.mxu0 %v625
        %647 = vmatpush1.bf16.msra.mxu0 %v624
        %648 = vmatprep.subr.bf16.mxu0 0
        %649 = vmatpush2.bf16.msra.mxu0 0
        %650 = vmatprep.subr.bf16.mxu0 0
        %651 = vmatpush2.bf16.msra.mxu0 0
        %652 = vmatprep.subr.bf16.mxu0 0
        %653 = vmatpush2.bf16.msra.mxu0 0
        %654 = vmatprep.subr.bf16.mxu0 0
        %655 = vmatpush2.bf16.msra.mxu0 0
        %656 = vmatprep.subr.bf16.mxu0 0
        %657 = vmatpush2.bf16.msra.mxu0 0
        %658 = vmatprep.subr.bf16.mxu0 0
        %659 = vmatpush2.bf16.msra.mxu0 0
        %660 = vmatprep.subr.bf16.mxu0 0
        %661 = vmatpush2.bf16.msra.mxu0 0
        %662 = vmatprep.subr.bf16.mxu0 0
        %663 = vmatpush2.bf16.msra.mxu0 0
        %664 = vmatprep.mubr.bf16.mxu0 0
        %665 = vmatmul.mubr.bf16.gmra.mxu0 %v630
        %v666 = vpop.f32.mrf.mxu0
        %v667 = vadd.f32 %v611, %v666
        %v668 = vpop.f32.mrf.mxu0
        %v669 = vadd.f32 %v615, %v668
        %v670 = vpop.f32.mrf.mxu0
        %v671 = vadd.f32 %v611, %v670
        %v672 = vpop.f32.mrf.mxu0
        %v673 = vadd.f32 %v615, %v672
        %674 = vdwg.mxu0
        %v675 = vld [vmem:[%s1] sm:$0xff]
        %v676 = vld [vmem:[%s1 + $0x8] sm:$0xff]
        %v677 = vld [vmem:[%s1 + $0x10] sm:$0xff]
        %v678 = vld [vmem:[%s1 + $0x18] sm:$0xff]
        %v679 = vadd.f32 %v667, %v675
        %v680 = vadd.f32 %v669, %v676
        %v681 = vadd.f32 %v671, %v677
        %v682 = vadd.f32 %v673, %v678
        %683 = vst [vmem:[#allocation2] sm:$0xff] %v679
        %684 = vst [vmem:[#allocation2 + $0x8] sm:$0xff] %v680
        %685 = vst [vmem:[#allocation2 + $0x10] sm:$0xff] %v681
        %686 = vst [vmem:[#allocation2 + $0x18] sm:$0xff] %v682
      $region84: #{disc_forward.1} parent=79 // pred_fallthru
        _
      %p687 = scmp.eq.s32.totalorder %s28, 1
      // Predicated region
      $region85: #{disc_forward.1} parent=79 // pred_check
        %p688 = pneg %p687
      $region86: #{disc_forward.1} parent=79 // pred_check_branch
        %690 = sbr.rel (%p688) target = $region88
      $region87: #{disc_forward.1} parent=79 // pred_region
        %v691 = vld [vmem:[#allocation2] sm:$0xff]
        %v692 = vld [vmem:[#allocation2 + $0x8] sm:$0xff]
        %v693 = vld [vmem:[#allocation2 + $0x10] sm:$0xff]
        %v694 = vld [vmem:[#allocation2 + $0x18] sm:$0xff]
        %v695 = vld [vmem:[%s1] sm:$0xff]
        %v696 = vld [vmem:[%s1 + $0x8] sm:$0xff]
        %v697 = vld [vmem:[%s1 + $0x10] sm:$0xff]
        %v698 = vld [vmem:[%s1 + $0x18] sm:$0xff]
        %v699 = vadd.f32 %v691, %v695
        %v700 = vadd.f32 %v692, %v696
        %v701 = vadd.f32 %v693, %v697
        %v702 = vadd.f32 %v694, %v698
        %703 = vst [vmem:[#allocation2] sm:$0xff] %v699
        %704 = vst [vmem:[#allocation2 + $0x8] sm:$0xff] %v700
        %705 = vst [vmem:[#allocation2 + $0x10] sm:$0xff] %v701
        %706 = vst [vmem:[#allocation2 + $0x18] sm:$0xff] %v702
      $region88: #{disc_forward.1} parent=79 // pred_fallthru
        _
      %v707 = vld [vmem:[#allocation2] sm:$0xff]
      %v708 = vld [vmem:[#allocation2 + $0x8] sm:$0xff]
      %v709 = vld [vmem:[#allocation2 + $0x10] sm:$0xff]
      %v710 = vld [vmem:[#allocation2 + $0x18] sm:$0xff]
      %v711 = vld [vmem:[%s567] sm:$0xff]
      %v712 = vld [vmem:[%s567 + $0x8] sm:$0xff]
      %v713 = vld [vmem:[%s567 + $0x10] sm:$0xff]
      %v714 = vld [vmem:[%s567 + $0x18] sm:$0xff]
      %v715 = vld [vmem:[%s567 + $0x20] sm:$0xff]
      %v716 = vld [vmem:[%s567 + $0x28] sm:$0xff]
      %v717 = vld [vmem:[%s567 + $0x30] sm:$0xff]
      %v718 = vld [vmem:[%s567 + $0x38] sm:$0xff]
      %v719 = vld [vmem:[%s567 + $0x40] sm:$0xff]
      %v720 = vld [vmem:[%s567 + $0x48] sm:$0xff]
      %v721 = vld [vmem:[%s567 + $0x50] sm:$0xff]
      %v722 = vld [vmem:[%s567 + $0x58] sm:$0xff]
      %v723 = vld [vmem:[%s567 + $0x60] sm:$0xff]
      %v724 = vld [vmem:[%s567 + $0x68] sm:$0xff]
      %v725 = vld [vmem:[%s567 + $0x70] sm:$0xff]
      %v726 = vld [vmem:[%s567 + $0x78] sm:$0xff]
      %v727 = vld [vmem:[%s567 + $0x80] sm:$0xff]
      %v728 = vld [vmem:[%s567 + $0x88] sm:$0xff]
      %v729 = vld [vmem:[%s567 + $0x90] sm:$0xff]
      %v730 = vld [vmem:[%s567 + $0x98] sm:$0xff]
      %v731 = vld [vmem:[%s567 + $0xa0] sm:$0xff]
      %v732 = vld [vmem:[%s567 + $0xa8] sm:$0xff]
      %v733 = vld [vmem:[%s567 + $0xb0] sm:$0xff]
      %v734 = vld [vmem:[%s567 + $0xb8] sm:$0xff]
      %v735 = vld [vmem:[%s567 + $0xc0] sm:$0xff]
      %v736 = vld [vmem:[%s567 + $0xc8] sm:$0xff]
      %v737 = vld [vmem:[%s567 + $0xd0] sm:$0xff]
      %v738 = vld [vmem:[%s567 + $0xd8] sm:$0xff]
      %v739 = vld [vmem:[%s567 + $0xe0] sm:$0xff]
      %v740 = vld [vmem:[%s567 + $0xe8] sm:$0xff]
      %v741 = vld [vmem:[%s567 + $0xf0] sm:$0xff]
      %v742 = vld [vmem:[%s567 + $0xf8] sm:$0xff]
      %v743 = vld [vmem:[%s567 + $0x100] sm:$0xff]
      %v744 = vld [vmem:[%s567 + $0x108] sm:$0xff]
      %v745 = vld [vmem:[%s567 + $0x110] sm:$0xff]
      %v746 = vld [vmem:[%s567 + $0x118] sm:$0xff]
      %v747 = vld [vmem:[%s567 + $0x120] sm:$0xff]
      %v748 = vld [vmem:[%s567 + $0x128] sm:$0xff]
      %v749 = vld [vmem:[%s567 + $0x130] sm:$0xff]
      %v750 = vld [vmem:[%s567 + $0x138] sm:$0xff]
      %v751 = vld [vmem:[%s567 + $0x140] sm:$0xff]
      %v752 = vld [vmem:[%s567 + $0x148] sm:$0xff]
      %v753 = vld [vmem:[%s567 + $0x150] sm:$0xff]
      %v754 = vld [vmem:[%s567 + $0x158] sm:$0xff]
      %v755 = vld [vmem:[%s567 + $0x160] sm:$0xff]
      %v756 = vld [vmem:[%s567 + $0x168] sm:$0xff]
      %v757 = vld [vmem:[%s567 + $0x170] sm:$0xff]
      %v758 = vld [vmem:[%s567 + $0x178] sm:$0xff]
      %v759 = vld [vmem:[%s567 + $0x180] sm:$0xff]
      %v760 = vld [vmem:[%s567 + $0x188] sm:$0xff]
      %v761 = vld [vmem:[%s567 + $0x190] sm:$0xff]
      %v762 = vld [vmem:[%s567 + $0x198] sm:$0xff]
      %v763 = vld [vmem:[%s567 + $0x1a0] sm:$0xff]
      %v764 = vld [vmem:[%s567 + $0x1a8] sm:$0xff]
      %v765 = vld [vmem:[%s567 + $0x1b0] sm:$0xff]
      %v766 = vld [vmem:[%s567 + $0x1b8] sm:$0xff]
      %v767 = vld [vmem:[%s567 + $0x1c0] sm:$0xff]
      %v768 = vld [vmem:[%s567 + $0x1c8] sm:$0xff]
      %v769 = vld [vmem:[%s567 + $0x1d0] sm:$0xff]
      %v770 = vld [vmem:[%s567 + $0x1d8] sm:$0xff]
      %v771 = vld [vmem:[%s567 + $0x1e0] sm:$0xff]
      %v772 = vld [vmem:[%s567 + $0x1e8] sm:$0xff]
      %v773 = vld [vmem:[%s567 + $0x1f0] sm:$0xff]
      %v774 = vld [vmem:[%s567 + $0x1f8] sm:$0xff]
      %v775 = vld [vmem:[%s567 + $0x200] sm:$0xff]
      %v776 = vld [vmem:[%s567 + $0x208] sm:$0xff]
      %v777 = vld [vmem:[%s567 + $0x210] sm:$0xff]
      %v778 = vld [vmem:[%s567 + $0x218] sm:$0xff]
      %v779 = vld [vmem:[%s567 + $0x220] sm:$0xff]
      %v780 = vld [vmem:[%s567 + $0x228] sm:$0xff]
      %v781 = vld [vmem:[%s567 + $0x230] sm:$0xff]
      %v782 = vld [vmem:[%s567 + $0x238] sm:$0xff]
      %v783 = vld [vmem:[%s567 + $0x240] sm:$0xff]
      %v784 = vld [vmem:[%s567 + $0x248] sm:$0xff]
      %v785 = vld [vmem:[%s567 + $0x250] sm:$0xff]
      %v786 = vld [vmem:[%s567 + $0x258] sm:$0xff]
      %v787 = vld [vmem:[%s567 + $0x260] sm:$0xff]
      %v788 = vld [vmem:[%s567 + $0x268] sm:$0xff]
      %v789 = vld [vmem:[%s567 + $0x270] sm:$0xff]
      %v790 = vld [vmem:[%s567 + $0x278] sm:$0xff]
      %v791 = vld [vmem:[%s567 + $0x280] sm:$0xff]
      %v792 = vld [vmem:[%s567 + $0x288] sm:$0xff]
      %v793 = vld [vmem:[%s567 + $0x290] sm:$0xff]
      %v794 = vld [vmem:[%s567 + $0x298] sm:$0xff]
      %v795 = vld [vmem:[%s567 + $0x2a0] sm:$0xff]
      %v796 = vld [vmem:[%s567 + $0x2a8] sm:$0xff]
      %v797 = vld [vmem:[%s567 + $0x2b0] sm:$0xff]
      %v798 = vld [vmem:[%s567 + $0x2b8] sm:$0xff]
      %v799 = vld [vmem:[%s567 + $0x2c0] sm:$0xff]
      %v800 = vld [vmem:[%s567 + $0x2c8] sm:$0xff]
      %v801 = vld [vmem:[%s567 + $0x2d0] sm:$0xff]
      %v802 = vld [vmem:[%s567 + $0x2d8] sm:$0xff]
      %v803 = vld [vmem:[%s567 + $0x2e0] sm:$0xff]
      %v804 = vld [vmem:[%s567 + $0x2e8] sm:$0xff]
      %v805 = vld [vmem:[%s567 + $0x2f0] sm:$0xff]
      %v806 = vld [vmem:[%s567 + $0x2f8] sm:$0xff]
      %v807 = vld [vmem:[%s571] sm:$0x3f]
      %v808 = vld [vmem:[%s576] sm:$0xff]
      %v809 = vld [vmem:[%s576 + $0x8] sm:$0xff]
      %v810 = vld [vmem:[%s576 + $0x10] sm:$0xff]
      %v811 = vld [vmem:[%s576 + $0x18] sm:$0xff]
      %v812 = vld [vmem:[%s576 + $0x20] sm:$0xff]
      %v813 = vld [vmem:[%s576 + $0x28] sm:$0xff]
      %v814 = vld [vmem:[%s576 + $0x30] sm:$0xff]
      %v815 = vld [vmem:[%s576 + $0x38] sm:$0xff]
      %v816 = vld [vmem:[%s576 + $0x40] sm:$0xff]
      %v817 = vld [vmem:[%s576 + $0x48] sm:$0xff]
      %v818 = vld [vmem:[%s576 + $0x50] sm:$0xff]
      %v819 = vld [vmem:[%s576 + $0x58] sm:$0xff]
      %v820 = vld [vmem:[%s576 + $0x60] sm:$0xff]
      %v821 = vld [vmem:[%s576 + $0x68] sm:$0xff]
      %v822 = vld [vmem:[%s576 + $0x70] sm:$0xff]
      %v823 = vld [vmem:[%s576 + $0x78] sm:$0xff]
      %v824 = vld [vmem:[%s576 + $0x80] sm:$0xff]
      %v825 = vld [vmem:[%s576 + $0x88] sm:$0xff]
      %v826 = vld [vmem:[%s576 + $0x90] sm:$0xff]
      %v827 = vld [vmem:[%s576 + $0x98] sm:$0xff]
      %v828 = vld [vmem:[%s576 + $0xa0] sm:$0xff]
      %v829 = vld [vmem:[%s576 + $0xa8] sm:$0xff]
      %v830 = vld [vmem:[%s576 + $0xb0] sm:$0xff]
      %v831 = vld [vmem:[%s576 + $0xb8] sm:$0xff]
      %v832 = vld [vmem:[%s576 + $0xc0] sm:$0xff]
      %v833 = vld [vmem:[%s576 + $0xc8] sm:$0xff]
      %v834 = vld [vmem:[%s576 + $0xd0] sm:$0xff]
      %v835 = vld [vmem:[%s576 + $0xd8] sm:$0xff]
      %v836 = vld [vmem:[%s576 + $0xe0] sm:$0xff]
      %v837 = vld [vmem:[%s576 + $0xe8] sm:$0xff]
      %v838 = vld [vmem:[%s576 + $0xf0] sm:$0xff]
      %v839 = vld [vmem:[%s576 + $0xf8] sm:$0xff]
      %v840 = vld [vmem:[%s581] sm:$0x3f]
      %v841 = vld [vmem:[%s581 + $0x8] sm:$0x3f]
      %v842 = vld [vmem:[%s586] sm:$0xff]
      %v843 = vld [vmem:[%s586 + $0x8] sm:$0xff]
      %v844 = vld [vmem:[%s586 + $0x10] sm:$0xff]
      %v845 = vld [vmem:[%s586 + $0x18] sm:$0xff]
      %v846 = vld [vmem:[%s586 + $0x20] sm:$0xff]
      %v847 = vld [vmem:[%s586 + $0x28] sm:$0xff]
      %v848 = vld [vmem:[%s586 + $0x30] sm:$0xff]
      %v849 = vld [vmem:[%s586 + $0x38] sm:$0xff]
      %v850 = vld [vmem:[%s586 + $0x40] sm:$0xff]
      %v851 = vld [vmem:[%s586 + $0x48] sm:$0xff]
      %v852 = vld [vmem:[%s586 + $0x50] sm:$0xff]
      %v853 = vld [vmem:[%s586 + $0x58] sm:$0xff]
      %v854 = vld [vmem:[%s586 + $0x60] sm:$0xff]
      %v855 = vld [vmem:[%s586 + $0x68] sm:$0xff]
      %v856 = vld [vmem:[%s586 + $0x70] sm:$0xff]
      %v857 = vld [vmem:[%s586 + $0x78] sm:$0xff]
      %v858 = vld [vmem:[%s586 + $0x80] sm:$0xff]
      %v859 = vld [vmem:[%s586 + $0x88] sm:$0xff]
      %v860 = vld [vmem:[%s586 + $0x90] sm:$0xff]
      %v861 = vld [vmem:[%s586 + $0x98] sm:$0xff]
      %v862 = vld [vmem:[%s586 + $0xa0] sm:$0xff]
      %v863 = vld [vmem:[%s586 + $0xa8] sm:$0xff]
      %v864 = vld [vmem:[%s586 + $0xb0] sm:$0xff]
      %v865 = vld [vmem:[%s586 + $0xb8] sm:$0xff]
      %v866 = vld [vmem:[%s586 + $0xc0] sm:$0xff]
      %v867 = vld [vmem:[%s586 + $0xc8] sm:$0xff]
      %v868 = vld [vmem:[%s586 + $0xd0] sm:$0xff]
      %v869 = vld [vmem:[%s586 + $0xd8] sm:$0xff]
      %v870 = vld [vmem:[%s586 + $0xe0] sm:$0xff]
      %v871 = vld [vmem:[%s586 + $0xe8] sm:$0xff]
      %v872 = vld [vmem:[%s586 + $0xf0] sm:$0xff]
      %v873 = vld [vmem:[%s586 + $0xf8] sm:$0xff]
      %v874 = vld [vmem:[%s590] sm:$0x3]
      %v875 = vld [vmem:[%s595] sm:$0xff]
      %v876 = vld [vmem:[%s595 + $0x8] sm:$0xff]
      %v877 = vld [vmem:[%s595 + $0x10] sm:$0xff]
      %v878 = vld [vmem:[%s595 + $0x18] sm:$0xff]
      %v879 = vld [vmem:[%s595 + $0x20] sm:$0xff]
      %v880 = vld [vmem:[%s595 + $0x28] sm:$0xff]
      %v881 = vld [vmem:[%s595 + $0x30] sm:$0xff]
      %v882 = vld [vmem:[%s595 + $0x38] sm:$0xff]
      %v883 = vld [vmem:[%s595 + $0x40] sm:$0xff]
      %v884 = vld [vmem:[%s595 + $0x48] sm:$0xff]
      %v885 = vld [vmem:[%s595 + $0x50] sm:$0xff]
      %v886 = vld [vmem:[%s595 + $0x58] sm:$0xff]
      %v887 = vld [vmem:[%s595 + $0x60] sm:$0xff]
      %v888 = vld [vmem:[%s595 + $0x68] sm:$0xff]
      %v889 = vld [vmem:[%s595 + $0x70] sm:$0xff]
      %v890 = vld [vmem:[%s595 + $0x78] sm:$0xff]
      %v891 = vld [vmem:[%s595 + $0x80] sm:$0xff]
      %v892 = vld [vmem:[%s595 + $0x88] sm:$0xff]
      %v893 = vld [vmem:[%s595 + $0x90] sm:$0xff]
      %v894 = vld [vmem:[%s595 + $0x98] sm:$0xff]
      %v895 = vld [vmem:[%s595 + $0xa0] sm:$0xff]
      %v896 = vld [vmem:[%s595 + $0xa8] sm:$0xff]
      %v897 = vld [vmem:[%s595 + $0xb0] sm:$0xff]
      %v898 = vld [vmem:[%s595 + $0xb8] sm:$0xff]
      %v899 = vld [vmem:[%s595 + $0xc0] sm:$0xff]
      %v900 = vld [vmem:[%s595 + $0xc8] sm:$0xff]
      %v901 = vld [vmem:[%s595 + $0xd0] sm:$0xff]
      %v902 = vld [vmem:[%s595 + $0xd8] sm:$0xff]
      %v903 = vld [vmem:[%s595 + $0xe0] sm:$0xff]
      %v904 = vld [vmem:[%s595 + $0xe8] sm:$0xff]
      %v905 = vld [vmem:[%s595 + $0xf0] sm:$0xff]
      %v906 = vld [vmem:[%s595 + $0xf8] sm:$0xff]
      %v907 = vpack.c.bf16 %v709, %v707
      %v908 = vpack.c.bf16 %v710, %v708
      %v910 = vlaneseq
      %v911 = vshrl.u32 %v910, 7
      %v912 = vsub.s32 0, %v911
      %v913 = vrot.slane %v807, %v912
      %v914 = vlaneseq
      %v915 = vshrl.u32 %v914, 7
      %v916 = vsub.s32 1, %v915
      %v917 = vrot.slane %v807, %v916
      %v918 = vlaneseq
      %v919 = vshrl.u32 %v918, 7
      %v920 = vsub.s32 2, %v919
      %v921 = vrot.slane %v807, %v920
      %v922 = vlaneseq
      %v923 = vshrl.u32 %v922, 7
      %v924 = vsub.s32 3, %v923
      %v925 = vrot.slane %v807, %v924
      %v926 = vlaneseq
      %v927 = vshrl.u32 %v926, 7
      %v928 = vsub.s32 4, %v927
      %v929 = vrot.slane %v807, %v928
      %v930 = vlaneseq
      %v931 = vshrl.u32 %v930, 7
      %v932 = vsub.s32 5, %v931
      %v933 = vrot.slane %v807, %v932
      %v1036 = vunpack.c.l.b16 %v711
      %v1037 = vunpack.c.h.b16 %v711
      %v1038 = vunpack.c.l.b16 %v712
      %v1039 = vunpack.c.h.b16 %v712
      %v1040 = vunpack.c.l.b16 %v713
      %v1041 = vunpack.c.h.b16 %v713
      %v1042 = vunpack.c.l.b16 %v714
      %v1043 = vunpack.c.h.b16 %v714
      %v1044 = vunpack.c.l.b16 %v715
      %v1045 = vunpack.c.h.b16 %v715
      %v1046 = vunpack.c.l.b16 %v716
      %v1047 = vunpack.c.h.b16 %v716
      %v1048 = vunpack.c.l.b16 %v717
      %v1049 = vunpack.c.h.b16 %v717
      %v1050 = vunpack.c.l.b16 %v718
      %v1051 = vunpack.c.h.b16 %v718
      %v1052 = vunpack.c.l.b16 %v719
      %v1053 = vunpack.c.h.b16 %v719
      %v1054 = vunpack.c.l.b16 %v720
      %v1055 = vunpack.c.h.b16 %v720
      %v1056 = vunpack.c.l.b16 %v721
      %v1057 = vunpack.c.h.b16 %v721
      %v1058 = vunpack.c.l.b16 %v722
      %v1059 = vunpack.c.h.b16 %v722
      %v1060 = vunpack.c.l.b16 %v723
      %v1061 = vunpack.c.h.b16 %v723
      %v1062 = vunpack.c.l.b16 %v724
      %v1063 = vunpack.c.h.b16 %v724
      %v1064 = vunpack.c.l.b16 %v725
      %v1065 = vunpack.c.h.b16 %v725
      %v1066 = vunpack.c.l.b16 %v726
      %v1067 = vunpack.c.h.b16 %v726
      %v1068 = vunpack.c.l.b16 %v727
      %v1069 = vunpack.c.h.b16 %v727
      %v1070 = vunpack.c.l.b16 %v728
      %v1071 = vunpack.c.h.b16 %v728
      %v1072 = vunpack.c.l.b16 %v729
      %v1073 = vunpack.c.h.b16 %v729
      %v1074 = vunpack.c.l.b16 %v730
      %v1075 = vunpack.c.h.b16 %v730
      %v1076 = vunpack.c.l.b16 %v731
      %v1077 = vunpack.c.h.b16 %v731
      %v1078 = vunpack.c.l.b16 %v732
      %v1079 = vunpack.c.h.b16 %v732
      %v1080 = vunpack.c.l.b16 %v733
      %v1081 = vunpack.c.h.b16 %v733
      %v1082 = vunpack.c.l.b16 %v734
      %v1083 = vunpack.c.h.b16 %v734
      %v1084 = vunpack.c.l.b16 %v735
      %v1085 = vunpack.c.h.b16 %v735
      %v1086 = vunpack.c.l.b16 %v736
      %v1087 = vunpack.c.h.b16 %v736
      %v1088 = vunpack.c.l.b16 %v737
      %v1089 = vunpack.c.h.b16 %v737
      %v1090 = vunpack.c.l.b16 %v738
      %v1091 = vunpack.c.h.b16 %v738
      %v1092 = vunpack.c.l.b16 %v739
      %v1093 = vunpack.c.h.b16 %v739
      %v1094 = vunpack.c.l.b16 %v740
      %v1095 = vunpack.c.h.b16 %v740
      %v1096 = vunpack.c.l.b16 %v741
      %v1097 = vunpack.c.h.b16 %v741
      %v1098 = vunpack.c.l.b16 %v742
      %v1099 = vunpack.c.h.b16 %v742
      %v1100 = vunpack.c.l.b16 %v743
      %v1101 = vunpack.c.h.b16 %v743
      %v1102 = vunpack.c.l.b16 %v744
      %v1103 = vunpack.c.h.b16 %v744
      %v1104 = vunpack.c.l.b16 %v745
      %v1105 = vunpack.c.h.b16 %v745
      %v1106 = vunpack.c.l.b16 %v746
      %v1107 = vunpack.c.h.b16 %v746
      %v1108 = vunpack.c.l.b16 %v747
      %v1109 = vunpack.c.h.b16 %v747
      %v1110 = vunpack.c.l.b16 %v748
      %v1111 = vunpack.c.h.b16 %v748
      %v1112 = vunpack.c.l.b16 %v749
      %v1113 = vunpack.c.h.b16 %v749
      %v1114 = vunpack.c.l.b16 %v750
      %v1115 = vunpack.c.h.b16 %v750
      %v1116 = vunpack.c.l.b16 %v751
      %v1117 = vunpack.c.h.b16 %v751
      %v1118 = vunpack.c.l.b16 %v752
      %v1119 = vunpack.c.h.b16 %v752
      %v1120 = vunpack.c.l.b16 %v753
      %v1121 = vunpack.c.h.b16 %v753
      %v1122 = vunpack.c.l.b16 %v754
      %v1123 = vunpack.c.h.b16 %v754
      %v1124 = vunpack.c.l.b16 %v755
      %v1125 = vunpack.c.h.b16 %v755
      %v1126 = vunpack.c.l.b16 %v756
      %v1127 = vunpack.c.h.b16 %v756
      %v1128 = vunpack.c.l.b16 %v757
      %v1129 = vunpack.c.h.b16 %v757
      %v1130 = vunpack.c.l.b16 %v758
      %v1131 = vunpack.c.h.b16 %v758
      %v1132 = vunpack.c.l.b16 %v759
      %v1133 = vunpack.c.h.b16 %v759
      %v1134 = vunpack.c.l.b16 %v760
      %v1135 = vunpack.c.h.b16 %v760
      %v1136 = vunpack.c.l.b16 %v761
      %v1137 = vunpack.c.h.b16 %v761
      %v1138 = vunpack.c.l.b16 %v762
      %v1139 = vunpack.c.h.b16 %v762
      %v1140 = vunpack.c.l.b16 %v763
      %v1141 = vunpack.c.h.b16 %v763
      %v1142 = vunpack.c.l.b16 %v764
      %v1143 = vunpack.c.h.b16 %v764
      %v1144 = vunpack.c.l.b16 %v765
      %v1145 = vunpack.c.h.b16 %v765
      %v1146 = vunpack.c.l.b16 %v766
      %v1147 = vunpack.c.h.b16 %v766
      %v1148 = vunpack.c.l.b16 %v767
      %v1149 = vunpack.c.h.b16 %v767
      %v1150 = vunpack.c.l.b16 %v768
      %v1151 = vunpack.c.h.b16 %v768
      %v1152 = vunpack.c.l.b16 %v769
      %v1153 = vunpack.c.h.b16 %v769
      %v1154 = vunpack.c.l.b16 %v770
      %v1155 = vunpack.c.h.b16 %v770
      %v1156 = vunpack.c.l.b16 %v771
      %v1157 = vunpack.c.h.b16 %v771
      %v1158 = vunpack.c.l.b16 %v772
      %v1159 = vunpack.c.h.b16 %v772
      %v1160 = vunpack.c.l.b16 %v773
      %v1161 = vunpack.c.h.b16 %v773
      %v1162 = vunpack.c.l.b16 %v774
      %v1163 = vunpack.c.h.b16 %v774
      %v1164 = vunpack.c.l.b16 %v775
      %v1165 = vunpack.c.h.b16 %v775
      %v1166 = vunpack.c.l.b16 %v776
      %v1167 = vunpack.c.h.b16 %v776
      %v1168 = vunpack.c.l.b16 %v777
      %v1169 = vunpack.c.h.b16 %v777
      %v1170 = vunpack.c.l.b16 %v778
      %v1171 = vunpack.c.h.b16 %v778
      %v1172 = vunpack.c.l.b16 %v779
      %v1173 = vunpack.c.h.b16 %v779
      %v1174 = vunpack.c.l.b16 %v780
      %v1175 = vunpack.c.h.b16 %v780
      %v1176 = vunpack.c.l.b16 %v781
      %v1177 = vunpack.c.h.b16 %v781
      %v1178 = vunpack.c.l.b16 %v782
      %v1179 = vunpack.c.h.b16 %v782
      %v1180 = vunpack.c.l.b16 %v783
      %v1181 = vunpack.c.h.b16 %v783
      %v1182 = vunpack.c.l.b16 %v784
      %v1183 = vunpack.c.h.b16 %v784
      %v1184 = vunpack.c.l.b16 %v785
      %v1185 = vunpack.c.h.b16 %v785
      %v1186 = vunpack.c.l.b16 %v786
      %v1187 = vunpack.c.h.b16 %v786
      %v1188 = vunpack.c.l.b16 %v787
      %v1189 = vunpack.c.h.b16 %v787
      %v1190 = vunpack.c.l.b16 %v788
      %v1191 = vunpack.c.h.b16 %v788
      %v1192 = vunpack.c.l.b16 %v789
      %v1193 = vunpack.c.h.b16 %v789
      %v1194 = vunpack.c.l.b16 %v790
      %v1195 = vunpack.c.h.b16 %v790
      %v1196 = vunpack.c.l.b16 %v791
      %v1197 = vunpack.c.h.b16 %v791
      %v1198 = vunpack.c.l.b16 %v792
      %v1199 = vunpack.c.h.b16 %v792
      %v1200 = vunpack.c.l.b16 %v793
      %v1201 = vunpack.c.h.b16 %v793
      %v1202 = vunpack.c.l.b16 %v794
      %v1203 = vunpack.c.h.b16 %v794
      %v1204 = vunpack.c.l.b16 %v795
      %v1205 = vunpack.c.h.b16 %v795
      %v1206 = vunpack.c.l.b16 %v796
      %v1207 = vunpack.c.h.b16 %v796
      %v1208 = vunpack.c.l.b16 %v797
      %v1209 = vunpack.c.h.b16 %v797
      %v1210 = vunpack.c.l.b16 %v798
      %v1211 = vunpack.c.h.b16 %v798
      %v1212 = vunpack.c.l.b16 %v799
      %v1213 = vunpack.c.h.b16 %v799
      %v1214 = vunpack.c.l.b16 %v800
      %v1215 = vunpack.c.h.b16 %v800
      %v1216 = vunpack.c.l.b16 %v801
      %v1217 = vunpack.c.h.b16 %v801
      %v1218 = vunpack.c.l.b16 %v802
      %v1219 = vunpack.c.h.b16 %v802
      %v1220 = vunpack.c.l.b16 %v803
      %v1221 = vunpack.c.h.b16 %v803
      %v1222 = vunpack.c.l.b16 %v804
      %v1223 = vunpack.c.h.b16 %v804
      %v1224 = vunpack.c.l.b16 %v805
      %v1225 = vunpack.c.h.b16 %v805
      %v1226 = vunpack.c.l.b16 %v806
      %v1227 = vunpack.c.h.b16 %v806
      %v1228 = vpack.c.b16 %v1042, %v1036
      %v1229 = vpack.c.b16 %v1043, %v1037
      %v1230 = vpack.c.b16 %v1044, %v1038
      %v1231 = vpack.c.b16 %v1045, %v1039
      %v1232 = vpack.c.b16 %v1046, %v1040
      %v1233 = vpack.c.b16 %v1047, %v1041
      %v1234 = vpack.c.b16 %v1054, %v1048
      %v1235 = vpack.c.b16 %v1055, %v1049
      %v1236 = vpack.c.b16 %v1056, %v1050
      %v1237 = vpack.c.b16 %v1057, %v1051
      %v1238 = vpack.c.b16 %v1058, %v1052
      %v1239 = vpack.c.b16 %v1059, %v1053
      %v1240 = vpack.c.b16 %v1066, %v1060
      %v1241 = vpack.c.b16 %v1067, %v1061
      %v1242 = vpack.c.b16 %v1068, %v1062
      %v1243 = vpack.c.b16 %v1069, %v1063
      %v1244 = vpack.c.b16 %v1070, %v1064
      %v1245 = vpack.c.b16 %v1071, %v1065
      %v1246 = vpack.c.b16 %v1078, %v1072
      %v1247 = vpack.c.b16 %v1079, %v1073
      %v1248 = vpack.c.b16 %v1080, %v1074
      %v1249 = vpack.c.b16 %v1081, %v1075
      %v1250 = vpack.c.b16 %v1082, %v1076
      %v1251 = vpack.c.b16 %v1083, %v1077
      %v1252 = vpack.c.b16 %v1090, %v1084
      %v1253 = vpack.c.b16 %v1091, %v1085
      %v1254 = vpack.c.b16 %v1092, %v1086
      %v1255 = vpack.c.b16 %v1093, %v1087
      %v1256 = vpack.c.b16 %v1094, %v1088
      %v1257 = vpack.c.b16 %v1095, %v1089
      %v1258 = vpack.c.b16 %v1102, %v1096
      %v1259 = vpack.c.b16 %v1103, %v1097
      %v1260 = vpack.c.b16 %v1104, %v1098
      %v1261 = vpack.c.b16 %v1105, %v1099
      %v1262 = vpack.c.b16 %v1106, %v1100
      %v1263 = vpack.c.b16 %v1107, %v1101
      %v1264 = vpack.c.b16 %v1114, %v1108
      %v1265 = vpack.c.b16 %v1115, %v1109
      %v1266 = vpack.c.b16 %v1116, %v1110
      %v1267 = vpack.c.b16 %v1117, %v1111
      %v1268 = vpack.c.b16 %v1118, %v1112
      %v1269 = vpack.c.b16 %v1119, %v1113
      %v1270 = vpack.c.b16 %v1126, %v1120
      %v1271 = vpack.c.b16 %v1127, %v1121
      %v1272 = vpack.c.b16 %v1128, %v1122
      %v1273 = vpack.c.b16 %v1129, %v1123
      %v1274 = vpack.c.b16 %v1130, %v1124
      %v1275 = vpack.c.b16 %v1131, %v1125
      %v1276 = vpack.c.b16 %v1138, %v1132
      %v1277 = vpack.c.b16 %v1139, %v1133
      %v1278 = vpack.c.b16 %v1140, %v1134
      %v1279 = vpack.c.b16 %v1141, %v1135
      %v1280 = vpack.c.b16 %v1142, %v1136
      %v1281 = vpack.c.b16 %v1143, %v1137
      %v1282 = vpack.c.b16 %v1150, %v1144
      %v1283 = vpack.c.b16 %v1151, %v1145
      %v1284 = vpack.c.b16 %v1152, %v1146
      %v1285 = vpack.c.b16 %v1153, %v1147
      %v1286 = vpack.c.b16 %v1154, %v1148
      %v1287 = vpack.c.b16 %v1155, %v1149
      %v1288 = vpack.c.b16 %v1162, %v1156
      %v1289 = vpack.c.b16 %v1163, %v1157
      %v1290 = vpack.c.b16 %v1164, %v1158
      %v1291 = vpack.c.b16 %v1165, %v1159
      %v1292 = vpack.c.b16 %v1166, %v1160
      %v1293 = vpack.c.b16 %v1167, %v1161
      %v1294 = vpack.c.b16 %v1174, %v1168
      %v1295 = vpack.c.b16 %v1175, %v1169
      %v1296 = vpack.c.b16 %v1176, %v1170
      %v1297 = vpack.c.b16 %v1177, %v1171
      %v1298 = vpack.c.b16 %v1178, %v1172
      %v1299 = vpack.c.b16 %v1179, %v1173
      %v1300 = vpack.c.b16 %v1186, %v1180
      %v1301 = vpack.c.b16 %v1187, %v1181
      %v1302 = vpack.c.b16 %v1188, %v1182
      %v1303 = vpack.c.b16 %v1189, %v1183
      %v1304 = vpack.c.b16 %v1190, %v1184
      %v1305 = vpack.c.b16 %v1191, %v1185
      %v1306 = vpack.c.b16 %v1198, %v1192
      %v1307 = vpack.c.b16 %v1199, %v1193
      %v1308 = vpack.c.b16 %v1200, %v1194
      %v1309 = vpack.c.b16 %v1201, %v1195
      %v1310 = vpack.c.b16 %v1202, %v1196
      %v1311 = vpack.c.b16 %v1203, %v1197
      %v1312 = vpack.c.b16 %v1210, %v1204
      %v1313 = vpack.c.b16 %v1211, %v1205
      %v1314 = vpack.c.b16 %v1212, %v1206
      %v1315 = vpack.c.b16 %v1213, %v1207
      %v1316 = vpack.c.b16 %v1214, %v1208
      %v1317 = vpack.c.b16 %v1215, %v1209
      %v1318 = vpack.c.b16 %v1222, %v1216
      %v1319 = vpack.c.b16 %v1223, %v1217
      %v1320 = vpack.c.b16 %v1224, %v1218
      %v1321 = vpack.c.b16 %v1225, %v1219
      %v1322 = vpack.c.b16 %v1226, %v1220
      %v1323 = vpack.c.b16 %v1227, %v1221
      %1420 = vmatprep.subr.bf16.mxu0 %v1271
      %1421 = vmatpush1.bf16.msra.mxu0 %v1270
      %1422 = vmatprep.subr.bf16.mxu0 %v1265
      %1423 = vmatpush1.bf16.msra.mxu0 %v1264
      %1424 = vmatprep.subr.bf16.mxu0 %v1259
      %1425 = vmatpush1.bf16.msra.mxu0 %v1258
      %1426 = vmatprep.subr.bf16.mxu0 %v1253
      %1427 = vmatpush1.bf16.msra.mxu0 %v1252
      %1428 = vmatprep.subr.bf16.mxu0 %v1247
      %1429 = vmatpush1.bf16.msra.mxu0 %v1246
      %1430 = vmatprep.subr.bf16.mxu0 %v1241
      %1431 = vmatpush1.bf16.msra.mxu0 %v1240
      %1432 = vmatprep.subr.bf16.mxu0 %v1235
      %1433 = vmatpush1.bf16.msra.mxu0 %v1234
      %1434 = vmatprep.subr.bf16.mxu0 %v1229
      %1435 = vmatpush1.bf16.msra.mxu0 %v1228
      %1436 = vmatprep.subr.bf16.mxu0 %v1319
      %1437 = vmatpush2.bf16.msra.mxu0 %v1318
      %1438 = vmatprep.subr.bf16.mxu0 %v1313
      %1439 = vmatpush2.bf16.msra.mxu0 %v1312
      %1440 = vmatprep.subr.bf16.mxu0 %v1307
      %1441 = vmatpush2.bf16.msra.mxu0 %v1306
      %1442 = vmatprep.subr.bf16.mxu0 %v1301
      %1443 = vmatpush2.bf16.msra.mxu0 %v1300
      %1444 = vmatprep.subr.bf16.mxu0 %v1295
      %1445 = vmatpush2.bf16.msra.mxu0 %v1294
      %1446 = vmatprep.subr.bf16.mxu0 %v1289
      %1447 = vmatpush2.bf16.msra.mxu0 %v1288
      %1448 = vmatprep.subr.bf16.mxu0 %v1283
      %1449 = vmatpush2.bf16.msra.mxu0 %v1282
      %1450 = vmatprep.subr.bf16.mxu0 %v1277
      %1451 = vmatpush2.bf16.msra.mxu0 %v1276
      %1452 = vmatprep.mubr.bf16.mxu0 %v908
      %1453 = vmatmul.mubr.bf16.gmra.mxu0 %v907
      %v1454 = vpop.f32.mrf.mxu0
      %v1455 = vadd.f32 %v913, %v1454
      %v1456 = vpop.f32.mrf.mxu0
      %v1457 = vadd.f32 %v917, %v1456
      %v1458 = vpop.f32.mrf.mxu0
      %v1459 = vadd.f32 %v913, %v1458
      %v1460 = vpop.f32.mrf.mxu0
      %v1461 = vadd.f32 %v917, %v1460
      %1462 = vdwg.mxu0
      %1463 = vmatprep.subr.bf16.mxu0 %v1273
      %1464 = vmatpush1.bf16.msra.mxu0 %v1272
      %1465 = vmatprep.subr.bf16.mxu0 %v1267
      %1466 = vmatpush1.bf16.msra.mxu0 %v1266
      %1467 = vmatprep.subr.bf16.mxu0 %v1261
      %1468 = vmatpush1.bf16.msra.mxu0 %v1260
      %1469 = vmatprep.subr.bf16.mxu0 %v1255
      %1470 = vmatpush1.bf16.msra.mxu0 %v1254
      %1471 = vmatprep.subr.bf16.mxu0 %v1249
      %1472 = vmatpush1.bf16.msra.mxu0 %v1248
      %1473 = vmatprep.subr.bf16.mxu0 %v1243
      %1474 = vmatpush1.bf16.msra.mxu0 %v1242
      %1475 = vmatprep.subr.bf16.mxu0 %v1237
      %1476 = vmatpush1.bf16.msra.mxu0 %v1236
      %1477 = vmatprep.subr.bf16.mxu0 %v1231
      %1478 = vmatpush1.bf16.msra.mxu0 %v1230
      %1479 = vmatprep.subr.bf16.mxu0 %v1321
      %1480 = vmatpush2.bf16.msra.mxu0 %v1320
      %1481 = vmatprep.subr.bf16.mxu0 %v1315
      %1482 = vmatpush2.bf16.msra.mxu0 %v1314
      %1483 = vmatprep.subr.bf16.mxu0 %v1309
      %1484 = vmatpush2.bf16.msra.mxu0 %v1308
      %1485 = vmatprep.subr.bf16.mxu0 %v1303
      %1486 = vmatpush2.bf16.msra.mxu0 %v1302
      %1487 = vmatprep.subr.bf16.mxu0 %v1297
      %1488 = vmatpush2.bf16.msra.mxu0 %v1296
      %1489 = vmatprep.subr.bf16.mxu0 %v1291
      %1490 = vmatpush2.bf16.msra.mxu0 %v1290
      %1491 = vmatprep.subr.bf16.mxu0 %v1285
      %1492 = vmatpush2.bf16.msra.mxu0 %v1284
      %1493 = vmatprep.subr.bf16.mxu0 %v1279
      %1494 = vmatpush2.bf16.msra.mxu0 %v1278
      %1495 = vmatprep.mubr.bf16.mxu0 %v908
      %1496 = vmatmul.mubr.bf16.gmra.mxu0 %v907
      %v1497 = vpop.f32.mrf.mxu0
      %v1498 = vadd.f32 %v921, %v1497
      %v1499 = vpop.f32.mrf.mxu0
      %v1500 = vadd.f32 %v925, %v1499
      %v1501 = vpop.f32.mrf.mxu0
      %v1502 = vadd.f32 %v921, %v1501
      %v1503 = vpop.f32.mrf.mxu0
      %v1504 = vadd.f32 %v925, %v1503
      %1505 = vdwg.mxu0
      %1506 = vmatprep.subr.bf16.mxu0 %v1275
      %1507 = vmatpush1.bf16.msra.mxu0 %v1274
      %1508 = vmatprep.subr.bf16.mxu0 %v1269
      %1509 = vmatpush1.bf16.msra.mxu0 %v1268
      %1510 = vmatprep.subr.bf16.mxu0 %v1263
      %1511 = vmatpush1.bf16.msra.mxu0 %v1262
      %1512 = vmatprep.subr.bf16.mxu0 %v1257
      %1513 = vmatpush1.bf16.msra.mxu0 %v1256
      %1514 = vmatprep.subr.bf16.mxu0 %v1251
      %1515 = vmatpush1.bf16.msra.mxu0 %v1250
      %1516 = vmatprep.subr.bf16.mxu0 %v1245
      %1517 = vmatpush1.bf16.msra.mxu0 %v1244
      %1518 = vmatprep.subr.bf16.mxu0 %v1239
      %1519 = vmatpush1.bf16.msra.mxu0 %v1238
      %1520 = vmatprep.subr.bf16.mxu0 %v1233
      %1521 = vmatpush1.bf16.msra.mxu0 %v1232
      %1522 = vmatprep.subr.bf16.mxu0 %v1323
      %1523 = vmatpush2.bf16.msra.mxu0 %v1322
      %1524 = vmatprep.subr.bf16.mxu0 %v1317
      %1525 = vmatpush2.bf16.msra.mxu0 %v1316
      %1526 = vmatprep.subr.bf16.mxu0 %v1311
      %1527 = vmatpush2.bf16.msra.mxu0 %v1310
      %1528 = vmatprep.subr.bf16.mxu0 %v1305
      %1529 = vmatpush2.bf16.msra.mxu0 %v1304
      %1530 = vmatprep.subr.bf16.mxu0 %v1299
      %1531 = vmatpush2.bf16.msra.mxu0 %v1298
      %1532 = vmatprep.subr.bf16.mxu0 %v1293
      %1533 = vmatpush2.bf16.msra.mxu0 %v1292
      %1534 = vmatprep.subr.bf16.mxu0 %v1287
      %1535 = vmatpush2.bf16.msra.mxu0 %v1286
      %1536 = vmatprep.subr.bf16.mxu0 %v1281
      %1537 = vmatpush2.bf16.msra.mxu0 %v1280
      %1538 = vmatprep.mubr.bf16.mxu0 %v908
      %1539 = vmatmul.mubr.bf16.gmra.mxu0 %v907
      %v1540 = vpop.f32.mrf.mxu0
      %v1541 = vadd.f32 %v929, %v1540
      %v1542 = vpop.f32.mrf.mxu0
      %v1543 = vadd.f32 %v933, %v1542
      %v1544 = vpop.f32.mrf.mxu0
      %v1545 = vadd.f32 %v929, %v1544
      %v1546 = vpop.f32.mrf.mxu0
      %v1547 = vadd.f32 %v933, %v1546
      %1548 = vdwg.mxu0
      %v1549 = vpack.c.bf16 %v1455, %v1455
      %v1550 = vpack.c.bf16 %v1457, %v1457
      %v1551 = vpack.c.bf16 %v1498, %v1498
      %v1552 = vpack.c.bf16 %v1500, %v1500
      %v1553 = vpack.c.bf16 %v1541, %v1541
      %v1554 = vpack.c.bf16 %v1543, %v1543
      %v1555 = vpack.c.bf16 %v1459, %v1459
      %v1556 = vpack.c.bf16 %v1461, %v1461
      %v1557 = vpack.c.bf16 %v1502, %v1502
      %v1558 = vpack.c.bf16 %v1504, %v1504
      %v1559 = vpack.c.bf16 %v1545, %v1545
      %v1560 = vpack.c.bf16 %v1547, %v1547
      %1561 = vmatprep.subr.bf16.mxu0 0
      %1562 = vmatpush1.bf16.xpose.msra.mxu0 0
      %1563 = vmatprep.subr.bf16.mxu0 0
      %1564 = vmatpush1.bf16.xpose.msra.mxu0 0
      %1565 = vmatprep.subr.bf16.mxu0 0
      %1566 = vmatpush1.bf16.xpose.msra.mxu0 0
      %1567 = vmatprep.subr.bf16.mxu0 0
      %1568 = vmatpush1.bf16.xpose.msra.mxu0 0
      %1569 = vmatprep.subr.bf16.mxu0 0
      %1570 = vmatpush1.bf16.xpose.msra.mxu0 0
      %1571 = vmatprep.subr.bf16.mxu0 0
      %1572 = vmatpush1.bf16.xpose.msra.mxu0 0
      %1573 = vmatprep.subr.bf16.mxu0 0
      %1574 = vmatpush1.bf16.xpose.msra.mxu0 0
      %1575 = vmatprep.subr.bf16.mxu0 0
      %1576 = vmatpush1.bf16.xpose.msra.mxu0 %v1551
      %1577 = vmatprep.subr.bf16.mxu0 0
      %1578 = vmatpush2.bf16.xpose.msra.mxu0 0
      %1579 = vmatprep.subr.bf16.mxu0 0
      %1580 = vmatpush2.bf16.xpose.msra.mxu0 0
      %1581 = vmatprep.subr.bf16.mxu0 0
      %1582 = vmatpush2.bf16.xpose.msra.mxu0 0
      %1583 = vmatprep.subr.bf16.mxu0 0
      %1584 = vmatpush2.bf16.xpose.msra.mxu0 0
      %1585 = vmatprep.subr.bf16.mxu0 0
      %1586 = vmatpush2.bf16.xpose.msra.mxu0 0
      %1587 = vmatprep.subr.bf16.mxu0 0
      %1588 = vmatpush2.bf16.xpose.msra.mxu0 0
      %1589 = vmatprep.subr.bf16.mxu0 0
      %1590 = vmatpush2.bf16.xpose.msra.mxu0 0
      %1591 = vmatprep.subr.bf16.mxu0 0
      %1592 = vmatpush2.bf16.xpose.msra.mxu0 0
      %1593 = vmatprep.mubr.bf16.mxu0 0
      %1594 = vmatmul.mubr.bf16.gmra.mxu0 %v1549
      %v1595 = vpop.f32.mrf.mxu0
      %v1596 = vadd.f32 0.0, %v1595
      %v1597 = vpop.f32.mrf.mxu0
      %v1598 = vpop.f32.mrf.mxu0
      %v1599 = vpop.f32.mrf.mxu0
      %1600 = vdwg.mxu0
      %1601 = vmatprep.subr.bf16.mxu0 0
      %1602 = vmatpush1.bf16.xpose.msra.mxu0 0
      %1603 = vmatprep.subr.bf16.mxu0 0
      %1604 = vmatpush1.bf16.xpose.msra.mxu0 0
      %1605 = vmatprep.subr.bf16.mxu0 0
      %1606 = vmatpush1.bf16.xpose.msra.mxu0 0
      %1607 = vmatprep.subr.bf16.mxu0 0
      %1608 = vmatpush1.bf16.xpose.msra.mxu0 0
      %1609 = vmatprep.subr.bf16.mxu0 0
      %1610 = vmatpush1.bf16.xpose.msra.mxu0 0
      %1611 = vmatprep.subr.bf16.mxu0 0
      %1612 = vmatpush1.bf16.xpose.msra.mxu0 0
      %1613 = vmatprep.subr.bf16.mxu0 0
      %1614 = vmatpush1.bf16.xpose.msra.mxu0 0
      %1615 = vmatprep.subr.bf16.mxu0 0
      %1616 = vmatpush1.bf16.xpose.msra.mxu0 %v1557
      %1617 = vmatprep.subr.bf16.mxu0 0
      %1618 = vmatpush2.bf16.xpose.msra.mxu0 0
      %1619 = vmatprep.subr.bf16.mxu0 0
      %1620 = vmatpush2.bf16.xpose.msra.mxu0 0
      %1621 = vmatprep.subr.bf16.mxu0 0
      %1622 = vmatpush2.bf16.xpose.msra.mxu0 0
      %1623 = vmatprep.subr.bf16.mxu0 0
      %1624 = vmatpush2.bf16.xpose.msra.mxu0 0
      %1625 = vmatprep.subr.bf16.mxu0 0
      %1626 = vmatpush2.bf16.xpose.msra.mxu0 0
      %1627 = vmatprep.subr.bf16.mxu0 0
      %1628 = vmatpush2.bf16.xpose.msra.mxu0 0
      %1629 = vmatprep.subr.bf16.mxu0 0
      %1630 = vmatpush2.bf16.xpose.msra.mxu0 0
      %1631 = vmatprep.subr.bf16.mxu0 0
      %1632 = vmatpush2.bf16.xpose.msra.mxu0 0
      %1633 = vmatprep.mubr.bf16.mxu0 0
      %1634 = vmatmul.mubr.bf16.gmra.mxu0 %v1555
      %v1635 = vpop.f32.mrf.mxu0
      %v1636 = vadd.f32 0.0, %v1635
      %v1637 = vpop.f32.mrf.mxu0
      %v1638 = vpop.f32.mrf.mxu0
      %v1639 = vpop.f32.mrf.mxu0
      %1640 = vdwg.mxu0
      %vm1641 = vcmask 64512
      %v1642 = vsel %vm1641, %v1596, -inf
      %1643 = vmax.xlane.f32.xlu0 %v1642
      %v1644 = vpop.xlane.xlu0 %1643
      %v1645 = vsel %vm1641, %v1636, -inf
      %1646 = vmax.xlane.f32.xlu0 %v1645
      %v1647 = vpop.xlane.xlu0 %1646
      %v1648 = vsub.f32 %v1596, %v1644
      %v1649 = vsub.f32 %v1636, %v1647
      %v1650 = vmul.f32 %v1648, 1.442695
      %v1651 = vpow.pop %v1650
      %v1652 = vmul.f32 %v1649, 1.442695
      %v1653 = vpow.pop %v1652
      %v1654 = vsel %vm1641, %v1651, 0.0
      %1655 = vadd.xlane.f32.xlu0 %v1654
      %v1656 = vpop.xlane.xlu0 %1655
      %v1657 = vsel %vm1641, %v1653, 0.0
      %1658 = vadd.xlane.f32.xlu0 %v1657
      %v1659 = vpop.xlane.xlu0 %1658
      %v1660 = vrcp.pop %v1656
      %v1661 = vrcp.pop %v1659
      %v1662 = vmul.f32 %v1651, %v1660
      %v1663 = vmul.f32 %v1653, %v1661
      %v1664 = vpack.c.bf16 %v1662, %v1662
      %v1665 = vpack.c.bf16 %v1663, %v1663
      %v1667 = vsel %vm1641, %v1664, 0
      %vm1669 = vcmask 1043456
      %v1671 = vsel %vm1669, %v1553, 0
      %1673 = vmatprep.subr.bf16.mxu0 0
      %1674 = vmatpush1.bf16.msra.mxu0 0
      %1675 = vmatprep.subr.bf16.mxu0 0
      %1676 = vmatpush1.bf16.msra.mxu0 0
      %1677 = vmatprep.subr.bf16.mxu0 0
      %1678 = vmatpush1.bf16.msra.mxu0 0
      %1679 = vmatprep.subr.bf16.mxu0 0
      %1680 = vmatpush1.bf16.msra.mxu0 0
      %1681 = vmatprep.subr.bf16.mxu0 0
      %1682 = vmatpush1.bf16.msra.mxu0 0
      %1683 = vmatprep.subr.bf16.mxu0 0
      %1684 = vmatpush1.bf16.msra.mxu0 0
      %1685 = vmatprep.subr.bf16.mxu0 0
      %1686 = vmatpush1.bf16.msra.mxu0 0
      %1687 = vmatprep.subr.bf16.mxu0 0
      %1688 = vmatpush1.bf16.msra.mxu0 %v1671
      %1689 = vmatprep.subr.bf16.mxu0 0
      %1690 = vmatpush2.bf16.msra.mxu0 0
      %1691 = vmatprep.subr.bf16.mxu0 0
      %1692 = vmatpush2.bf16.msra.mxu0 0
      %1693 = vmatprep.subr.bf16.mxu0 0
      %1694 = vmatpush2.bf16.msra.mxu0 0
      %1695 = vmatprep.subr.bf16.mxu0 0
      %1696 = vmatpush2.bf16.msra.mxu0 0
      %1697 = vmatprep.subr.bf16.mxu0 0
      %1698 = vmatpush2.bf16.msra.mxu0 0
      %1699 = vmatprep.subr.bf16.mxu0 0
      %1700 = vmatpush2.bf16.msra.mxu0 0
      %1701 = vmatprep.subr.bf16.mxu0 0
      %1702 = vmatpush2.bf16.msra.mxu0 0
      %1703 = vmatprep.subr.bf16.mxu0 0
      %1704 = vmatpush2.bf16.msra.mxu0 0
      %1705 = vmatprep.mubr.bf16.mxu0 0
      %1706 = vmatmul.mubr.bf16.gmra.mxu0 %v1667
      %v1707 = vpop.f32.mrf.mxu0
      %v1708 = vadd.f32 0.0, %v1707
      %v1709 = vpop.f32.mrf.mxu0
      %v1710 = vpop.f32.mrf.mxu0
      %v1711 = vpop.f32.mrf.mxu0
      %1712 = vdwg.mxu0
      %v1714 = vsel %vm1641, %v1665, 0
      %v1717 = vsel %vm1669, %v1559, 0
      %1719 = vmatprep.subr.bf16.mxu0 0
      %1720 = vmatpush1.bf16.msra.mxu0 0
      %1721 = vmatprep.subr.bf16.mxu0 0
      %1722 = vmatpush1.bf16.msra.mxu0 0
      %1723 = vmatprep.subr.bf16.mxu0 0
      %1724 = vmatpush1.bf16.msra.mxu0 0
      %1725 = vmatprep.subr.bf16.mxu0 0
      %1726 = vmatpush1.bf16.msra.mxu0 0
      %1727 = vmatprep.subr.bf16.mxu0 0
      %1728 = vmatpush1.bf16.msra.mxu0 0
      %1729 = vmatprep.subr.bf16.mxu0 0
      %1730 = vmatpush1.bf16.msra.mxu0 0
      %1731 = vmatprep.subr.bf16.mxu0 0
      %1732 = vmatpush1.bf16.msra.mxu0 0
      %1733 = vmatprep.subr.bf16.mxu0 0
      %1734 = vmatpush1.bf16.msra.mxu0 %v1717
      %1735 = vmatprep.subr.bf16.mxu0 0
      %1736 = vmatpush2.bf16.msra.mxu0 0
      %1737 = vmatprep.subr.bf16.mxu0 0
      %1738 = vmatpush2.bf16.msra.mxu0 0
      %1739 = vmatprep.subr.bf16.mxu0 0
      %1740 = vmatpush2.bf16.msra.mxu0 0
      %1741 = vmatprep.subr.bf16.mxu0 0
      %1742 = vmatpush2.bf16.msra.mxu0 0
      %1743 = vmatprep.subr.bf16.mxu0 0
      %1744 = vmatpush2.bf16.msra.mxu0 0
      %1745 = vmatprep.subr.bf16.mxu0 0
      %1746 = vmatpush2.bf16.msra.mxu0 0
      %1747 = vmatprep.subr.bf16.mxu0 0
      %1748 = vmatpush2.bf16.msra.mxu0 0
      %1749 = vmatprep.subr.bf16.mxu0 0
      %1750 = vmatpush2.bf16.msra.mxu0 0
      %1751 = vmatprep.mubr.bf16.mxu0 0
      %1752 = vmatmul.mubr.bf16.gmra.mxu0 %v1714
      %v1753 = vpop.f32.mrf.mxu0
      %v1754 = vadd.f32 0.0, %v1753
      %v1755 = vpop.f32.mrf.mxu0
      %v1756 = vpop.f32.mrf.mxu0
      %v1757 = vpop.f32.mrf.mxu0
      %1758 = vdwg.mxu0
      %1759 = vmatprep.subr.bf16.mxu0 0
      %1760 = vmatpush1.bf16.xpose.msra.mxu0 0
      %1761 = vmatprep.subr.bf16.mxu0 0
      %1762 = vmatpush1.bf16.xpose.msra.mxu0 0
      %1763 = vmatprep.subr.bf16.mxu0 0
      %1764 = vmatpush1.bf16.xpose.msra.mxu0 0
      %1765 = vmatprep.subr.bf16.mxu0 0
      %1766 = vmatpush1.bf16.xpose.msra.mxu0 0
      %1767 = vmatprep.subr.bf16.mxu0 0
      %1768 = vmatpush1.bf16.xpose.msra.mxu0 0
      %1769 = vmatprep.subr.bf16.mxu0 0
      %1770 = vmatpush1.bf16.xpose.msra.mxu0 0
      %1771 = vmatprep.subr.bf16.mxu0 0
      %1772 = vmatpush1.bf16.xpose.msra.mxu0 0
      %1773 = vmatprep.subr.bf16.mxu0 0
      %1774 = vmatpush1.bf16.xpose.msra.mxu0 %v1552
      %1775 = vmatprep.subr.bf16.mxu0 0
      %1776 = vmatpush2.bf16.xpose.msra.mxu0 0
      %1777 = vmatprep.subr.bf16.mxu0 0
      %1778 = vmatpush2.bf16.xpose.msra.mxu0 0
      %1779 = vmatprep.subr.bf16.mxu0 0
      %1780 = vmatpush2.bf16.xpose.msra.mxu0 0
      %1781 = vmatprep.subr.bf16.mxu0 0
      %1782 = vmatpush2.bf16.xpose.msra.mxu0 0
      %1783 = vmatprep.subr.bf16.mxu0 0
      %1784 = vmatpush2.bf16.xpose.msra.mxu0 0
      %1785 = vmatprep.subr.bf16.mxu0 0
      %1786 = vmatpush2.bf16.xpose.msra.mxu0 0
      %1787 = vmatprep.subr.bf16.mxu0 0
      %1788 = vmatpush2.bf16.xpose.msra.mxu0 0
      %1789 = vmatprep.subr.bf16.mxu0 0
      %1790 = vmatpush2.bf16.xpose.msra.mxu0 0
      %1791 = vmatprep.mubr.bf16.mxu0 0
      %1792 = vmatmul.mubr.bf16.gmra.mxu0 %v1550
      %v1793 = vpop.f32.mrf.mxu0
      %v1794 = vadd.f32 0.0, %v1793
      %v1795 = vpop.f32.mrf.mxu0
      %v1796 = vpop.f32.mrf.mxu0
      %v1797 = vpop.f32.mrf.mxu0
      %1798 = vdwg.mxu0
      %1799 = vmatprep.subr.bf16.mxu0 0
      %1800 = vmatpush1.bf16.xpose.msra.mxu0 0
      %1801 = vmatprep.subr.bf16.mxu0 0
      %1802 = vmatpush1.bf16.xpose.msra.mxu0 0
      %1803 = vmatprep.subr.bf16.mxu0 0
      %1804 = vmatpush1.bf16.xpose.msra.mxu0 0
      %1805 = vmatprep.subr.bf16.mxu0 0
      %1806 = vmatpush1.bf16.xpose.msra.mxu0 0
      %1807 = vmatprep.subr.bf16.mxu0 0
      %1808 = vmatpush1.bf16.xpose.msra.mxu0 0
      %1809 = vmatprep.subr.bf16.mxu0 0
      %1810 = vmatpush1.bf16.xpose.msra.mxu0 0
      %1811 = vmatprep.subr.bf16.mxu0 0
      %1812 = vmatpush1.bf16.xpose.msra.mxu0 0
      %1813 = vmatprep.subr.bf16.mxu0 0
      %1814 = vmatpush1.bf16.xpose.msra.mxu0 %v1558
      %1815 = vmatprep.subr.bf16.mxu0 0
      %1816 = vmatpush2.bf16.xpose.msra.mxu0 0
      %1817 = vmatprep.subr.bf16.mxu0 0
      %1818 = vmatpush2.bf16.xpose.msra.mxu0 0
      %1819 = vmatprep.subr.bf16.mxu0 0
      %1820 = vmatpush2.bf16.xpose.msra.mxu0 0
      %1821 = vmatprep.subr.bf16.mxu0 0
      %1822 = vmatpush2.bf16.xpose.msra.mxu0 0
      %1823 = vmatprep.subr.bf16.mxu0 0
      %1824 = vmatpush2.bf16.xpose.msra.mxu0 0
      %1825 = vmatprep.subr.bf16.mxu0 0
      %1826 = vmatpush2.bf16.xpose.msra.mxu0 0
      %1827 = vmatprep.subr.bf16.mxu0 0
      %1828 = vmatpush2.bf16.xpose.msra.mxu0 0
      %1829 = vmatprep.subr.bf16.mxu0 0
      %1830 = vmatpush2.bf16.xpose.msra.mxu0 0
      %1831 = vmatprep.mubr.bf16.mxu0 0
      %1832 = vmatmul.mubr.bf16.gmra.mxu0 %v1556
      %v1833 = vpop.f32.mrf.mxu0
      %v1834 = vadd.f32 0.0, %v1833
      %v1835 = vpop.f32.mrf.mxu0
      %v1836 = vpop.f32.mrf.mxu0
      %v1837 = vpop.f32.mrf.mxu0
      %1838 = vdwg.mxu0
      %v1839 = vsel %vm1641, %v1794, -inf
      %1840 = vmax.xlane.f32.xlu0 %v1839
      %v1841 = vpop.xlane.xlu0 %1840
      %v1842 = vsel %vm1641, %v1834, -inf
      %1843 = vmax.xlane.f32.xlu0 %v1842
      %v1844 = vpop.xlane.xlu0 %1843
      %v1845 = vsub.f32 %v1794, %v1841
      %v1846 = vsub.f32 %v1834, %v1844
      %v1847 = vmul.f32 %v1845, 1.442695
      %v1848 = vpow.pop %v1847
      %v1849 = vmul.f32 %v1846, 1.442695
      %v1850 = vpow.pop %v1849
      %v1851 = vsel %vm1641, %v1848, 0.0
      %1852 = vadd.xlane.f32.xlu0 %v1851
      %v1853 = vpop.xlane.xlu0 %1852
      %v1854 = vsel %vm1641, %v1850, 0.0
      %1855 = vadd.xlane.f32.xlu0 %v1854
      %v1856 = vpop.xlane.xlu0 %1855
      %v1857 = vrcp.pop %v1853
      %v1858 = vrcp.pop %v1856
      %v1859 = vmul.f32 %v1848, %v1857
      %v1860 = vmul.f32 %v1850, %v1858
      %v1861 = vpack.c.bf16 %v1859, %v1859
      %v1862 = vpack.c.bf16 %v1860, %v1860
      %v1864 = vsel %vm1641, %v1861, 0
      %v1867 = vsel %vm1669, %v1554, 0
      %1869 = vmatprep.subr.bf16.mxu0 0
      %1870 = vmatpush1.bf16.msra.mxu0 0
      %1871 = vmatprep.subr.bf16.mxu0 0
      %1872 = vmatpush1.bf16.msra.mxu0 0
      %1873 = vmatprep.subr.bf16.mxu0 0
      %1874 = vmatpush1.bf16.msra.mxu0 0
      %1875 = vmatprep.subr.bf16.mxu0 0
      %1876 = vmatpush1.bf16.msra.mxu0 0
      %1877 = vmatprep.subr.bf16.mxu0 0
      %1878 = vmatpush1.bf16.msra.mxu0 0
      %1879 = vmatprep.subr.bf16.mxu0 0
      %1880 = vmatpush1.bf16.msra.mxu0 0
      %1881 = vmatprep.subr.bf16.mxu0 0
      %1882 = vmatpush1.bf16.msra.mxu0 0
      %1883 = vmatprep.subr.bf16.mxu0 0
      %1884 = vmatpush1.bf16.msra.mxu0 %v1867
      %1885 = vmatprep.subr.bf16.mxu0 0
      %1886 = vmatpush2.bf16.msra.mxu0 0
      %1887 = vmatprep.subr.bf16.mxu0 0
      %1888 = vmatpush2.bf16.msra.mxu0 0
      %1889 = vmatprep.subr.bf16.mxu0 0
      %1890 = vmatpush2.bf16.msra.mxu0 0
      %1891 = vmatprep.subr.bf16.mxu0 0
      %1892 = vmatpush2.bf16.msra.mxu0 0
      %1893 = vmatprep.subr.bf16.mxu0 0
      %1894 = vmatpush2.bf16.msra.mxu0 0
      %1895 = vmatprep.subr.bf16.mxu0 0
      %1896 = vmatpush2.bf16.msra.mxu0 0
      %1897 = vmatprep.subr.bf16.mxu0 0
      %1898 = vmatpush2.bf16.msra.mxu0 0
      %1899 = vmatprep.subr.bf16.mxu0 0
      %1900 = vmatpush2.bf16.msra.mxu0 0
      %1901 = vmatprep.mubr.bf16.mxu0 0
      %1902 = vmatmul.mubr.bf16.gmra.mxu0 %v1864
      %v1903 = vpop.f32.mrf.mxu0
      %v1904 = vadd.f32 0.0, %v1903
      %v1905 = vpop.f32.mrf.mxu0
      %v1906 = vpop.f32.mrf.mxu0
      %v1907 = vpop.f32.mrf.mxu0
      %1908 = vdwg.mxu0
      %v1910 = vsel %vm1641, %v1862, 0
      %v1913 = vsel %vm1669, %v1560, 0
      %1915 = vmatprep.subr.bf16.mxu0 0
      %1916 = vmatpush1.bf16.msra.mxu0 0
      %1917 = vmatprep.subr.bf16.mxu0 0
      %1918 = vmatpush1.bf16.msra.mxu0 0
      %1919 = vmatprep.subr.bf16.mxu0 0
      %1920 = vmatpush1.bf16.msra.mxu0 0
      %1921 = vmatprep.subr.bf16.mxu0 0
      %1922 = vmatpush1.bf16.msra.mxu0 0
      %1923 = vmatprep.subr.bf16.mxu0 0
      %1924 = vmatpush1.bf16.msra.mxu0 0
      %1925 = vmatprep.subr.bf16.mxu0 0
      %1926 = vmatpush1.bf16.msra.mxu0 0
      %1927 = vmatprep.subr.bf16.mxu0 0
      %1928 = vmatpush1.bf16.msra.mxu0 0
      %1929 = vmatprep.subr.bf16.mxu0 0
      %1930 = vmatpush1.bf16.msra.mxu0 %v1913
      %1931 = vmatprep.subr.bf16.mxu0 0
      %1932 = vmatpush2.bf16.msra.mxu0 0
      %1933 = vmatprep.subr.bf16.mxu0 0
      %1934 = vmatpush2.bf16.msra.mxu0 0
      %1935 = vmatprep.subr.bf16.mxu0 0
      %1936 = vmatpush2.bf16.msra.mxu0 0
      %1937 = vmatprep.subr.bf16.mxu0 0
      %1938 = vmatpush2.bf16.msra.mxu0 0
      %1939 = vmatprep.subr.bf16.mxu0 0
      %1940 = vmatpush2.bf16.msra.mxu0 0
      %1941 = vmatprep.subr.bf16.mxu0 0
      %1942 = vmatpush2.bf16.msra.mxu0 0
      %1943 = vmatprep.subr.bf16.mxu0 0
      %1944 = vmatpush2.bf16.msra.mxu0 0
      %1945 = vmatprep.subr.bf16.mxu0 0
      %1946 = vmatpush2.bf16.msra.mxu0 0
      %1947 = vmatprep.mubr.bf16.mxu0 0
      %1948 = vmatmul.mubr.bf16.gmra.mxu0 %v1910
      %v1949 = vpop.f32.mrf.mxu0
      %v1950 = vadd.f32 0.0, %v1949
      %v1951 = vpop.f32.mrf.mxu0
      %v1952 = vpop.f32.mrf.mxu0
      %v1953 = vpop.f32.mrf.mxu0
      %1954 = vdwg.mxu0
      %v1955 = vpack.c.bf16 %v1754, %v1708
      %v1956 = vpack.c.bf16 %v1950, %v1904
      %v1957 = vlaneseq
      %v1958 = vshrl.u32 %v1957, 7
      %v1959 = vsub.s32 0, %v1958
      %v1960 = vrot.slane %v840, %v1959
      %v1961 = vlaneseq
      %v1962 = vshrl.u32 %v1961, 7
      %v1963 = vsub.s32 0, %v1962
      %v1964 = vrot.slane %v841, %v1963
      %v1997 = vunpack.c.l.b16 %v808
      %v1998 = vunpack.c.h.b16 %v808
      %v1999 = vunpack.c.l.b16 %v809
      %v2000 = vunpack.c.h.b16 %v809
      %v2001 = vunpack.c.l.b16 %v810
      %v2002 = vunpack.c.h.b16 %v810
      %v2003 = vunpack.c.l.b16 %v811
      %v2004 = vunpack.c.h.b16 %v811
      %v2005 = vunpack.c.l.b16 %v812
      %v2006 = vunpack.c.h.b16 %v812
      %v2007 = vunpack.c.l.b16 %v813
      %v2008 = vunpack.c.h.b16 %v813
      %v2009 = vunpack.c.l.b16 %v814
      %v2010 = vunpack.c.h.b16 %v814
      %v2011 = vunpack.c.l.b16 %v815
      %v2012 = vunpack.c.h.b16 %v815
      %v2013 = vunpack.c.l.b16 %v816
      %v2014 = vunpack.c.h.b16 %v816
      %v2015 = vunpack.c.l.b16 %v817
      %v2016 = vunpack.c.h.b16 %v817
      %v2017 = vunpack.c.l.b16 %v818
      %v2018 = vunpack.c.h.b16 %v818
      %v2019 = vunpack.c.l.b16 %v819
      %v2020 = vunpack.c.h.b16 %v819
      %v2021 = vunpack.c.l.b16 %v820
      %v2022 = vunpack.c.h.b16 %v820
      %v2023 = vunpack.c.l.b16 %v821
      %v2024 = vunpack.c.h.b16 %v821
      %v2025 = vunpack.c.l.b16 %v822
      %v2026 = vunpack.c.h.b16 %v822
      %v2027 = vunpack.c.l.b16 %v823
      %v2028 = vunpack.c.h.b16 %v823
      %v2029 = vunpack.c.l.b16 %v824
      %v2030 = vunpack.c.h.b16 %v824
      %v2031 = vunpack.c.l.b16 %v825
      %v2032 = vunpack.c.h.b16 %v825
      %v2033 = vunpack.c.l.b16 %v826
      %v2034 = vunpack.c.h.b16 %v826
      %v2035 = vunpack.c.l.b16 %v827
      %v2036 = vunpack.c.h.b16 %v827
      %v2037 = vunpack.c.l.b16 %v828
      %v2038 = vunpack.c.h.b16 %v828
      %v2039 = vunpack.c.l.b16 %v829
      %v2040 = vunpack.c.h.b16 %v829
      %v2041 = vunpack.c.l.b16 %v830
      %v2042 = vunpack.c.h.b16 %v830
      %v2043 = vunpack.c.l.b16 %v831
      %v2044 = vunpack.c.h.b16 %v831
      %v2045 = vunpack.c.l.b16 %v832
      %v2046 = vunpack.c.h.b16 %v832
      %v2047 = vunpack.c.l.b16 %v833
      %v2048 = vunpack.c.h.b16 %v833
      %v2049 = vunpack.c.l.b16 %v834
      %v2050 = vunpack.c.h.b16 %v834
      %v2051 = vunpack.c.l.b16 %v835
      %v2052 = vunpack.c.h.b16 %v835
      %v2053 = vunpack.c.l.b16 %v836
      %v2054 = vunpack.c.h.b16 %v836
      %v2055 = vunpack.c.l.b16 %v837
      %v2056 = vunpack.c.h.b16 %v837
      %v2057 = vunpack.c.l.b16 %v838
      %v2058 = vunpack.c.h.b16 %v838
      %v2059 = vunpack.c.l.b16 %v839
      %v2060 = vunpack.c.h.b16 %v839
      %v2061 = vpack.c.b16 %v1999, %v1997
      %v2062 = vpack.c.b16 %v2000, %v1998
      %v2063 = vpack.c.b16 %v2003, %v2001
      %v2064 = vpack.c.b16 %v2004, %v2002
      %v2065 = vpack.c.b16 %v2007, %v2005
      %v2066 = vpack.c.b16 %v2008, %v2006
      %v2067 = vpack.c.b16 %v2011, %v2009
      %v2068 = vpack.c.b16 %v2012, %v2010
      %v2069 = vpack.c.b16 %v2015, %v2013
      %v2070 = vpack.c.b16 %v2016, %v2014
      %v2071 = vpack.c.b16 %v2019, %v2017
      %v2072 = vpack.c.b16 %v2020, %v2018
      %v2073 = vpack.c.b16 %v2023, %v2021
      %v2074 = vpack.c.b16 %v2024, %v2022
      %v2075 = vpack.c.b16 %v2027, %v2025
      %v2076 = vpack.c.b16 %v2028, %v2026
      %v2077 = vpack.c.b16 %v2031, %v2029
      %v2078 = vpack.c.b16 %v2032, %v2030
      %v2079 = vpack.c.b16 %v2035, %v2033
      %v2080 = vpack.c.b16 %v2036, %v2034
      %v2081 = vpack.c.b16 %v2039, %v2037
      %v2082 = vpack.c.b16 %v2040, %v2038
      %v2083 = vpack.c.b16 %v2043, %v2041
      %v2084 = vpack.c.b16 %v2044, %v2042
      %v2085 = vpack.c.b16 %v2047, %v2045
      %v2086 = vpack.c.b16 %v2048, %v2046
      %v2087 = vpack.c.b16 %v2051, %v2049
      %v2088 = vpack.c.b16 %v2052, %v2050
      %v2089 = vpack.c.b16 %v2055, %v2053
      %v2090 = vpack.c.b16 %v2056, %v2054
      %v2091 = vpack.c.b16 %v2059, %v2057
      %v2092 = vpack.c.b16 %v2060, %v2058
      %2125 = vmatprep.subr.bf16.mxu0 %v2076
      %2126 = vmatpush1.bf16.msra.mxu0 %v2075
      %2127 = vmatprep.subr.bf16.mxu0 %v2074
      %2128 = vmatpush1.bf16.msra.mxu0 %v2073
      %2129 = vmatprep.subr.bf16.mxu0 %v2072
      %2130 = vmatpush1.bf16.msra.mxu0 %v2071
      %2131 = vmatprep.subr.bf16.mxu0 %v2070
      %2132 = vmatpush1.bf16.msra.mxu0 %v2069
      %2133 = vmatprep.subr.bf16.mxu0 %v2068
      %2134 = vmatpush1.bf16.msra.mxu0 %v2067
      %2135 = vmatprep.subr.bf16.mxu0 %v2066
      %2136 = vmatpush1.bf16.msra.mxu0 %v2065
      %2137 = vmatprep.subr.bf16.mxu0 %v2064
      %2138 = vmatpush1.bf16.msra.mxu0 %v2063
      %2139 = vmatprep.subr.bf16.mxu0 %v2062
      %2140 = vmatpush1.bf16.msra.mxu0 %v2061
      %2141 = vmatprep.subr.bf16.mxu0 %v2092
      %2142 = vmatpush2.bf16.msra.mxu0 %v2091
      %2143 = vmatprep.subr.bf16.mxu0 %v2090
      %2144 = vmatpush2.bf16.msra.mxu0 %v2089
      %2145 = vmatprep.subr.bf16.mxu0 %v2088
      %2146 = vmatpush2.bf16.msra.mxu0 %v2087
      %2147 = vmatprep.subr.bf16.mxu0 %v2086
      %2148 = vmatpush2.bf16.msra.mxu0 %v2085
      %2149 = vmatprep.subr.bf16.mxu0 %v2084
      %2150 = vmatpush2.bf16.msra.mxu0 %v2083
      %2151 = vmatprep.subr.bf16.mxu0 %v2082
      %2152 = vmatpush2.bf16.msra.mxu0 %v2081
      %2153 = vmatprep.subr.bf16.mxu0 %v2080
      %2154 = vmatpush2.bf16.msra.mxu0 %v2079
      %2155 = vmatprep.subr.bf16.mxu0 %v2078
      %2156 = vmatpush2.bf16.msra.mxu0 %v2077
      %2157 = vmatprep.mubr.bf16.mxu0 %v1956
      %2158 = vmatmul.mubr.bf16.gmra.mxu0 %v1955
      %v2159 = vpop.f32.mrf.mxu0
      %v2160 = vadd.f32 %v1960, %v2159
      %v2161 = vpop.f32.mrf.mxu0
      %v2162 = vadd.f32 %v1964, %v2161
      %v2163 = vpop.f32.mrf.mxu0
      %v2164 = vadd.f32 %v1960, %v2163
      %v2165 = vpop.f32.mrf.mxu0
      %v2166 = vadd.f32 %v1964, %v2165
      %2167 = vdwg.mxu0
      %v2168 = vadd.f32 %v2160, %v707
      %v2169 = vadd.f32 %v2162, %v708
      %v2170 = vadd.f32 %v2164, %v709
      %v2171 = vadd.f32 %v2166, %v710
      %v2172 = vadd.f32 %v2168, %v2169
      %2173 = vadd.xlane.f32.xlu0 %v2172
      %v2174 = vpop.xlane.xlu0 %2173
      %v2175 = vadd.f32 %v2170, %v2171
      %2176 = vadd.xlane.f32.xlu0 %v2175
      %v2177 = vpop.xlane.xlu0 %2176
      %v2178 = vrcp.pop 256.0
      %v2179 = vmul.f32 %v2174, %v2178
      %v2180 = vmul.f32 %v2177, %v2178
      %v2181 = vsub.f32 %v2168, %v2179
      %v2182 = vsub.f32 %v2169, %v2179
      %v2183 = vsub.f32 %v2170, %v2180
      %v2184 = vsub.f32 %v2171, %v2180
      %v2185 = vmul.f32 %v2181, %v2181
      %v2186 = vmul.f32 %v2182, %v2182
      %v2187 = vmul.f32 %v2183, %v2183
      %v2188 = vmul.f32 %v2184, %v2184
      %v2189 = vadd.f32 %v2185, %v2186
      %2190 = vadd.xlane.f32.xlu0 %v2189
      %v2191 = vpop.xlane.xlu0 %2190
      %v2192 = vadd.f32 %v2187, %v2188
      %2193 = vadd.xlane.f32.xlu0 %v2192
      %v2194 = vpop.xlane.xlu0 %2193
      %v2195 = vmul.f32 %v2191, %v2178
      %v2196 = vmul.f32 %v2194, %v2178
      %v2197 = vadd.f32 %v2195, 1e-05
      %v2198 = vadd.f32 %v2196, 1e-05
      %v2199 = vrsqrt.pop %v2197
      %v2200 = vrsqrt.pop %v2198
      %v2201 = vmul.f32 %v2181, %v2199
      %v2202 = vmul.f32 %v2182, %v2199
      %v2203 = vmul.f32 %v2183, %v2200
      %v2204 = vmul.f32 %v2184, %v2200
      %v2205 = vlaneseq
      %v2206 = vshrl.u32 %v2205, 7
      %v2207 = vsub.s32 1, %v2206
      %v2208 = vrot.slane %v840, %v2207
      %v2209 = vlaneseq
      %v2210 = vshrl.u32 %v2209, 7
      %v2211 = vsub.s32 1, %v2210
      %v2212 = vrot.slane %v841, %v2211
      %v2213 = vmul.f32 %v2201, %v2208
      %v2214 = vmul.f32 %v2202, %v2212
      %v2215 = vmul.f32 %v2203, %v2208
      %v2216 = vmul.f32 %v2204, %v2212
      %v2217 = vlaneseq
      %v2218 = vshrl.u32 %v2217, 7
      %v2219 = vsub.s32 2, %v2218
      %v2220 = vrot.slane %v840, %v2219
      %v2221 = vlaneseq
      %v2222 = vshrl.u32 %v2221, 7
      %v2223 = vsub.s32 2, %v2222
      %v2224 = vrot.slane %v841, %v2223
      %v2225 = vadd.f32 %v2213, %v2220
      %v2226 = vadd.f32 %v2214, %v2224
      %v2227 = vadd.f32 %v2215, %v2220
      %v2228 = vadd.f32 %v2216, %v2224
      %v2229 = vpack.c.bf16 %v2227, %v2225
      %v2230 = vpack.c.bf16 %v2228, %v2226
      %v2232 = vlaneseq
      %v2233 = vshrl.u32 %v2232, 7
      %v2234 = vsub.s32 0, %v2233
      %v2235 = vrot.slane %v874, %v2234
      %v2236 = vlaneseq
      %v2237 = vshrl.u32 %v2236, 7
      %v2238 = vsub.s32 1, %v2237
      %v2239 = vrot.slane %v874, %v2238
      %v2274 = vunpack.c.l.b16 %v842
      %v2275 = vunpack.c.h.b16 %v842
      %v2276 = vunpack.c.l.b16 %v843
      %v2277 = vunpack.c.h.b16 %v843
      %v2278 = vunpack.c.l.b16 %v844
      %v2279 = vunpack.c.h.b16 %v844
      %v2280 = vunpack.c.l.b16 %v845
      %v2281 = vunpack.c.h.b16 %v845
      %v2282 = vunpack.c.l.b16 %v846
      %v2283 = vunpack.c.h.b16 %v846
      %v2284 = vunpack.c.l.b16 %v847
      %v2285 = vunpack.c.h.b16 %v847
      %v2286 = vunpack.c.l.b16 %v848
      %v2287 = vunpack.c.h.b16 %v848
      %v2288 = vunpack.c.l.b16 %v849
      %v2289 = vunpack.c.h.b16 %v849
      %v2290 = vunpack.c.l.b16 %v850
      %v2291 = vunpack.c.h.b16 %v850
      %v2292 = vunpack.c.l.b16 %v851
      %v2293 = vunpack.c.h.b16 %v851
      %v2294 = vunpack.c.l.b16 %v852
      %v2295 = vunpack.c.h.b16 %v852
      %v2296 = vunpack.c.l.b16 %v853
      %v2297 = vunpack.c.h.b16 %v853
      %v2298 = vunpack.c.l.b16 %v854
      %v2299 = vunpack.c.h.b16 %v854
      %v2300 = vunpack.c.l.b16 %v855
      %v2301 = vunpack.c.h.b16 %v855
      %v2302 = vunpack.c.l.b16 %v856
      %v2303 = vunpack.c.h.b16 %v856
      %v2304 = vunpack.c.l.b16 %v857
      %v2305 = vunpack.c.h.b16 %v857
      %v2306 = vunpack.c.l.b16 %v858
      %v2307 = vunpack.c.h.b16 %v858
      %v2308 = vunpack.c.l.b16 %v859
      %v2309 = vunpack.c.h.b16 %v859
      %v2310 = vunpack.c.l.b16 %v860
      %v2311 = vunpack.c.h.b16 %v860
      %v2312 = vunpack.c.l.b16 %v861
      %v2313 = vunpack.c.h.b16 %v861
      %v2314 = vunpack.c.l.b16 %v862
      %v2315 = vunpack.c.h.b16 %v862
      %v2316 = vunpack.c.l.b16 %v863
      %v2317 = vunpack.c.h.b16 %v863
      %v2318 = vunpack.c.l.b16 %v864
      %v2319 = vunpack.c.h.b16 %v864
      %v2320 = vunpack.c.l.b16 %v865
      %v2321 = vunpack.c.h.b16 %v865
      %v2322 = vunpack.c.l.b16 %v866
      %v2323 = vunpack.c.h.b16 %v866
      %v2324 = vunpack.c.l.b16 %v867
      %v2325 = vunpack.c.h.b16 %v867
      %v2326 = vunpack.c.l.b16 %v868
      %v2327 = vunpack.c.h.b16 %v868
      %v2328 = vunpack.c.l.b16 %v869
      %v2329 = vunpack.c.h.b16 %v869
      %v2330 = vunpack.c.l.b16 %v870
      %v2331 = vunpack.c.h.b16 %v870
      %v2332 = vunpack.c.l.b16 %v871
      %v2333 = vunpack.c.h.b16 %v871
      %v2334 = vunpack.c.l.b16 %v872
      %v2335 = vunpack.c.h.b16 %v872
      %v2336 = vunpack.c.l.b16 %v873
      %v2337 = vunpack.c.h.b16 %v873
      %v2338 = vpack.c.b16 %v2276, %v2274
      %v2339 = vpack.c.b16 %v2277, %v2275
      %v2340 = vpack.c.b16 %v2280, %v2278
      %v2341 = vpack.c.b16 %v2281, %v2279
      %v2342 = vpack.c.b16 %v2284, %v2282
      %v2343 = vpack.c.b16 %v2285, %v2283
      %v2344 = vpack.c.b16 %v2288, %v2286
      %v2345 = vpack.c.b16 %v2289, %v2287
      %v2346 = vpack.c.b16 %v2292, %v2290
      %v2347 = vpack.c.b16 %v2293, %v2291
      %v2348 = vpack.c.b16 %v2296, %v2294
      %v2349 = vpack.c.b16 %v2297, %v2295
      %v2350 = vpack.c.b16 %v2300, %v2298
      %v2351 = vpack.c.b16 %v2301, %v2299
      %v2352 = vpack.c.b16 %v2304, %v2302
      %v2353 = vpack.c.b16 %v2305, %v2303
      %v2354 = vpack.c.b16 %v2308, %v2306
      %v2355 = vpack.c.b16 %v2309, %v2307
      %v2356 = vpack.c.b16 %v2312, %v2310
      %v2357 = vpack.c.b16 %v2313, %v2311
      %v2358 = vpack.c.b16 %v2316, %v2314
      %v2359 = vpack.c.b16 %v2317, %v2315
      %v2360 = vpack.c.b16 %v2320, %v2318
      %v2361 = vpack.c.b16 %v2321, %v2319
      %v2362 = vpack.c.b16 %v2324, %v2322
      %v2363 = vpack.c.b16 %v2325, %v2323
      %v2364 = vpack.c.b16 %v2328, %v2326
      %v2365 = vpack.c.b16 %v2329, %v2327
      %v2366 = vpack.c.b16 %v2332, %v2330
      %v2367 = vpack.c.b16 %v2333, %v2331
      %v2368 = vpack.c.b16 %v2336, %v2334
      %v2369 = vpack.c.b16 %v2337, %v2335
      %2402 = vmatprep.subr.bf16.mxu0 %v2353
      %2403 = vmatpush1.bf16.msra.mxu0 %v2352
      %2404 = vmatprep.subr.bf16.mxu0 %v2351
      %2405 = vmatpush1.bf16.msra.mxu0 %v2350
      %2406 = vmatprep.subr.bf16.mxu0 %v2349
      %2407 = vmatpush1.bf16.msra.mxu0 %v2348
      %2408 = vmatprep.subr.bf16.mxu0 %v2347
      %2409 = vmatpush1.bf16.msra.mxu0 %v2346
      %2410 = vmatprep.subr.bf16.mxu0 %v2345
      %2411 = vmatpush1.bf16.msra.mxu0 %v2344
      %2412 = vmatprep.subr.bf16.mxu0 %v2343
      %2413 = vmatpush1.bf16.msra.mxu0 %v2342
      %2414 = vmatprep.subr.bf16.mxu0 %v2341
      %2415 = vmatpush1.bf16.msra.mxu0 %v2340
      %2416 = vmatprep.subr.bf16.mxu0 %v2339
      %2417 = vmatpush1.bf16.msra.mxu0 %v2338
      %2418 = vmatprep.subr.bf16.mxu0 %v2369
      %2419 = vmatpush2.bf16.msra.mxu0 %v2368
      %2420 = vmatprep.subr.bf16.mxu0 %v2367
      %2421 = vmatpush2.bf16.msra.mxu0 %v2366
      %2422 = vmatprep.subr.bf16.mxu0 %v2365
      %2423 = vmatpush2.bf16.msra.mxu0 %v2364
      %2424 = vmatprep.subr.bf16.mxu0 %v2363
      %2425 = vmatpush2.bf16.msra.mxu0 %v2362
      %2426 = vmatprep.subr.bf16.mxu0 %v2361
      %2427 = vmatpush2.bf16.msra.mxu0 %v2360
      %2428 = vmatprep.subr.bf16.mxu0 %v2359
      %2429 = vmatpush2.bf16.msra.mxu0 %v2358
      %2430 = vmatprep.subr.bf16.mxu0 %v2357
      %2431 = vmatpush2.bf16.msra.mxu0 %v2356
      %2432 = vmatprep.subr.bf16.mxu0 %v2355
      %2433 = vmatpush2.bf16.msra.mxu0 %v2354
      %2434 = vmatprep.mubr.bf16.mxu0 %v2230
      %2435 = vmatmul.mubr.bf16.gmra.mxu0 %v2229
      %v2436 = vpop.f32.mrf.mxu0
      %v2437 = vadd.f32 %v2235, %v2436
      %v2438 = vpop.f32.mrf.mxu0
      %v2439 = vadd.f32 %v2239, %v2438
      %v2440 = vpop.f32.mrf.mxu0
      %v2441 = vadd.f32 %v2235, %v2440
      %v2442 = vpop.f32.mrf.mxu0
      %v2443 = vadd.f32 %v2239, %v2442
      %2444 = vdwg.mxu0
      %v2445 = vmax.f32 %v2437, 0.0
      %v2446 = vmax.f32 %v2439, 0.0
      %v2447 = vmax.f32 %v2441, 0.0
      %v2448 = vmax.f32 %v2443, 0.0
      %v2449 = vpack.c.bf16 %v2447, %v2445
      %v2450 = vpack.c.bf16 %v2448, %v2446
      %v2451 = vlaneseq
      %v2452 = vshrl.u32 %v2451, 7
      %v2453 = vsub.s32 3, %v2452
      %v2454 = vrot.slane %v840, %v2453
      %v2455 = vlaneseq
      %v2456 = vshrl.u32 %v2455, 7
      %v2457 = vsub.s32 3, %v2456
      %v2458 = vrot.slane %v841, %v2457
      %v2491 = vunpack.c.l.b16 %v875
      %v2492 = vunpack.c.h.b16 %v875
      %v2493 = vunpack.c.l.b16 %v876
      %v2494 = vunpack.c.h.b16 %v876
      %v2495 = vunpack.c.l.b16 %v877
      %v2496 = vunpack.c.h.b16 %v877
      %v2497 = vunpack.c.l.b16 %v878
      %v2498 = vunpack.c.h.b16 %v878
      %v2499 = vunpack.c.l.b16 %v879
      %v2500 = vunpack.c.h.b16 %v879
      %v2501 = vunpack.c.l.b16 %v880
      %v2502 = vunpack.c.h.b16 %v880
      %v2503 = vunpack.c.l.b16 %v881
      %v2504 = vunpack.c.h.b16 %v881
      %v2505 = vunpack.c.l.b16 %v882
      %v2506 = vunpack.c.h.b16 %v882
      %v2507 = vunpack.c.l.b16 %v883
      %v2508 = vunpack.c.h.b16 %v883
      %v2509 = vunpack.c.l.b16 %v884
      %v2510 = vunpack.c.h.b16 %v884
      %v2511 = vunpack.c.l.b16 %v885
      %v2512 = vunpack.c.h.b16 %v885
      %v2513 = vunpack.c.l.b16 %v886
      %v2514 = vunpack.c.h.b16 %v886
      %v2515 = vunpack.c.l.b16 %v887
      %v2516 = vunpack.c.h.b16 %v887
      %v2517 = vunpack.c.l.b16 %v888
      %v2518 = vunpack.c.h.b16 %v888
      %v2519 = vunpack.c.l.b16 %v889
      %v2520 = vunpack.c.h.b16 %v889
      %v2521 = vunpack.c.l.b16 %v890
      %v2522 = vunpack.c.h.b16 %v890
      %v2523 = vunpack.c.l.b16 %v891
      %v2524 = vunpack.c.h.b16 %v891
      %v2525 = vunpack.c.l.b16 %v892
      %v2526 = vunpack.c.h.b16 %v892
      %v2527 = vunpack.c.l.b16 %v893
      %v2528 = vunpack.c.h.b16 %v893
      %v2529 = vunpack.c.l.b16 %v894
      %v2530 = vunpack.c.h.b16 %v894
      %v2531 = vunpack.c.l.b16 %v895
      %v2532 = vunpack.c.h.b16 %v895
      %v2533 = vunpack.c.l.b16 %v896
      %v2534 = vunpack.c.h.b16 %v896
      %v2535 = vunpack.c.l.b16 %v897
      %v2536 = vunpack.c.h.b16 %v897
      %v2537 = vunpack.c.l.b16 %v898
      %v2538 = vunpack.c.h.b16 %v898
      %v2539 = vunpack.c.l.b16 %v899
      %v2540 = vunpack.c.h.b16 %v899
      %v2541 = vunpack.c.l.b16 %v900
      %v2542 = vunpack.c.h.b16 %v900
      %v2543 = vunpack.c.l.b16 %v901
      %v2544 = vunpack.c.h.b16 %v901
      %v2545 = vunpack.c.l.b16 %v902
      %v2546 = vunpack.c.h.b16 %v902
      %v2547 = vunpack.c.l.b16 %v903
      %v2548 = vunpack.c.h.b16 %v903
      %v2549 = vunpack.c.l.b16 %v904
      %v2550 = vunpack.c.h.b16 %v904
      %v2551 = vunpack.c.l.b16 %v905
      %v2552 = vunpack.c.h.b16 %v905
      %v2553 = vunpack.c.l.b16 %v906
      %v2554 = vunpack.c.h.b16 %v906
      %v2555 = vpack.c.b16 %v2493, %v2491
      %v2556 = vpack.c.b16 %v2494, %v2492
      %v2557 = vpack.c.b16 %v2497, %v2495
      %v2558 = vpack.c.b16 %v2498, %v2496
      %v2559 = vpack.c.b16 %v2501, %v2499
      %v2560 = vpack.c.b16 %v2502, %v2500
      %v2561 = vpack.c.b16 %v2505, %v2503
      %v2562 = vpack.c.b16 %v2506, %v2504
      %v2563 = vpack.c.b16 %v2509, %v2507
      %v2564 = vpack.c.b16 %v2510, %v2508
      %v2565 = vpack.c.b16 %v2513, %v2511
      %v2566 = vpack.c.b16 %v2514, %v2512
      %v2567 = vpack.c.b16 %v2517, %v2515
      %v2568 = vpack.c.b16 %v2518, %v2516
      %v2569 = vpack.c.b16 %v2521, %v2519
      %v2570 = vpack.c.b16 %v2522, %v2520
      %v2571 = vpack.c.b16 %v2525, %v2523
      %v2572 = vpack.c.b16 %v2526, %v2524
      %v2573 = vpack.c.b16 %v2529, %v2527
      %v2574 = vpack.c.b16 %v2530, %v2528
      %v2575 = vpack.c.b16 %v2533, %v2531
      %v2576 = vpack.c.b16 %v2534, %v2532
      %v2577 = vpack.c.b16 %v2537, %v2535
      %v2578 = vpack.c.b16 %v2538, %v2536
      %v2579 = vpack.c.b16 %v2541, %v2539
      %v2580 = vpack.c.b16 %v2542, %v2540
      %v2581 = vpack.c.b16 %v2545, %v2543
      %v2582 = vpack.c.b16 %v2546, %v2544
      %v2583 = vpack.c.b16 %v2549, %v2547
      %v2584 = vpack.c.b16 %v2550, %v2548
      %v2585 = vpack.c.b16 %v2553, %v2551
      %v2586 = vpack.c.b16 %v2554, %v2552
      %2619 = vmatprep.subr.bf16.mxu0 %v2570
      %2620 = vmatpush1.bf16.msra.mxu0 %v2569
      %2621 = vmatprep.subr.bf16.mxu0 %v2568
      %2622 = vmatpush1.bf16.msra.mxu0 %v2567
      %2623 = vmatprep.subr.bf16.mxu0 %v2566
      %2624 = vmatpush1.bf16.msra.mxu0 %v2565
      %2625 = vmatprep.subr.bf16.mxu0 %v2564
      %2626 = vmatpush1.bf16.msra.mxu0 %v2563
      %2627 = vmatprep.subr.bf16.mxu0 %v2562
      %2628 = vmatpush1.bf16.msra.mxu0 %v2561
      %2629 = vmatprep.subr.bf16.mxu0 %v2560
      %2630 = vmatpush1.bf16.msra.mxu0 %v2559
      %2631 = vmatprep.subr.bf16.mxu0 %v2558
      %2632 = vmatpush1.bf16.msra.mxu0 %v2557
      %2633 = vmatprep.subr.bf16.mxu0 %v2556
      %2634 = vmatpush1.bf16.msra.mxu0 %v2555
      %2635 = vmatprep.subr.bf16.mxu0 %v2586
      %2636 = vmatpush2.bf16.msra.mxu0 %v2585
      %2637 = vmatprep.subr.bf16.mxu0 %v2584
      %2638 = vmatpush2.bf16.msra.mxu0 %v2583
      %2639 = vmatprep.subr.bf16.mxu0 %v2582
      %2640 = vmatpush2.bf16.msra.mxu0 %v2581
      %2641 = vmatprep.subr.bf16.mxu0 %v2580
      %2642 = vmatpush2.bf16.msra.mxu0 %v2579
      %2643 = vmatprep.subr.bf16.mxu0 %v2578
      %2644 = vmatpush2.bf16.msra.mxu0 %v2577
      %2645 = vmatprep.subr.bf16.mxu0 %v2576
      %2646 = vmatpush2.bf16.msra.mxu0 %v2575
      %2647 = vmatprep.subr.bf16.mxu0 %v2574
      %2648 = vmatpush2.bf16.msra.mxu0 %v2573
      %2649 = vmatprep.subr.bf16.mxu0 %v2572
      %2650 = vmatpush2.bf16.msra.mxu0 %v2571
      %2651 = vmatprep.mubr.bf16.mxu0 %v2450
      %2652 = vmatmul.mubr.bf16.gmra.mxu0 %v2449
      %v2653 = vpop.f32.mrf.mxu0
      %v2654 = vadd.f32 %v2454, %v2653
      %v2655 = vpop.f32.mrf.mxu0
      %v2656 = vadd.f32 %v2458, %v2655
      %v2657 = vpop.f32.mrf.mxu0
      %v2658 = vadd.f32 %v2454, %v2657
      %v2659 = vpop.f32.mrf.mxu0
      %v2660 = vadd.f32 %v2458, %v2659
      %2661 = vdwg.mxu0
      %v2662 = vadd.f32 %v2654, %v2225
      %v2663 = vadd.f32 %v2656, %v2226
      %v2664 = vadd.f32 %v2658, %v2227
      %v2665 = vadd.f32 %v2660, %v2228
      %v2666 = vadd.f32 %v2662, %v2663
      %2667 = vadd.xlane.f32.xlu0 %v2666
      %v2668 = vpop.xlane.xlu0 %2667
      %v2669 = vadd.f32 %v2664, %v2665
      %2670 = vadd.xlane.f32.xlu0 %v2669
      %v2671 = vpop.xlane.xlu0 %2670
      %v2672 = vmul.f32 %v2668, %v2178
      %v2673 = vmul.f32 %v2671, %v2178
      %v2674 = vsub.f32 %v2662, %v2672
      %v2675 = vsub.f32 %v2663, %v2672
      %v2676 = vsub.f32 %v2664, %v2673
      %v2677 = vsub.f32 %v2665, %v2673
      %v2678 = vmul.f32 %v2674, %v2674
      %v2679 = vmul.f32 %v2675, %v2675
      %v2680 = vmul.f32 %v2676, %v2676
      %v2681 = vmul.f32 %v2677, %v2677
      %v2682 = vadd.f32 %v2678, %v2679
      %2683 = vadd.xlane.f32.xlu0 %v2682
      %v2684 = vpop.xlane.xlu0 %2683
      %v2685 = vadd.f32 %v2680, %v2681
      %2686 = vadd.xlane.f32.xlu0 %v2685
      %v2687 = vpop.xlane.xlu0 %2686
      %v2688 = vmul.f32 %v2684, %v2178
      %v2689 = vmul.f32 %v2687, %v2178
      %v2690 = vadd.f32 %v2688, 1e-05
      %v2691 = vadd.f32 %v2689, 1e-05
      %v2692 = vrsqrt.pop %v2690
      %v2693 = vrsqrt.pop %v2691
      %v2694 = vmul.f32 %v2674, %v2692
      %v2695 = vmul.f32 %v2675, %v2692
      %v2696 = vmul.f32 %v2676, %v2693
      %v2697 = vmul.f32 %v2677, %v2693
      %v2698 = vlaneseq
      %v2699 = vshrl.u32 %v2698, 7
      %v2700 = vsub.s32 4, %v2699
      %v2701 = vrot.slane %v840, %v2700
      %v2702 = vlaneseq
      %v2703 = vshrl.u32 %v2702, 7
      %v2704 = vsub.s32 4, %v2703
      %v2705 = vrot.slane %v841, %v2704
      %v2706 = vmul.f32 %v2694, %v2701
      %v2707 = vmul.f32 %v2695, %v2705
      %v2708 = vmul.f32 %v2696, %v2701
      %v2709 = vmul.f32 %v2697, %v2705
      %v2710 = vlaneseq
      %v2711 = vshrl.u32 %v2710, 7
      %v2712 = vsub.s32 5, %v2711
      %v2713 = vrot.slane %v840, %v2712
      %v2714 = vlaneseq
      %v2715 = vshrl.u32 %v2714, 7
      %v2716 = vsub.s32 5, %v2715
      %v2717 = vrot.slane %v841, %v2716
      %v2718 = vadd.f32 %v2706, %v2713
      %v2719 = vadd.f32 %v2707, %v2717
      %v2720 = vadd.f32 %v2708, %v2713
      %v2721 = vadd.f32 %v2709, %v2717
      %2722 = vst [vmem:[#allocation2] sm:$0xff] %v2718
      %2723 = vst [vmem:[#allocation2 + $0x8] sm:$0xff] %v2719
      %2724 = vst [vmem:[#allocation2 + $0x10] sm:$0xff] %v2720
      %2725 = vst [vmem:[#allocation2 + $0x18] sm:$0xff] %v2721
      // Predicated region
      $region89: #{disc_forward.1} parent=79 // pred_check
        %p2726 = pneg %p687
      $region90: #{disc_forward.1} parent=79 // pred_check_branch
        %2728 = sbr.rel (%p2726) target = $region92
      $region91: #{disc_forward.1} parent=79 // pred_region
        %v2729 = vld [vmem:[%s11] sm:$0xff]
        %v2730 = vld [vmem:[%s11 + $0x8] sm:$0xff]
        %v2731 = vld [vmem:[%s11 + $0x10] sm:$0xff]
        %v2732 = vld [vmem:[%s11 + $0x18] sm:$0xff]
        %v2733 = vld [vmem:[%s11 + $0x20] sm:$0xff]
        %v2734 = vld [vmem:[%s11 + $0x28] sm:$0xff]
        %v2735 = vld [vmem:[%s11 + $0x30] sm:$0xff]
        %v2736 = vld [vmem:[%s11 + $0x38] sm:$0xff]
        %v2737 = vld [vmem:[%s11 + $0x40] sm:$0xff]
        %v2738 = vld [vmem:[%s11 + $0x48] sm:$0xff]
        %v2739 = vld [vmem:[%s11 + $0x50] sm:$0xff]
        %v2740 = vld [vmem:[%s11 + $0x58] sm:$0xff]
        %v2741 = vld [vmem:[%s11 + $0x60] sm:$0xff]
        %v2742 = vld [vmem:[%s11 + $0x68] sm:$0xff]
        %v2743 = vld [vmem:[%s11 + $0x70] sm:$0xff]
        %v2744 = vld [vmem:[%s11 + $0x78] sm:$0xff]
        %v2745 = vld [vmem:[%s11 + $0x80] sm:$0xff]
        %v2746 = vld [vmem:[%s11 + $0x88] sm:$0xff]
        %v2747 = vld [vmem:[%s11 + $0x90] sm:$0xff]
        %v2748 = vld [vmem:[%s11 + $0x98] sm:$0xff]
        %v2749 = vld [vmem:[%s11 + $0xa0] sm:$0xff]
        %v2750 = vld [vmem:[%s11 + $0xa8] sm:$0xff]
        %v2751 = vld [vmem:[%s11 + $0xb0] sm:$0xff]
        %v2752 = vld [vmem:[%s11 + $0xb8] sm:$0xff]
        %v2753 = vld [vmem:[%s11 + $0xc0] sm:$0xff]
        %v2754 = vld [vmem:[%s11 + $0xc8] sm:$0xff]
        %v2755 = vld [vmem:[%s11 + $0xd0] sm:$0xff]
        %v2756 = vld [vmem:[%s11 + $0xd8] sm:$0xff]
        %v2757 = vld [vmem:[%s11 + $0xe0] sm:$0xff]
        %v2758 = vld [vmem:[%s11 + $0xe8] sm:$0xff]
        %v2759 = vld [vmem:[%s11 + $0xf0] sm:$0xff]
        %v2760 = vld [vmem:[%s11 + $0xf8] sm:$0xff]
        %v2761 = vpack.c.bf16 %v2718, %v2718
        %v2762 = vpack.c.bf16 %v2719, %v2719
        %v2763 = vpack.c.bf16 %v2720, %v2720
        %v2764 = vpack.c.bf16 %v2721, %v2721
        %s2765 = scalar_lea.vmem %s11, 256
        %v2766 = vld [vmem:[%s2765] sm:$0xff]
        %v2767 = vld [vmem:[%s2765 + $0x8] sm:$0xff]
        %v2768 = vld [vmem:[%s2765 + $0x10] sm:$0xff]
        %v2769 = vld [vmem:[%s2765 + $0x18] sm:$0xff]
        %v2770 = vld [vmem:[%s2765 + $0x20] sm:$0xff]
        %v2771 = vld [vmem:[%s2765 + $0x28] sm:$0xff]
        %v2772 = vld [vmem:[%s2765 + $0x30] sm:$0xff]
        %v2773 = vld [vmem:[%s2765 + $0x38] sm:$0xff]
        %v2774 = vld [vmem:[%s2765 + $0x40] sm:$0xff]
        %v2775 = vld [vmem:[%s2765 + $0x48] sm:$0xff]
        %v2776 = vld [vmem:[%s2765 + $0x50] sm:$0xff]
        %v2777 = vld [vmem:[%s2765 + $0x58] sm:$0xff]
        %v2778 = vld [vmem:[%s2765 + $0x60] sm:$0xff]
        %v2779 = vld [vmem:[%s2765 + $0x68] sm:$0xff]
        %v2780 = vld [vmem:[%s2765 + $0x70] sm:$0xff]
        %v2781 = vld [vmem:[%s2765 + $0x78] sm:$0xff]
        %v2782 = vld [vmem:[%s2765 + $0x80] sm:$0xff]
        %v2783 = vld [vmem:[%s2765 + $0x88] sm:$0xff]
        %v2784 = vld [vmem:[%s2765 + $0x90] sm:$0xff]
        %v2785 = vld [vmem:[%s2765 + $0x98] sm:$0xff]
        %v2786 = vld [vmem:[%s2765 + $0xa0] sm:$0xff]
        %v2787 = vld [vmem:[%s2765 + $0xa8] sm:$0xff]
        %v2788 = vld [vmem:[%s2765 + $0xb0] sm:$0xff]
        %v2789 = vld [vmem:[%s2765 + $0xb8] sm:$0xff]
        %v2790 = vld [vmem:[%s2765 + $0xc0] sm:$0xff]
        %v2791 = vld [vmem:[%s2765 + $0xc8] sm:$0xff]
        %v2792 = vld [vmem:[%s2765 + $0xd0] sm:$0xff]
        %v2793 = vld [vmem:[%s2765 + $0xd8] sm:$0xff]
        %v2794 = vld [vmem:[%s2765 + $0xe0] sm:$0xff]
        %v2795 = vld [vmem:[%s2765 + $0xe8] sm:$0xff]
        %v2796 = vld [vmem:[%s2765 + $0xf0] sm:$0xff]
        %v2797 = vld [vmem:[%s2765 + $0xf8] sm:$0xff]
        %v2802 = vunpack.c.l.b16 %v2761
        %v2803 = vunpack.c.l.b16 %v2762
        %v2804 = vunpack.c.l.b16 %v2763
        %v2805 = vunpack.c.l.b16 %v2764
        %v2806 = vrot.slane %v2802, 1
        %vm2807 = vcmask 1041409
        %v2808 = vsel %vm2807, %v2804, %v2806
        %v2809 = vrot.slane %v2803, 1
        %v2810 = vsel %vm2807, %v2805, %v2809
        %v2811 = vpack.c.b16 %v2808, %v2808
        %v2812 = vpack.c.b16 %v2810, %v2810
        %v2847 = vunpack.c.l.b16 %v2766
        %v2848 = vunpack.c.h.b16 %v2766
        %v2849 = vunpack.c.l.b16 %v2767
        %v2850 = vunpack.c.h.b16 %v2767
        %v2851 = vunpack.c.l.b16 %v2768
        %v2852 = vunpack.c.h.b16 %v2768
        %v2853 = vunpack.c.l.b16 %v2769
        %v2854 = vunpack.c.h.b16 %v2769
        %v2855 = vunpack.c.l.b16 %v2770
        %v2856 = vunpack.c.h.b16 %v2770
        %v2857 = vunpack.c.l.b16 %v2771
        %v2858 = vunpack.c.h.b16 %v2771
        %v2859 = vunpack.c.l.b16 %v2772
        %v2860 = vunpack.c.h.b16 %v2772
        %v2861 = vunpack.c.l.b16 %v2773
        %v2862 = vunpack.c.h.b16 %v2773
        %v2863 = vunpack.c.l.b16 %v2774
        %v2864 = vunpack.c.h.b16 %v2774
        %v2865 = vunpack.c.l.b16 %v2775
        %v2866 = vunpack.c.h.b16 %v2775
        %v2867 = vunpack.c.l.b16 %v2776
        %v2868 = vunpack.c.h.b16 %v2776
        %v2869 = vunpack.c.l.b16 %v2777
        %v2870 = vunpack.c.h.b16 %v2777
        %v2871 = vunpack.c.l.b16 %v2778
        %v2872 = vunpack.c.h.b16 %v2778
        %v2873 = vunpack.c.l.b16 %v2779
        %v2874 = vunpack.c.h.b16 %v2779
        %v2875 = vunpack.c.l.b16 %v2780
        %v2876 = vunpack.c.h.b16 %v2780
        %v2877 = vunpack.c.l.b16 %v2781
        %v2878 = vunpack.c.h.b16 %v2781
        %v2879 = vunpack.c.l.b16 %v2782
        %v2880 = vunpack.c.h.b16 %v2782
        %v2881 = vunpack.c.l.b16 %v2783
        %v2882 = vunpack.c.h.b16 %v2783
        %v2883 = vunpack.c.l.b16 %v2784
        %v2884 = vunpack.c.h.b16 %v2784
        %v2885 = vunpack.c.l.b16 %v2785
        %v2886 = vunpack.c.h.b16 %v2785
        %v2887 = vunpack.c.l.b16 %v2786
        %v2888 = vunpack.c.h.b16 %v2786
        %v2889 = vunpack.c.l.b16 %v2787
        %v2890 = vunpack.c.h.b16 %v2787
        %v2891 = vunpack.c.l.b16 %v2788
        %v2892 = vunpack.c.h.b16 %v2788
        %v2893 = vunpack.c.l.b16 %v2789
        %v2894 = vunpack.c.h.b16 %v2789
        %v2895 = vunpack.c.l.b16 %v2790
        %v2896 = vunpack.c.h.b16 %v2790
        %v2897 = vunpack.c.l.b16 %v2791
        %v2898 = vunpack.c.h.b16 %v2791
        %v2899 = vunpack.c.l.b16 %v2792
        %v2900 = vunpack.c.h.b16 %v2792
        %v2901 = vunpack.c.l.b16 %v2793
        %v2902 = vunpack.c.h.b16 %v2793
        %v2903 = vunpack.c.l.b16 %v2794
        %v2904 = vunpack.c.h.b16 %v2794
        %v2905 = vunpack.c.l.b16 %v2795
        %v2906 = vunpack.c.h.b16 %v2795
        %v2907 = vunpack.c.l.b16 %v2796
        %v2908 = vunpack.c.h.b16 %v2796
        %v2909 = vunpack.c.l.b16 %v2797
        %v2910 = vunpack.c.h.b16 %v2797
        %v2911 = vpack.c.b16 %v2849, %v2847
        %v2912 = vpack.c.b16 %v2850, %v2848
        %v2913 = vpack.c.b16 %v2853, %v2851
        %v2914 = vpack.c.b16 %v2854, %v2852
        %v2915 = vpack.c.b16 %v2857, %v2855
        %v2916 = vpack.c.b16 %v2858, %v2856
        %v2917 = vpack.c.b16 %v2861, %v2859
        %v2918 = vpack.c.b16 %v2862, %v2860
        %v2919 = vpack.c.b16 %v2865, %v2863
        %v2920 = vpack.c.b16 %v2866, %v2864
        %v2921 = vpack.c.b16 %v2869, %v2867
        %v2922 = vpack.c.b16 %v2870, %v2868
        %v2923 = vpack.c.b16 %v2873, %v2871
        %v2924 = vpack.c.b16 %v2874, %v2872
        %v2925 = vpack.c.b16 %v2877, %v2875
        %v2926 = vpack.c.b16 %v2878, %v2876
        %v2927 = vpack.c.b16 %v2881, %v2879
        %v2928 = vpack.c.b16 %v2882, %v2880
        %v2929 = vpack.c.b16 %v2885, %v2883
        %v2930 = vpack.c.b16 %v2886, %v2884
        %v2931 = vpack.c.b16 %v2889, %v2887
        %v2932 = vpack.c.b16 %v2890, %v2888
        %v2933 = vpack.c.b16 %v2893, %v2891
        %v2934 = vpack.c.b16 %v2894, %v2892
        %v2935 = vpack.c.b16 %v2897, %v2895
        %v2936 = vpack.c.b16 %v2898, %v2896
        %v2937 = vpack.c.b16 %v2901, %v2899
        %v2938 = vpack.c.b16 %v2902, %v2900
        %v2939 = vpack.c.b16 %v2905, %v2903
        %v2940 = vpack.c.b16 %v2906, %v2904
        %v2941 = vpack.c.b16 %v2909, %v2907
        %v2942 = vpack.c.b16 %v2910, %v2908
        %2975 = vmatprep.subr.bf16.mxu0 %v2926
        %2976 = vmatpush1.bf16.msra.mxu0 %v2925
        %2977 = vmatprep.subr.bf16.mxu0 %v2924
        %2978 = vmatpush1.bf16.msra.mxu0 %v2923
        %2979 = vmatprep.subr.bf16.mxu0 %v2922
        %2980 = vmatpush1.bf16.msra.mxu0 %v2921
        %2981 = vmatprep.subr.bf16.mxu0 %v2920
        %2982 = vmatpush1.bf16.msra.mxu0 %v2919
        %2983 = vmatprep.subr.bf16.mxu0 %v2918
        %2984 = vmatpush1.bf16.msra.mxu0 %v2917
        %2985 = vmatprep.subr.bf16.mxu0 %v2916
        %2986 = vmatpush1.bf16.msra.mxu0 %v2915
        %2987 = vmatprep.subr.bf16.mxu0 %v2914
        %2988 = vmatpush1.bf16.msra.mxu0 %v2913
        %2989 = vmatprep.subr.bf16.mxu0 %v2912
        %2990 = vmatpush1.bf16.msra.mxu0 %v2911
        %2991 = vmatprep.subr.bf16.mxu0 %v2942
        %2992 = vmatpush2.bf16.msra.mxu0 %v2941
        %2993 = vmatprep.subr.bf16.mxu0 %v2940
        %2994 = vmatpush2.bf16.msra.mxu0 %v2939
        %2995 = vmatprep.subr.bf16.mxu0 %v2938
        %2996 = vmatpush2.bf16.msra.mxu0 %v2937
        %2997 = vmatprep.subr.bf16.mxu0 %v2936
        %2998 = vmatpush2.bf16.msra.mxu0 %v2935
        %2999 = vmatprep.subr.bf16.mxu0 %v2934
        %3000 = vmatpush2.bf16.msra.mxu0 %v2933
        %3001 = vmatprep.subr.bf16.mxu0 %v2932
        %3002 = vmatpush2.bf16.msra.mxu0 %v2931
        %3003 = vmatprep.subr.bf16.mxu0 %v2930
        %3004 = vmatpush2.bf16.msra.mxu0 %v2929
        %3005 = vmatprep.subr.bf16.mxu0 %v2928
        %3006 = vmatpush2.bf16.msra.mxu0 %v2927
        %3007 = vmatprep.mubr.bf16.mxu0 %v2812
        %3008 = vmatmul.mubr.bf16.gmra.mxu0 %v2811
        %v3009 = vpop.f32.mrf.mxu0
        %v3010 = vadd.f32 0.0, %v3009
        %v3011 = vpop.f32.mrf.mxu0
        %v3012 = vadd.f32 0.0, %v3011
        %v3013 = vpop.f32.mrf.mxu0
        %v3014 = vpop.f32.mrf.mxu0
        %3015 = vdwg.mxu0
        %v3016 = vrot.slane %v2804, 7
        %v3017 = vsel %vm2807, %v3016, %v2802
        %v3018 = vrot.slane %v2805, 7
        %v3019 = vsel %vm2807, %v3018, %v2803
        %v3020 = vpack.c.b16 %v3017, %v3017
        %v3021 = vpack.c.b16 %v3019, %v3019
        %v3056 = vunpack.c.l.b16 %v2729
        %v3057 = vunpack.c.h.b16 %v2729
        %v3058 = vunpack.c.l.b16 %v2730
        %v3059 = vunpack.c.h.b16 %v2730
        %v3060 = vunpack.c.l.b16 %v2731
        %v3061 = vunpack.c.h.b16 %v2731
        %v3062 = vunpack.c.l.b16 %v2732
        %v3063 = vunpack.c.h.b16 %v2732
        %v3064 = vunpack.c.l.b16 %v2733
        %v3065 = vunpack.c.h.b16 %v2733
        %v3066 = vunpack.c.l.b16 %v2734
        %v3067 = vunpack.c.h.b16 %v2734
        %v3068 = vunpack.c.l.b16 %v2735
        %v3069 = vunpack.c.h.b16 %v2735
        %v3070 = vunpack.c.l.b16 %v2736
        %v3071 = vunpack.c.h.b16 %v2736
        %v3072 = vunpack.c.l.b16 %v2737
        %v3073 = vunpack.c.h.b16 %v2737
        %v3074 = vunpack.c.l.b16 %v2738
        %v3075 = vunpack.c.h.b16 %v2738
        %v3076 = vunpack.c.l.b16 %v2739
        %v3077 = vunpack.c.h.b16 %v2739
        %v3078 = vunpack.c.l.b16 %v2740
        %v3079 = vunpack.c.h.b16 %v2740
        %v3080 = vunpack.c.l.b16 %v2741
        %v3081 = vunpack.c.h.b16 %v2741
        %v3082 = vunpack.c.l.b16 %v2742
        %v3083 = vunpack.c.h.b16 %v2742
        %v3084 = vunpack.c.l.b16 %v2743
        %v3085 = vunpack.c.h.b16 %v2743
        %v3086 = vunpack.c.l.b16 %v2744
        %v3087 = vunpack.c.h.b16 %v2744
        %v3088 = vunpack.c.l.b16 %v2745
        %v3089 = vunpack.c.h.b16 %v2745
        %v3090 = vunpack.c.l.b16 %v2746
        %v3091 = vunpack.c.h.b16 %v2746
        %v3092 = vunpack.c.l.b16 %v2747
        %v3093 = vunpack.c.h.b16 %v2747
        %v3094 = vunpack.c.l.b16 %v2748
        %v3095 = vunpack.c.h.b16 %v2748
        %v3096 = vunpack.c.l.b16 %v2749
        %v3097 = vunpack.c.h.b16 %v2749
        %v3098 = vunpack.c.l.b16 %v2750
        %v3099 = vunpack.c.h.b16 %v2750
        %v3100 = vunpack.c.l.b16 %v2751
        %v3101 = vunpack.c.h.b16 %v2751
        %v3102 = vunpack.c.l.b16 %v2752
        %v3103 = vunpack.c.h.b16 %v2752
        %v3104 = vunpack.c.l.b16 %v2753
        %v3105 = vunpack.c.h.b16 %v2753
        %v3106 = vunpack.c.l.b16 %v2754
        %v3107 = vunpack.c.h.b16 %v2754
        %v3108 = vunpack.c.l.b16 %v2755
        %v3109 = vunpack.c.h.b16 %v2755
        %v3110 = vunpack.c.l.b16 %v2756
        %v3111 = vunpack.c.h.b16 %v2756
        %v3112 = vunpack.c.l.b16 %v2757
        %v3113 = vunpack.c.h.b16 %v2757
        %v3114 = vunpack.c.l.b16 %v2758
        %v3115 = vunpack.c.h.b16 %v2758
        %v3116 = vunpack.c.l.b16 %v2759
        %v3117 = vunpack.c.h.b16 %v2759
        %v3118 = vunpack.c.l.b16 %v2760
        %v3119 = vunpack.c.h.b16 %v2760
        %v3120 = vpack.c.b16 %v3058, %v3056
        %v3121 = vpack.c.b16 %v3059, %v3057
        %v3122 = vpack.c.b16 %v3062, %v3060
        %v3123 = vpack.c.b16 %v3063, %v3061
        %v3124 = vpack.c.b16 %v3066, %v3064
        %v3125 = vpack.c.b16 %v3067, %v3065
        %v3126 = vpack.c.b16 %v3070, %v3068
        %v3127 = vpack.c.b16 %v3071, %v3069
        %v3128 = vpack.c.b16 %v3074, %v3072
        %v3129 = vpack.c.b16 %v3075, %v3073
        %v3130 = vpack.c.b16 %v3078, %v3076
        %v3131 = vpack.c.b16 %v3079, %v3077
        %v3132 = vpack.c.b16 %v3082, %v3080
        %v3133 = vpack.c.b16 %v3083, %v3081
        %v3134 = vpack.c.b16 %v3086, %v3084
        %v3135 = vpack.c.b16 %v3087, %v3085
        %v3136 = vpack.c.b16 %v3090, %v3088
        %v3137 = vpack.c.b16 %v3091, %v3089
        %v3138 = vpack.c.b16 %v3094, %v3092
        %v3139 = vpack.c.b16 %v3095, %v3093
        %v3140 = vpack.c.b16 %v3098, %v3096
        %v3141 = vpack.c.b16 %v3099, %v3097
        %v3142 = vpack.c.b16 %v3102, %v3100
        %v3143 = vpack.c.b16 %v3103, %v3101
        %v3144 = vpack.c.b16 %v3106, %v3104
        %v3145 = vpack.c.b16 %v3107, %v3105
        %v3146 = vpack.c.b16 %v3110, %v3108
        %v3147 = vpack.c.b16 %v3111, %v3109
        %v3148 = vpack.c.b16 %v3114, %v3112
        %v3149 = vpack.c.b16 %v3115, %v3113
        %v3150 = vpack.c.b16 %v3118, %v3116
        %v3151 = vpack.c.b16 %v3119, %v3117
        %3184 = vmatprep.subr.bf16.mxu0 %v3135
        %3185 = vmatpush1.bf16.msra.mxu0 %v3134
        %3186 = vmatprep.subr.bf16.mxu0 %v3133
        %3187 = vmatpush1.bf16.msra.mxu0 %v3132
        %3188 = vmatprep.subr.bf16.mxu0 %v3131
        %3189 = vmatpush1.bf16.msra.mxu0 %v3130
        %3190 = vmatprep.subr.bf16.mxu0 %v3129
        %3191 = vmatpush1.bf16.msra.mxu0 %v3128
        %3192 = vmatprep.subr.bf16.mxu0 %v3127
        %3193 = vmatpush1.bf16.msra.mxu0 %v3126
        %3194 = vmatprep.subr.bf16.mxu0 %v3125
        %3195 = vmatpush1.bf16.msra.mxu0 %v3124
        %3196 = vmatprep.subr.bf16.mxu0 %v3123
        %3197 = vmatpush1.bf16.msra.mxu0 %v3122
        %3198 = vmatprep.subr.bf16.mxu0 %v3121
        %3199 = vmatpush1.bf16.msra.mxu0 %v3120
        %3200 = vmatprep.subr.bf16.mxu0 %v3151
        %3201 = vmatpush2.bf16.msra.mxu0 %v3150
        %3202 = vmatprep.subr.bf16.mxu0 %v3149
        %3203 = vmatpush2.bf16.msra.mxu0 %v3148
        %3204 = vmatprep.subr.bf16.mxu0 %v3147
        %3205 = vmatpush2.bf16.msra.mxu0 %v3146
        %3206 = vmatprep.subr.bf16.mxu0 %v3145
        %3207 = vmatpush2.bf16.msra.mxu0 %v3144
        %3208 = vmatprep.subr.bf16.mxu0 %v3143
        %3209 = vmatpush2.bf16.msra.mxu0 %v3142
        %3210 = vmatprep.subr.bf16.mxu0 %v3141
        %3211 = vmatpush2.bf16.msra.mxu0 %v3140
        %3212 = vmatprep.subr.bf16.mxu0 %v3139
        %3213 = vmatpush2.bf16.msra.mxu0 %v3138
        %3214 = vmatprep.subr.bf16.mxu0 %v3137
        %3215 = vmatpush2.bf16.msra.mxu0 %v3136
        %3216 = vmatprep.mubr.bf16.mxu0 %v3021
        %3217 = vmatmul.mubr.bf16.gmra.mxu0 %v3020
        %v3218 = vpop.f32.mrf.mxu0
        %v3219 = vadd.f32 %v3010, %v3218
        %v3220 = vpop.f32.mrf.mxu0
        %v3221 = vadd.f32 %v3012, %v3220
        %v3222 = vpop.f32.mrf.mxu0
        %v3223 = vpop.f32.mrf.mxu0
        %3224 = vdwg.mxu0
        %s3225 = scalar_lea.vmem %s11, 512
        %v3226 = vld [vmem:[%s3225] sm:$0xff]
        %v3227 = vld [vmem:[%s3225 + $0x8] sm:$0xff]
        %v3228 = vld [vmem:[%s3225 + $0x10] sm:$0xff]
        %v3229 = vld [vmem:[%s3225 + $0x18] sm:$0xff]
        %v3230 = vld [vmem:[%s3225 + $0x20] sm:$0xff]
        %v3231 = vld [vmem:[%s3225 + $0x28] sm:$0xff]
        %v3232 = vld [vmem:[%s3225 + $0x30] sm:$0xff]
        %v3233 = vld [vmem:[%s3225 + $0x38] sm:$0xff]
        %v3234 = vld [vmem:[%s3225 + $0x40] sm:$0xff]
        %v3235 = vld [vmem:[%s3225 + $0x48] sm:$0xff]
        %v3236 = vld [vmem:[%s3225 + $0x50] sm:$0xff]
        %v3237 = vld [vmem:[%s3225 + $0x58] sm:$0xff]
        %v3238 = vld [vmem:[%s3225 + $0x60] sm:$0xff]
        %v3239 = vld [vmem:[%s3225 + $0x68] sm:$0xff]
        %v3240 = vld [vmem:[%s3225 + $0x70] sm:$0xff]
        %v3241 = vld [vmem:[%s3225 + $0x78] sm:$0xff]
        %v3242 = vld [vmem:[%s3225 + $0x80] sm:$0xff]
        %v3243 = vld [vmem:[%s3225 + $0x88] sm:$0xff]
        %v3244 = vld [vmem:[%s3225 + $0x90] sm:$0xff]
        %v3245 = vld [vmem:[%s3225 + $0x98] sm:$0xff]
        %v3246 = vld [vmem:[%s3225 + $0xa0] sm:$0xff]
        %v3247 = vld [vmem:[%s3225 + $0xa8] sm:$0xff]
        %v3248 = vld [vmem:[%s3225 + $0xb0] sm:$0xff]
        %v3249 = vld [vmem:[%s3225 + $0xb8] sm:$0xff]
        %v3250 = vld [vmem:[%s3225 + $0xc0] sm:$0xff]
        %v3251 = vld [vmem:[%s3225 + $0xc8] sm:$0xff]
        %v3252 = vld [vmem:[%s3225 + $0xd0] sm:$0xff]
        %v3253 = vld [vmem:[%s3225 + $0xd8] sm:$0xff]
        %v3254 = vld [vmem:[%s3225 + $0xe0] sm:$0xff]
        %v3255 = vld [vmem:[%s3225 + $0xe8] sm:$0xff]
        %v3256 = vld [vmem:[%s3225 + $0xf0] sm:$0xff]
        %v3257 = vld [vmem:[%s3225 + $0xf8] sm:$0xff]
        %v3258 = vrot.slane %v2802, 2
        %v3259 = vrot.slane %v2804, 1
        %v3260 = vsel %vm2807, %v3259, %v3258
        %v3261 = vrot.slane %v2803, 2
        %v3262 = vrot.slane %v2805, 1
        %v3263 = vsel %vm2807, %v3262, %v3261
        %v3264 = vpack.c.b16 %v3260, %v3260
        %v3265 = vpack.c.b16 %v3263, %v3263
        %v3300 = vunpack.c.l.b16 %v3226
        %v3301 = vunpack.c.h.b16 %v3226
        %v3302 = vunpack.c.l.b16 %v3227
        %v3303 = vunpack.c.h.b16 %v3227
        %v3304 = vunpack.c.l.b16 %v3228
        %v3305 = vunpack.c.h.b16 %v3228
        %v3306 = vunpack.c.l.b16 %v3229
        %v3307 = vunpack.c.h.b16 %v3229
        %v3308 = vunpack.c.l.b16 %v3230
        %v3309 = vunpack.c.h.b16 %v3230
        %v3310 = vunpack.c.l.b16 %v3231
        %v3311 = vunpack.c.h.b16 %v3231
        %v3312 = vunpack.c.l.b16 %v3232
        %v3313 = vunpack.c.h.b16 %v3232
        %v3314 = vunpack.c.l.b16 %v3233
        %v3315 = vunpack.c.h.b16 %v3233
        %v3316 = vunpack.c.l.b16 %v3234
        %v3317 = vunpack.c.h.b16 %v3234
        %v3318 = vunpack.c.l.b16 %v3235
        %v3319 = vunpack.c.h.b16 %v3235
        %v3320 = vunpack.c.l.b16 %v3236
        %v3321 = vunpack.c.h.b16 %v3236
        %v3322 = vunpack.c.l.b16 %v3237
        %v3323 = vunpack.c.h.b16 %v3237
        %v3324 = vunpack.c.l.b16 %v3238
        %v3325 = vunpack.c.h.b16 %v3238
        %v3326 = vunpack.c.l.b16 %v3239
        %v3327 = vunpack.c.h.b16 %v3239
        %v3328 = vunpack.c.l.b16 %v3240
        %v3329 = vunpack.c.h.b16 %v3240
        %v3330 = vunpack.c.l.b16 %v3241
        %v3331 = vunpack.c.h.b16 %v3241
        %v3332 = vunpack.c.l.b16 %v3242
        %v3333 = vunpack.c.h.b16 %v3242
        %v3334 = vunpack.c.l.b16 %v3243
        %v3335 = vunpack.c.h.b16 %v3243
        %v3336 = vunpack.c.l.b16 %v3244
        %v3337 = vunpack.c.h.b16 %v3244
        %v3338 = vunpack.c.l.b16 %v3245
        %v3339 = vunpack.c.h.b16 %v3245
        %v3340 = vunpack.c.l.b16 %v3246
        %v3341 = vunpack.c.h.b16 %v3246
        %v3342 = vunpack.c.l.b16 %v3247
        %v3343 = vunpack.c.h.b16 %v3247
        %v3344 = vunpack.c.l.b16 %v3248
        %v3345 = vunpack.c.h.b16 %v3248
        %v3346 = vunpack.c.l.b16 %v3249
        %v3347 = vunpack.c.h.b16 %v3249
        %v3348 = vunpack.c.l.b16 %v3250
        %v3349 = vunpack.c.h.b16 %v3250
        %v3350 = vunpack.c.l.b16 %v3251
        %v3351 = vunpack.c.h.b16 %v3251
        %v3352 = vunpack.c.l.b16 %v3252
        %v3353 = vunpack.c.h.b16 %v3252
        %v3354 = vunpack.c.l.b16 %v3253
        %v3355 = vunpack.c.h.b16 %v3253
        %v3356 = vunpack.c.l.b16 %v3254
        %v3357 = vunpack.c.h.b16 %v3254
        %v3358 = vunpack.c.l.b16 %v3255
        %v3359 = vunpack.c.h.b16 %v3255
        %v3360 = vunpack.c.l.b16 %v3256
        %v3361 = vunpack.c.h.b16 %v3256
        %v3362 = vunpack.c.l.b16 %v3257
        %v3363 = vunpack.c.h.b16 %v3257
        %v3364 = vpack.c.b16 %v3302, %v3300
        %v3365 = vpack.c.b16 %v3303, %v3301
        %v3366 = vpack.c.b16 %v3306, %v3304
        %v3367 = vpack.c.b16 %v3307, %v3305
        %v3368 = vpack.c.b16 %v3310, %v3308
        %v3369 = vpack.c.b16 %v3311, %v3309
        %v3370 = vpack.c.b16 %v3314, %v3312
        %v3371 = vpack.c.b16 %v3315, %v3313
        %v3372 = vpack.c.b16 %v3318, %v3316
        %v3373 = vpack.c.b16 %v3319, %v3317
        %v3374 = vpack.c.b16 %v3322, %v3320
        %v3375 = vpack.c.b16 %v3323, %v3321
        %v3376 = vpack.c.b16 %v3326, %v3324
        %v3377 = vpack.c.b16 %v3327, %v3325
        %v3378 = vpack.c.b16 %v3330, %v3328
        %v3379 = vpack.c.b16 %v3331, %v3329
        %v3380 = vpack.c.b16 %v3334, %v3332
        %v3381 = vpack.c.b16 %v3335, %v3333
        %v3382 = vpack.c.b16 %v3338, %v3336
        %v3383 = vpack.c.b16 %v3339, %v3337
        %v3384 = vpack.c.b16 %v3342, %v3340
        %v3385 = vpack.c.b16 %v3343, %v3341
        %v3386 = vpack.c.b16 %v3346, %v3344
        %v3387 = vpack.c.b16 %v3347, %v3345
        %v3388 = vpack.c.b16 %v3350, %v3348
        %v3389 = vpack.c.b16 %v3351, %v3349
        %v3390 = vpack.c.b16 %v3354, %v3352
        %v3391 = vpack.c.b16 %v3355, %v3353
        %v3392 = vpack.c.b16 %v3358, %v3356
        %v3393 = vpack.c.b16 %v3359, %v3357
        %v3394 = vpack.c.b16 %v3362, %v3360
        %v3395 = vpack.c.b16 %v3363, %v3361
        %3428 = vmatprep.subr.bf16.mxu0 %v3379
        %3429 = vmatpush1.bf16.msra.mxu0 %v3378
        %3430 = vmatprep.subr.bf16.mxu0 %v3377
        %3431 = vmatpush1.bf16.msra.mxu0 %v3376
        %3432 = vmatprep.subr.bf16.mxu0 %v3375
        %3433 = vmatpush1.bf16.msra.mxu0 %v3374
        %3434 = vmatprep.subr.bf16.mxu0 %v3373
        %3435 = vmatpush1.bf16.msra.mxu0 %v3372
        %3436 = vmatprep.subr.bf16.mxu0 %v3371
        %3437 = vmatpush1.bf16.msra.mxu0 %v3370
        %3438 = vmatprep.subr.bf16.mxu0 %v3369
        %3439 = vmatpush1.bf16.msra.mxu0 %v3368
        %3440 = vmatprep.subr.bf16.mxu0 %v3367
        %3441 = vmatpush1.bf16.msra.mxu0 %v3366
        %3442 = vmatprep.subr.bf16.mxu0 %v3365
        %3443 = vmatpush1.bf16.msra.mxu0 %v3364
        %3444 = vmatprep.subr.bf16.mxu0 %v3395
        %3445 = vmatpush2.bf16.msra.mxu0 %v3394
        %3446 = vmatprep.subr.bf16.mxu0 %v3393
        %3447 = vmatpush2.bf16.msra.mxu0 %v3392
        %3448 = vmatprep.subr.bf16.mxu0 %v3391
        %3449 = vmatpush2.bf16.msra.mxu0 %v3390
        %3450 = vmatprep.subr.bf16.mxu0 %v3389
        %3451 = vmatpush2.bf16.msra.mxu0 %v3388
        %3452 = vmatprep.subr.bf16.mxu0 %v3387
        %3453 = vmatpush2.bf16.msra.mxu0 %v3386
        %3454 = vmatprep.subr.bf16.mxu0 %v3385
        %3455 = vmatpush2.bf16.msra.mxu0 %v3384
        %3456 = vmatprep.subr.bf16.mxu0 %v3383
        %3457 = vmatpush2.bf16.msra.mxu0 %v3382
        %3458 = vmatprep.subr.bf16.mxu0 %v3381
        %3459 = vmatpush2.bf16.msra.mxu0 %v3380
        %3460 = vmatprep.mubr.bf16.mxu0 %v3265
        %3461 = vmatmul.mubr.bf16.gmra.mxu0 %v3264
        %v3462 = vpop.f32.mrf.mxu0
        %v3463 = vadd.f32 0.0, %v3462
        %v3464 = vpop.f32.mrf.mxu0
        %v3465 = vadd.f32 0.0, %v3464
        %v3466 = vpop.f32.mrf.mxu0
        %v3467 = vpop.f32.mrf.mxu0
        %3468 = vdwg.mxu0
        %v3469 = vadd.f32 %v3219, %v3463
        %v3470 = vadd.f32 %v3221, %v3465
        %s3471 = scalar_lea.vmem %s11, 768
        %v3472 = vld [vmem:[%s3471] sm:$0xff]
        %v3473 = vld [vmem:[%s3471 + $0x8] sm:$0xff]
        %v3474 = vld [vmem:[%s3471 + $0x10] sm:$0xff]
        %v3475 = vld [vmem:[%s3471 + $0x18] sm:$0xff]
        %v3476 = vld [vmem:[%s3471 + $0x20] sm:$0xff]
        %v3477 = vld [vmem:[%s3471 + $0x28] sm:$0xff]
        %v3478 = vld [vmem:[%s3471 + $0x30] sm:$0xff]
        %v3479 = vld [vmem:[%s3471 + $0x38] sm:$0xff]
        %v3480 = vld [vmem:[%s3471 + $0x40] sm:$0xff]
        %v3481 = vld [vmem:[%s3471 + $0x48] sm:$0xff]
        %v3482 = vld [vmem:[%s3471 + $0x50] sm:$0xff]
        %v3483 = vld [vmem:[%s3471 + $0x58] sm:$0xff]
        %v3484 = vld [vmem:[%s3471 + $0x60] sm:$0xff]
        %v3485 = vld [vmem:[%s3471 + $0x68] sm:$0xff]
        %v3486 = vld [vmem:[%s3471 + $0x70] sm:$0xff]
        %v3487 = vld [vmem:[%s3471 + $0x78] sm:$0xff]
        %v3488 = vld [vmem:[%s3471 + $0x80] sm:$0xff]
        %v3489 = vld [vmem:[%s3471 + $0x88] sm:$0xff]
        %v3490 = vld [vmem:[%s3471 + $0x90] sm:$0xff]
        %v3491 = vld [vmem:[%s3471 + $0x98] sm:$0xff]
        %v3492 = vld [vmem:[%s3471 + $0xa0] sm:$0xff]
        %v3493 = vld [vmem:[%s3471 + $0xa8] sm:$0xff]
        %v3494 = vld [vmem:[%s3471 + $0xb0] sm:$0xff]
        %v3495 = vld [vmem:[%s3471 + $0xb8] sm:$0xff]
        %v3496 = vld [vmem:[%s3471 + $0xc0] sm:$0xff]
        %v3497 = vld [vmem:[%s3471 + $0xc8] sm:$0xff]
        %v3498 = vld [vmem:[%s3471 + $0xd0] sm:$0xff]
        %v3499 = vld [vmem:[%s3471 + $0xd8] sm:$0xff]
        %v3500 = vld [vmem:[%s3471 + $0xe0] sm:$0xff]
        %v3501 = vld [vmem:[%s3471 + $0xe8] sm:$0xff]
        %v3502 = vld [vmem:[%s3471 + $0xf0] sm:$0xff]
        %v3503 = vld [vmem:[%s3471 + $0xf8] sm:$0xff]
        %v3504 = vrot.slane %v2802, 3
        %v3505 = vrot.slane %v2804, 2
        %v3506 = vsel %vm2807, %v3505, %v3504
        %v3507 = vrot.slane %v2803, 3
        %v3508 = vrot.slane %v2805, 2
        %v3509 = vsel %vm2807, %v3508, %v3507
        %v3510 = vpack.c.b16 %v3506, %v3506
        %v3511 = vpack.c.b16 %v3509, %v3509
        %v3546 = vunpack.c.l.b16 %v3472
        %v3547 = vunpack.c.h.b16 %v3472
        %v3548 = vunpack.c.l.b16 %v3473
        %v3549 = vunpack.c.h.b16 %v3473
        %v3550 = vunpack.c.l.b16 %v3474
        %v3551 = vunpack.c.h.b16 %v3474
        %v3552 = vunpack.c.l.b16 %v3475
        %v3553 = vunpack.c.h.b16 %v3475
        %v3554 = vunpack.c.l.b16 %v3476
        %v3555 = vunpack.c.h.b16 %v3476
        %v3556 = vunpack.c.l.b16 %v3477
        %v3557 = vunpack.c.h.b16 %v3477
        %v3558 = vunpack.c.l.b16 %v3478
        %v3559 = vunpack.c.h.b16 %v3478
        %v3560 = vunpack.c.l.b16 %v3479
        %v3561 = vunpack.c.h.b16 %v3479
        %v3562 = vunpack.c.l.b16 %v3480
        %v3563 = vunpack.c.h.b16 %v3480
        %v3564 = vunpack.c.l.b16 %v3481
        %v3565 = vunpack.c.h.b16 %v3481
        %v3566 = vunpack.c.l.b16 %v3482
        %v3567 = vunpack.c.h.b16 %v3482
        %v3568 = vunpack.c.l.b16 %v3483
        %v3569 = vunpack.c.h.b16 %v3483
        %v3570 = vunpack.c.l.b16 %v3484
        %v3571 = vunpack.c.h.b16 %v3484
        %v3572 = vunpack.c.l.b16 %v3485
        %v3573 = vunpack.c.h.b16 %v3485
        %v3574 = vunpack.c.l.b16 %v3486
        %v3575 = vunpack.c.h.b16 %v3486
        %v3576 = vunpack.c.l.b16 %v3487
        %v3577 = vunpack.c.h.b16 %v3487
        %v3578 = vunpack.c.l.b16 %v3488
        %v3579 = vunpack.c.h.b16 %v3488
        %v3580 = vunpack.c.l.b16 %v3489
        %v3581 = vunpack.c.h.b16 %v3489
        %v3582 = vunpack.c.l.b16 %v3490
        %v3583 = vunpack.c.h.b16 %v3490
        %v3584 = vunpack.c.l.b16 %v3491
        %v3585 = vunpack.c.h.b16 %v3491
        %v3586 = vunpack.c.l.b16 %v3492
        %v3587 = vunpack.c.h.b16 %v3492
        %v3588 = vunpack.c.l.b16 %v3493
        %v3589 = vunpack.c.h.b16 %v3493
        %v3590 = vunpack.c.l.b16 %v3494
        %v3591 = vunpack.c.h.b16 %v3494
        %v3592 = vunpack.c.l.b16 %v3495
        %v3593 = vunpack.c.h.b16 %v3495
        %v3594 = vunpack.c.l.b16 %v3496
        %v3595 = vunpack.c.h.b16 %v3496
        %v3596 = vunpack.c.l.b16 %v3497
        %v3597 = vunpack.c.h.b16 %v3497
        %v3598 = vunpack.c.l.b16 %v3498
        %v3599 = vunpack.c.h.b16 %v3498
        %v3600 = vunpack.c.l.b16 %v3499
        %v3601 = vunpack.c.h.b16 %v3499
        %v3602 = vunpack.c.l.b16 %v3500
        %v3603 = vunpack.c.h.b16 %v3500
        %v3604 = vunpack.c.l.b16 %v3501
        %v3605 = vunpack.c.h.b16 %v3501
        %v3606 = vunpack.c.l.b16 %v3502
        %v3607 = vunpack.c.h.b16 %v3502
        %v3608 = vunpack.c.l.b16 %v3503
        %v3609 = vunpack.c.h.b16 %v3503
        %v3610 = vpack.c.b16 %v3548, %v3546
        %v3611 = vpack.c.b16 %v3549, %v3547
        %v3612 = vpack.c.b16 %v3552, %v3550
        %v3613 = vpack.c.b16 %v3553, %v3551
        %v3614 = vpack.c.b16 %v3556, %v3554
        %v3615 = vpack.c.b16 %v3557, %v3555
        %v3616 = vpack.c.b16 %v3560, %v3558
        %v3617 = vpack.c.b16 %v3561, %v3559
        %v3618 = vpack.c.b16 %v3564, %v3562
        %v3619 = vpack.c.b16 %v3565, %v3563
        %v3620 = vpack.c.b16 %v3568, %v3566
        %v3621 = vpack.c.b16 %v3569, %v3567
        %v3622 = vpack.c.b16 %v3572, %v3570
        %v3623 = vpack.c.b16 %v3573, %v3571
        %v3624 = vpack.c.b16 %v3576, %v3574
        %v3625 = vpack.c.b16 %v3577, %v3575
        %v3626 = vpack.c.b16 %v3580, %v3578
        %v3627 = vpack.c.b16 %v3581, %v3579
        %v3628 = vpack.c.b16 %v3584, %v3582
        %v3629 = vpack.c.b16 %v3585, %v3583
        %v3630 = vpack.c.b16 %v3588, %v3586
        %v3631 = vpack.c.b16 %v3589, %v3587
        %v3632 = vpack.c.b16 %v3592, %v3590
        %v3633 = vpack.c.b16 %v3593, %v3591
        %v3634 = vpack.c.b16 %v3596, %v3594
        %v3635 = vpack.c.b16 %v3597, %v3595
        %v3636 = vpack.c.b16 %v3600, %v3598
        %v3637 = vpack.c.b16 %v3601, %v3599
        %v3638 = vpack.c.b16 %v3604, %v3602
        %v3639 = vpack.c.b16 %v3605, %v3603
        %v3640 = vpack.c.b16 %v3608, %v3606
        %v3641 = vpack.c.b16 %v3609, %v3607
        %3674 = vmatprep.subr.bf16.mxu0 %v3625
        %3675 = vmatpush1.bf16.msra.mxu0 %v3624
        %3676 = vmatprep.subr.bf16.mxu0 %v3623
        %3677 = vmatpush1.bf16.msra.mxu0 %v3622
        %3678 = vmatprep.subr.bf16.mxu0 %v3621
        %3679 = vmatpush1.bf16.msra.mxu0 %v3620
        %3680 = vmatprep.subr.bf16.mxu0 %v3619
        %3681 = vmatpush1.bf16.msra.mxu0 %v3618
        %3682 = vmatprep.subr.bf16.mxu0 %v3617
        %3683 = vmatpush1.bf16.msra.mxu0 %v3616
        %3684 = vmatprep.subr.bf16.mxu0 %v3615
        %3685 = vmatpush1.bf16.msra.mxu0 %v3614
        %3686 = vmatprep.subr.bf16.mxu0 %v3613
        %3687 = vmatpush1.bf16.msra.mxu0 %v3612
        %3688 = vmatprep.subr.bf16.mxu0 %v3611
        %3689 = vmatpush1.bf16.msra.mxu0 %v3610
        %3690 = vmatprep.subr.bf16.mxu0 %v3641
        %3691 = vmatpush2.bf16.msra.mxu0 %v3640
        %3692 = vmatprep.subr.bf16.mxu0 %v3639
        %3693 = vmatpush2.bf16.msra.mxu0 %v3638
        %3694 = vmatprep.subr.bf16.mxu0 %v3637
        %3695 = vmatpush2.bf16.msra.mxu0 %v3636
        %3696 = vmatprep.subr.bf16.mxu0 %v3635
        %3697 = vmatpush2.bf16.msra.mxu0 %v3634
        %3698 = vmatprep.subr.bf16.mxu0 %v3633
        %3699 = vmatpush2.bf16.msra.mxu0 %v3632
        %3700 = vmatprep.subr.bf16.mxu0 %v3631
        %3701 = vmatpush2.bf16.msra.mxu0 %v3630
        %3702 = vmatprep.subr.bf16.mxu0 %v3629
        %3703 = vmatpush2.bf16.msra.mxu0 %v3628
        %3704 = vmatprep.subr.bf16.mxu0 %v3627
        %3705 = vmatpush2.bf16.msra.mxu0 %v3626
        %3706 = vmatprep.mubr.bf16.mxu0 %v3511
        %3707 = vmatmul.mubr.bf16.gmra.mxu0 %v3510
        %v3708 = vpop.f32.mrf.mxu0
        %v3709 = vadd.f32 0.0, %v3708
        %v3710 = vpop.f32.mrf.mxu0
        %v3711 = vadd.f32 0.0, %v3710
        %v3712 = vpop.f32.mrf.mxu0
        %v3713 = vpop.f32.mrf.mxu0
        %3714 = vdwg.mxu0
        %v3715 = vadd.f32 %v3469, %v3709
        %v3716 = vadd.f32 %v3470, %v3711
        %s3717 = scalar_lea.vmem %s11, 1024
        %v3718 = vld [vmem:[%s3717] sm:$0xff]
        %v3719 = vld [vmem:[%s3717 + $0x8] sm:$0xff]
        %v3720 = vld [vmem:[%s3717 + $0x10] sm:$0xff]
        %v3721 = vld [vmem:[%s3717 + $0x18] sm:$0xff]
        %v3722 = vld [vmem:[%s3717 + $0x20] sm:$0xff]
        %v3723 = vld [vmem:[%s3717 + $0x28] sm:$0xff]
        %v3724 = vld [vmem:[%s3717 + $0x30] sm:$0xff]
        %v3725 = vld [vmem:[%s3717 + $0x38] sm:$0xff]
        %v3726 = vld [vmem:[%s3717 + $0x40] sm:$0xff]
        %v3727 = vld [vmem:[%s3717 + $0x48] sm:$0xff]
        %v3728 = vld [vmem:[%s3717 + $0x50] sm:$0xff]
        %v3729 = vld [vmem:[%s3717 + $0x58] sm:$0xff]
        %v3730 = vld [vmem:[%s3717 + $0x60] sm:$0xff]
        %v3731 = vld [vmem:[%s3717 + $0x68] sm:$0xff]
        %v3732 = vld [vmem:[%s3717 + $0x70] sm:$0xff]
        %v3733 = vld [vmem:[%s3717 + $0x78] sm:$0xff]
        %v3734 = vld [vmem:[%s3717 + $0x80] sm:$0xff]
        %v3735 = vld [vmem:[%s3717 + $0x88] sm:$0xff]
        %v3736 = vld [vmem:[%s3717 + $0x90] sm:$0xff]
        %v3737 = vld [vmem:[%s3717 + $0x98] sm:$0xff]
        %v3738 = vld [vmem:[%s3717 + $0xa0] sm:$0xff]
        %v3739 = vld [vmem:[%s3717 + $0xa8] sm:$0xff]
        %v3740 = vld [vmem:[%s3717 + $0xb0] sm:$0xff]
        %v3741 = vld [vmem:[%s3717 + $0xb8] sm:$0xff]
        %v3742 = vld [vmem:[%s3717 + $0xc0] sm:$0xff]
        %v3743 = vld [vmem:[%s3717 + $0xc8] sm:$0xff]
        %v3744 = vld [vmem:[%s3717 + $0xd0] sm:$0xff]
        %v3745 = vld [vmem:[%s3717 + $0xd8] sm:$0xff]
        %v3746 = vld [vmem:[%s3717 + $0xe0] sm:$0xff]
        %v3747 = vld [vmem:[%s3717 + $0xe8] sm:$0xff]
        %v3748 = vld [vmem:[%s3717 + $0xf0] sm:$0xff]
        %v3749 = vld [vmem:[%s3717 + $0xf8] sm:$0xff]
        %v3750 = vrot.slane %v2802, 4
        %v3751 = vrot.slane %v2804, 3
        %v3752 = vsel %vm2807, %v3751, %v3750
        %v3753 = vrot.slane %v2803, 4
        %v3754 = vrot.slane %v2805, 3
        %v3755 = vsel %vm2807, %v3754, %v3753
        %v3756 = vpack.c.b16 %v3752, %v3752
        %v3757 = vpack.c.b16 %v3755, %v3755
        %v3792 = vunpack.c.l.b16 %v3718
        %v3793 = vunpack.c.h.b16 %v3718
        %v3794 = vunpack.c.l.b16 %v3719
        %v3795 = vunpack.c.h.b16 %v3719
        %v3796 = vunpack.c.l.b16 %v3720
        %v3797 = vunpack.c.h.b16 %v3720
        %v3798 = vunpack.c.l.b16 %v3721
        %v3799 = vunpack.c.h.b16 %v3721
        %v3800 = vunpack.c.l.b16 %v3722
        %v3801 = vunpack.c.h.b16 %v3722
        %v3802 = vunpack.c.l.b16 %v3723
        %v3803 = vunpack.c.h.b16 %v3723
        %v3804 = vunpack.c.l.b16 %v3724
        %v3805 = vunpack.c.h.b16 %v3724
        %v3806 = vunpack.c.l.b16 %v3725
        %v3807 = vunpack.c.h.b16 %v3725
        %v3808 = vunpack.c.l.b16 %v3726
        %v3809 = vunpack.c.h.b16 %v3726
        %v3810 = vunpack.c.l.b16 %v3727
        %v3811 = vunpack.c.h.b16 %v3727
        %v3812 = vunpack.c.l.b16 %v3728
        %v3813 = vunpack.c.h.b16 %v3728
        %v3814 = vunpack.c.l.b16 %v3729
        %v3815 = vunpack.c.h.b16 %v3729
        %v3816 = vunpack.c.l.b16 %v3730
        %v3817 = vunpack.c.h.b16 %v3730
        %v3818 = vunpack.c.l.b16 %v3731
        %v3819 = vunpack.c.h.b16 %v3731
        %v3820 = vunpack.c.l.b16 %v3732
        %v3821 = vunpack.c.h.b16 %v3732
        %v3822 = vunpack.c.l.b16 %v3733
        %v3823 = vunpack.c.h.b16 %v3733
        %v3824 = vunpack.c.l.b16 %v3734
        %v3825 = vunpack.c.h.b16 %v3734
        %v3826 = vunpack.c.l.b16 %v3735
        %v3827 = vunpack.c.h.b16 %v3735
        %v3828 = vunpack.c.l.b16 %v3736
        %v3829 = vunpack.c.h.b16 %v3736
        %v3830 = vunpack.c.l.b16 %v3737
        %v3831 = vunpack.c.h.b16 %v3737
        %v3832 = vunpack.c.l.b16 %v3738
        %v3833 = vunpack.c.h.b16 %v3738
        %v3834 = vunpack.c.l.b16 %v3739
        %v3835 = vunpack.c.h.b16 %v3739
        %v3836 = vunpack.c.l.b16 %v3740
        %v3837 = vunpack.c.h.b16 %v3740
        %v3838 = vunpack.c.l.b16 %v3741
        %v3839 = vunpack.c.h.b16 %v3741
        %v3840 = vunpack.c.l.b16 %v3742
        %v3841 = vunpack.c.h.b16 %v3742
        %v3842 = vunpack.c.l.b16 %v3743
        %v3843 = vunpack.c.h.b16 %v3743
        %v3844 = vunpack.c.l.b16 %v3744
        %v3845 = vunpack.c.h.b16 %v3744
        %v3846 = vunpack.c.l.b16 %v3745
        %v3847 = vunpack.c.h.b16 %v3745
        %v3848 = vunpack.c.l.b16 %v3746
        %v3849 = vunpack.c.h.b16 %v3746
        %v3850 = vunpack.c.l.b16 %v3747
        %v3851 = vunpack.c.h.b16 %v3747
        %v3852 = vunpack.c.l.b16 %v3748
        %v3853 = vunpack.c.h.b16 %v3748
        %v3854 = vunpack.c.l.b16 %v3749
        %v3855 = vunpack.c.h.b16 %v3749
        %v3856 = vpack.c.b16 %v3794, %v3792
        %v3857 = vpack.c.b16 %v3795, %v3793
        %v3858 = vpack.c.b16 %v3798, %v3796
        %v3859 = vpack.c.b16 %v3799, %v3797
        %v3860 = vpack.c.b16 %v3802, %v3800
        %v3861 = vpack.c.b16 %v3803, %v3801
        %v3862 = vpack.c.b16 %v3806, %v3804
        %v3863 = vpack.c.b16 %v3807, %v3805
        %v3864 = vpack.c.b16 %v3810, %v3808
        %v3865 = vpack.c.b16 %v3811, %v3809
        %v3866 = vpack.c.b16 %v3814, %v3812
        %v3867 = vpack.c.b16 %v3815, %v3813
        %v3868 = vpack.c.b16 %v3818, %v3816
        %v3869 = vpack.c.b16 %v3819, %v3817
        %v3870 = vpack.c.b16 %v3822, %v3820
        %v3871 = vpack.c.b16 %v3823, %v3821
        %v3872 = vpack.c.b16 %v3826, %v3824
        %v3873 = vpack.c.b16 %v3827, %v3825
        %v3874 = vpack.c.b16 %v3830, %v3828
        %v3875 = vpack.c.b16 %v3831, %v3829
        %v3876 = vpack.c.b16 %v3834, %v3832
        %v3877 = vpack.c.b16 %v3835, %v3833
        %v3878 = vpack.c.b16 %v3838, %v3836
        %v3879 = vpack.c.b16 %v3839, %v3837
        %v3880 = vpack.c.b16 %v3842, %v3840
        %v3881 = vpack.c.b16 %v3843, %v3841
        %v3882 = vpack.c.b16 %v3846, %v3844
        %v3883 = vpack.c.b16 %v3847, %v3845
        %v3884 = vpack.c.b16 %v3850, %v3848
        %v3885 = vpack.c.b16 %v3851, %v3849
        %v3886 = vpack.c.b16 %v3854, %v3852
        %v3887 = vpack.c.b16 %v3855, %v3853
        %3920 = vmatprep.subr.bf16.mxu0 %v3871
        %3921 = vmatpush1.bf16.msra.mxu0 %v3870
        %3922 = vmatprep.subr.bf16.mxu0 %v3869
        %3923 = vmatpush1.bf16.msra.mxu0 %v3868
        %3924 = vmatprep.subr.bf16.mxu0 %v3867
        %3925 = vmatpush1.bf16.msra.mxu0 %v3866
        %3926 = vmatprep.subr.bf16.mxu0 %v3865
        %3927 = vmatpush1.bf16.msra.mxu0 %v3864
        %3928 = vmatprep.subr.bf16.mxu0 %v3863
        %3929 = vmatpush1.bf16.msra.mxu0 %v3862
        %3930 = vmatprep.subr.bf16.mxu0 %v3861
        %3931 = vmatpush1.bf16.msra.mxu0 %v3860
        %3932 = vmatprep.subr.bf16.mxu0 %v3859
        %3933 = vmatpush1.bf16.msra.mxu0 %v3858
        %3934 = vmatprep.subr.bf16.mxu0 %v3857
        %3935 = vmatpush1.bf16.msra.mxu0 %v3856
        %3936 = vmatprep.subr.bf16.mxu0 %v3887
        %3937 = vmatpush2.bf16.msra.mxu0 %v3886
        %3938 = vmatprep.subr.bf16.mxu0 %v3885
        %3939 = vmatpush2.bf16.msra.mxu0 %v3884
        %3940 = vmatprep.subr.bf16.mxu0 %v3883
        %3941 = vmatpush2.bf16.msra.mxu0 %v3882
        %3942 = vmatprep.subr.bf16.mxu0 %v3881
        %3943 = vmatpush2.bf16.msra.mxu0 %v3880
        %3944 = vmatprep.subr.bf16.mxu0 %v3879
        %3945 = vmatpush2.bf16.msra.mxu0 %v3878
        %3946 = vmatprep.subr.bf16.mxu0 %v3877
        %3947 = vmatpush2.bf16.msra.mxu0 %v3876
        %3948 = vmatprep.subr.bf16.mxu0 %v3875
        %3949 = vmatpush2.bf16.msra.mxu0 %v3874
        %3950 = vmatprep.subr.bf16.mxu0 %v3873
        %3951 = vmatpush2.bf16.msra.mxu0 %v3872
        %3952 = vmatprep.mubr.bf16.mxu0 %v3757
        %3953 = vmatmul.mubr.bf16.gmra.mxu0 %v3756
        %v3954 = vpop.f32.mrf.mxu0
        %v3955 = vadd.f32 0.0, %v3954
        %v3956 = vpop.f32.mrf.mxu0
        %v3957 = vadd.f32 0.0, %v3956
        %v3958 = vpop.f32.mrf.mxu0
        %v3959 = vpop.f32.mrf.mxu0
        %3960 = vdwg.mxu0
        %v3961 = vadd.f32 %v3715, %v3955
        %v3962 = vadd.f32 %v3716, %v3957
        %s3963 = scalar_lea.vmem %s11, 1280
        %v3964 = vld [vmem:[%s3963] sm:$0xff]
        %v3965 = vld [vmem:[%s3963 + $0x8] sm:$0xff]
        %v3966 = vld [vmem:[%s3963 + $0x10] sm:$0xff]
        %v3967 = vld [vmem:[%s3963 + $0x18] sm:$0xff]
        %v3968 = vld [vmem:[%s3963 + $0x20] sm:$0xff]
        %v3969 = vld [vmem:[%s3963 + $0x28] sm:$0xff]
        %v3970 = vld [vmem:[%s3963 + $0x30] sm:$0xff]
        %v3971 = vld [vmem:[%s3963 + $0x38] sm:$0xff]
        %v3972 = vld [vmem:[%s3963 + $0x40] sm:$0xff]
        %v3973 = vld [vmem:[%s3963 + $0x48] sm:$0xff]
        %v3974 = vld [vmem:[%s3963 + $0x50] sm:$0xff]
        %v3975 = vld [vmem:[%s3963 + $0x58] sm:$0xff]
        %v3976 = vld [vmem:[%s3963 + $0x60] sm:$0xff]
        %v3977 = vld [vmem:[%s3963 + $0x68] sm:$0xff]
        %v3978 = vld [vmem:[%s3963 + $0x70] sm:$0xff]
        %v3979 = vld [vmem:[%s3963 + $0x78] sm:$0xff]
        %v3980 = vld [vmem:[%s3963 + $0x80] sm:$0xff]
        %v3981 = vld [vmem:[%s3963 + $0x88] sm:$0xff]
        %v3982 = vld [vmem:[%s3963 + $0x90] sm:$0xff]
        %v3983 = vld [vmem:[%s3963 + $0x98] sm:$0xff]
        %v3984 = vld [vmem:[%s3963 + $0xa0] sm:$0xff]
        %v3985 = vld [vmem:[%s3963 + $0xa8] sm:$0xff]
        %v3986 = vld [vmem:[%s3963 + $0xb0] sm:$0xff]
        %v3987 = vld [vmem:[%s3963 + $0xb8] sm:$0xff]
        %v3988 = vld [vmem:[%s3963 + $0xc0] sm:$0xff]
        %v3989 = vld [vmem:[%s3963 + $0xc8] sm:$0xff]
        %v3990 = vld [vmem:[%s3963 + $0xd0] sm:$0xff]
        %v3991 = vld [vmem:[%s3963 + $0xd8] sm:$0xff]
        %v3992 = vld [vmem:[%s3963 + $0xe0] sm:$0xff]
        %v3993 = vld [vmem:[%s3963 + $0xe8] sm:$0xff]
        %v3994 = vld [vmem:[%s3963 + $0xf0] sm:$0xff]
        %v3995 = vld [vmem:[%s3963 + $0xf8] sm:$0xff]
        %v3996 = vrot.slane %v2802, 5
        %v3997 = vrot.slane %v2804, 4
        %v3998 = vsel %vm2807, %v3997, %v3996
        %v3999 = vrot.slane %v2803, 5
        %v4000 = vrot.slane %v2805, 4
        %v4001 = vsel %vm2807, %v4000, %v3999
        %v4002 = vpack.c.b16 %v3998, %v3998
        %v4003 = vpack.c.b16 %v4001, %v4001
        %v4038 = vunpack.c.l.b16 %v3964
        %v4039 = vunpack.c.h.b16 %v3964
        %v4040 = vunpack.c.l.b16 %v3965
        %v4041 = vunpack.c.h.b16 %v3965
        %v4042 = vunpack.c.l.b16 %v3966
        %v4043 = vunpack.c.h.b16 %v3966
        %v4044 = vunpack.c.l.b16 %v3967
        %v4045 = vunpack.c.h.b16 %v3967
        %v4046 = vunpack.c.l.b16 %v3968
        %v4047 = vunpack.c.h.b16 %v3968
        %v4048 = vunpack.c.l.b16 %v3969
        %v4049 = vunpack.c.h.b16 %v3969
        %v4050 = vunpack.c.l.b16 %v3970
        %v4051 = vunpack.c.h.b16 %v3970
        %v4052 = vunpack.c.l.b16 %v3971
        %v4053 = vunpack.c.h.b16 %v3971
        %v4054 = vunpack.c.l.b16 %v3972
        %v4055 = vunpack.c.h.b16 %v3972
        %v4056 = vunpack.c.l.b16 %v3973
        %v4057 = vunpack.c.h.b16 %v3973
        %v4058 = vunpack.c.l.b16 %v3974
        %v4059 = vunpack.c.h.b16 %v3974
        %v4060 = vunpack.c.l.b16 %v3975
        %v4061 = vunpack.c.h.b16 %v3975
        %v4062 = vunpack.c.l.b16 %v3976
        %v4063 = vunpack.c.h.b16 %v3976
        %v4064 = vunpack.c.l.b16 %v3977
        %v4065 = vunpack.c.h.b16 %v3977
        %v4066 = vunpack.c.l.b16 %v3978
        %v4067 = vunpack.c.h.b16 %v3978
        %v4068 = vunpack.c.l.b16 %v3979
        %v4069 = vunpack.c.h.b16 %v3979
        %v4070 = vunpack.c.l.b16 %v3980
        %v4071 = vunpack.c.h.b16 %v3980
        %v4072 = vunpack.c.l.b16 %v3981
        %v4073 = vunpack.c.h.b16 %v3981
        %v4074 = vunpack.c.l.b16 %v3982
        %v4075 = vunpack.c.h.b16 %v3982
        %v4076 = vunpack.c.l.b16 %v3983
        %v4077 = vunpack.c.h.b16 %v3983
        %v4078 = vunpack.c.l.b16 %v3984
        %v4079 = vunpack.c.h.b16 %v3984
        %v4080 = vunpack.c.l.b16 %v3985
        %v4081 = vunpack.c.h.b16 %v3985
        %v4082 = vunpack.c.l.b16 %v3986
        %v4083 = vunpack.c.h.b16 %v3986
        %v4084 = vunpack.c.l.b16 %v3987
        %v4085 = vunpack.c.h.b16 %v3987
        %v4086 = vunpack.c.l.b16 %v3988
        %v4087 = vunpack.c.h.b16 %v3988
        %v4088 = vunpack.c.l.b16 %v3989
        %v4089 = vunpack.c.h.b16 %v3989
        %v4090 = vunpack.c.l.b16 %v3990
        %v4091 = vunpack.c.h.b16 %v3990
        %v4092 = vunpack.c.l.b16 %v3991
        %v4093 = vunpack.c.h.b16 %v3991
        %v4094 = vunpack.c.l.b16 %v3992
        %v4095 = vunpack.c.h.b16 %v3992
        %v4096 = vunpack.c.l.b16 %v3993
        %v4097 = vunpack.c.h.b16 %v3993
        %v4098 = vunpack.c.l.b16 %v3994
        %v4099 = vunpack.c.h.b16 %v3994
        %v4100 = vunpack.c.l.b16 %v3995
        %v4101 = vunpack.c.h.b16 %v3995
        %v4102 = vpack.c.b16 %v4040, %v4038
        %v4103 = vpack.c.b16 %v4041, %v4039
        %v4104 = vpack.c.b16 %v4044, %v4042
        %v4105 = vpack.c.b16 %v4045, %v4043
        %v4106 = vpack.c.b16 %v4048, %v4046
        %v4107 = vpack.c.b16 %v4049, %v4047
        %v4108 = vpack.c.b16 %v4052, %v4050
        %v4109 = vpack.c.b16 %v4053, %v4051
        %v4110 = vpack.c.b16 %v4056, %v4054
        %v4111 = vpack.c.b16 %v4057, %v4055
        %v4112 = vpack.c.b16 %v4060, %v4058
        %v4113 = vpack.c.b16 %v4061, %v4059
        %v4114 = vpack.c.b16 %v4064, %v4062
        %v4115 = vpack.c.b16 %v4065, %v4063
        %v4116 = vpack.c.b16 %v4068, %v4066
        %v4117 = vpack.c.b16 %v4069, %v4067
        %v4118 = vpack.c.b16 %v4072, %v4070
        %v4119 = vpack.c.b16 %v4073, %v4071
        %v4120 = vpack.c.b16 %v4076, %v4074
        %v4121 = vpack.c.b16 %v4077, %v4075
        %v4122 = vpack.c.b16 %v4080, %v4078
        %v4123 = vpack.c.b16 %v4081, %v4079
        %v4124 = vpack.c.b16 %v4084, %v4082
        %v4125 = vpack.c.b16 %v4085, %v4083
        %v4126 = vpack.c.b16 %v4088, %v4086
        %v4127 = vpack.c.b16 %v4089, %v4087
        %v4128 = vpack.c.b16 %v4092, %v4090
        %v4129 = vpack.c.b16 %v4093, %v4091
        %v4130 = vpack.c.b16 %v4096, %v4094
        %v4131 = vpack.c.b16 %v4097, %v4095
        %v4132 = vpack.c.b16 %v4100, %v4098
        %v4133 = vpack.c.b16 %v4101, %v4099
        %4166 = vmatprep.subr.bf16.mxu0 %v4117
        %4167 = vmatpush1.bf16.msra.mxu0 %v4116
        %4168 = vmatprep.subr.bf16.mxu0 %v4115
        %4169 = vmatpush1.bf16.msra.mxu0 %v4114
        %4170 = vmatprep.subr.bf16.mxu0 %v4113
        %4171 = vmatpush1.bf16.msra.mxu0 %v4112
        %4172 = vmatprep.subr.bf16.mxu0 %v4111
        %4173 = vmatpush1.bf16.msra.mxu0 %v4110
        %4174 = vmatprep.subr.bf16.mxu0 %v4109
        %4175 = vmatpush1.bf16.msra.mxu0 %v4108
        %4176 = vmatprep.subr.bf16.mxu0 %v4107
        %4177 = vmatpush1.bf16.msra.mxu0 %v4106
        %4178 = vmatprep.subr.bf16.mxu0 %v4105
        %4179 = vmatpush1.bf16.msra.mxu0 %v4104
        %4180 = vmatprep.subr.bf16.mxu0 %v4103
        %4181 = vmatpush1.bf16.msra.mxu0 %v4102
        %4182 = vmatprep.subr.bf16.mxu0 %v4133
        %4183 = vmatpush2.bf16.msra.mxu0 %v4132
        %4184 = vmatprep.subr.bf16.mxu0 %v4131
        %4185 = vmatpush2.bf16.msra.mxu0 %v4130
        %4186 = vmatprep.subr.bf16.mxu0 %v4129
        %4187 = vmatpush2.bf16.msra.mxu0 %v4128
        %4188 = vmatprep.subr.bf16.mxu0 %v4127
        %4189 = vmatpush2.bf16.msra.mxu0 %v4126
        %4190 = vmatprep.subr.bf16.mxu0 %v4125
        %4191 = vmatpush2.bf16.msra.mxu0 %v4124
        %4192 = vmatprep.subr.bf16.mxu0 %v4123
        %4193 = vmatpush2.bf16.msra.mxu0 %v4122
        %4194 = vmatprep.subr.bf16.mxu0 %v4121
        %4195 = vmatpush2.bf16.msra.mxu0 %v4120
        %4196 = vmatprep.subr.bf16.mxu0 %v4119
        %4197 = vmatpush2.bf16.msra.mxu0 %v4118
        %4198 = vmatprep.mubr.bf16.mxu0 %v4003
        %4199 = vmatmul.mubr.bf16.gmra.mxu0 %v4002
        %v4200 = vpop.f32.mrf.mxu0
        %v4201 = vadd.f32 0.0, %v4200
        %v4202 = vpop.f32.mrf.mxu0
        %v4203 = vadd.f32 0.0, %v4202
        %v4204 = vpop.f32.mrf.mxu0
        %v4205 = vpop.f32.mrf.mxu0
        %4206 = vdwg.mxu0
        %v4207 = vadd.f32 %v3961, %v4201
        %v4208 = vadd.f32 %v3962, %v4203
        %s4209 = scalar_lea.vmem %s11, 1536
        %v4210 = vld [vmem:[%s4209] sm:$0xff]
        %v4211 = vld [vmem:[%s4209 + $0x8] sm:$0xff]
        %v4212 = vld [vmem:[%s4209 + $0x10] sm:$0xff]
        %v4213 = vld [vmem:[%s4209 + $0x18] sm:$0xff]
        %v4214 = vld [vmem:[%s4209 + $0x20] sm:$0xff]
        %v4215 = vld [vmem:[%s4209 + $0x28] sm:$0xff]
        %v4216 = vld [vmem:[%s4209 + $0x30] sm:$0xff]
        %v4217 = vld [vmem:[%s4209 + $0x38] sm:$0xff]
        %v4218 = vld [vmem:[%s4209 + $0x40] sm:$0xff]
        %v4219 = vld [vmem:[%s4209 + $0x48] sm:$0xff]
        %v4220 = vld [vmem:[%s4209 + $0x50] sm:$0xff]
        %v4221 = vld [vmem:[%s4209 + $0x58] sm:$0xff]
        %v4222 = vld [vmem:[%s4209 + $0x60] sm:$0xff]
        %v4223 = vld [vmem:[%s4209 + $0x68] sm:$0xff]
        %v4224 = vld [vmem:[%s4209 + $0x70] sm:$0xff]
        %v4225 = vld [vmem:[%s4209 + $0x78] sm:$0xff]
        %v4226 = vld [vmem:[%s4209 + $0x80] sm:$0xff]
        %v4227 = vld [vmem:[%s4209 + $0x88] sm:$0xff]
        %v4228 = vld [vmem:[%s4209 + $0x90] sm:$0xff]
        %v4229 = vld [vmem:[%s4209 + $0x98] sm:$0xff]
        %v4230 = vld [vmem:[%s4209 + $0xa0] sm:$0xff]
        %v4231 = vld [vmem:[%s4209 + $0xa8] sm:$0xff]
        %v4232 = vld [vmem:[%s4209 + $0xb0] sm:$0xff]
        %v4233 = vld [vmem:[%s4209 + $0xb8] sm:$0xff]
        %v4234 = vld [vmem:[%s4209 + $0xc0] sm:$0xff]
        %v4235 = vld [vmem:[%s4209 + $0xc8] sm:$0xff]
        %v4236 = vld [vmem:[%s4209 + $0xd0] sm:$0xff]
        %v4237 = vld [vmem:[%s4209 + $0xd8] sm:$0xff]
        %v4238 = vld [vmem:[%s4209 + $0xe0] sm:$0xff]
        %v4239 = vld [vmem:[%s4209 + $0xe8] sm:$0xff]
        %v4240 = vld [vmem:[%s4209 + $0xf0] sm:$0xff]
        %v4241 = vld [vmem:[%s4209 + $0xf8] sm:$0xff]
        %v4242 = vrot.slane %v2802, 6
        %v4243 = vrot.slane %v2804, 5
        %v4244 = vsel %vm2807, %v4243, %v4242
        %v4245 = vrot.slane %v2803, 6
        %v4246 = vrot.slane %v2805, 5
        %v4247 = vsel %vm2807, %v4246, %v4245
        %v4248 = vpack.c.b16 %v4244, %v4244
        %v4249 = vpack.c.b16 %v4247, %v4247
        %v4284 = vunpack.c.l.b16 %v4210
        %v4285 = vunpack.c.h.b16 %v4210
        %v4286 = vunpack.c.l.b16 %v4211
        %v4287 = vunpack.c.h.b16 %v4211
        %v4288 = vunpack.c.l.b16 %v4212
        %v4289 = vunpack.c.h.b16 %v4212
        %v4290 = vunpack.c.l.b16 %v4213
        %v4291 = vunpack.c.h.b16 %v4213
        %v4292 = vunpack.c.l.b16 %v4214
        %v4293 = vunpack.c.h.b16 %v4214
        %v4294 = vunpack.c.l.b16 %v4215
        %v4295 = vunpack.c.h.b16 %v4215
        %v4296 = vunpack.c.l.b16 %v4216
        %v4297 = vunpack.c.h.b16 %v4216
        %v4298 = vunpack.c.l.b16 %v4217
        %v4299 = vunpack.c.h.b16 %v4217
        %v4300 = vunpack.c.l.b16 %v4218
        %v4301 = vunpack.c.h.b16 %v4218
        %v4302 = vunpack.c.l.b16 %v4219
        %v4303 = vunpack.c.h.b16 %v4219
        %v4304 = vunpack.c.l.b16 %v4220
        %v4305 = vunpack.c.h.b16 %v4220
        %v4306 = vunpack.c.l.b16 %v4221
        %v4307 = vunpack.c.h.b16 %v4221
        %v4308 = vunpack.c.l.b16 %v4222
        %v4309 = vunpack.c.h.b16 %v4222
        %v4310 = vunpack.c.l.b16 %v4223
        %v4311 = vunpack.c.h.b16 %v4223
        %v4312 = vunpack.c.l.b16 %v4224
        %v4313 = vunpack.c.h.b16 %v4224
        %v4314 = vunpack.c.l.b16 %v4225
        %v4315 = vunpack.c.h.b16 %v4225
        %v4316 = vunpack.c.l.b16 %v4226
        %v4317 = vunpack.c.h.b16 %v4226
        %v4318 = vunpack.c.l.b16 %v4227
        %v4319 = vunpack.c.h.b16 %v4227
        %v4320 = vunpack.c.l.b16 %v4228
        %v4321 = vunpack.c.h.b16 %v4228
        %v4322 = vunpack.c.l.b16 %v4229
        %v4323 = vunpack.c.h.b16 %v4229
        %v4324 = vunpack.c.l.b16 %v4230
        %v4325 = vunpack.c.h.b16 %v4230
        %v4326 = vunpack.c.l.b16 %v4231
        %v4327 = vunpack.c.h.b16 %v4231
        %v4328 = vunpack.c.l.b16 %v4232
        %v4329 = vunpack.c.h.b16 %v4232
        %v4330 = vunpack.c.l.b16 %v4233
        %v4331 = vunpack.c.h.b16 %v4233
        %v4332 = vunpack.c.l.b16 %v4234
        %v4333 = vunpack.c.h.b16 %v4234
        %v4334 = vunpack.c.l.b16 %v4235
        %v4335 = vunpack.c.h.b16 %v4235
        %v4336 = vunpack.c.l.b16 %v4236
        %v4337 = vunpack.c.h.b16 %v4236
        %v4338 = vunpack.c.l.b16 %v4237
        %v4339 = vunpack.c.h.b16 %v4237
        %v4340 = vunpack.c.l.b16 %v4238
        %v4341 = vunpack.c.h.b16 %v4238
        %v4342 = vunpack.c.l.b16 %v4239
        %v4343 = vunpack.c.h.b16 %v4239
        %v4344 = vunpack.c.l.b16 %v4240
        %v4345 = vunpack.c.h.b16 %v4240
        %v4346 = vunpack.c.l.b16 %v4241
        %v4347 = vunpack.c.h.b16 %v4241
        %v4348 = vpack.c.b16 %v4286, %v4284
        %v4349 = vpack.c.b16 %v4287, %v4285
        %v4350 = vpack.c.b16 %v4290, %v4288
        %v4351 = vpack.c.b16 %v4291, %v4289
        %v4352 = vpack.c.b16 %v4294, %v4292
        %v4353 = vpack.c.b16 %v4295, %v4293
        %v4354 = vpack.c.b16 %v4298, %v4296
        %v4355 = vpack.c.b16 %v4299, %v4297
        %v4356 = vpack.c.b16 %v4302, %v4300
        %v4357 = vpack.c.b16 %v4303, %v4301
        %v4358 = vpack.c.b16 %v4306, %v4304
        %v4359 = vpack.c.b16 %v4307, %v4305
        %v4360 = vpack.c.b16 %v4310, %v4308
        %v4361 = vpack.c.b16 %v4311, %v4309
        %v4362 = vpack.c.b16 %v4314, %v4312
        %v4363 = vpack.c.b16 %v4315, %v4313
        %v4364 = vpack.c.b16 %v4318, %v4316
        %v4365 = vpack.c.b16 %v4319, %v4317
        %v4366 = vpack.c.b16 %v4322, %v4320
        %v4367 = vpack.c.b16 %v4323, %v4321
        %v4368 = vpack.c.b16 %v4326, %v4324
        %v4369 = vpack.c.b16 %v4327, %v4325
        %v4370 = vpack.c.b16 %v4330, %v4328
        %v4371 = vpack.c.b16 %v4331, %v4329
        %v4372 = vpack.c.b16 %v4334, %v4332
        %v4373 = vpack.c.b16 %v4335, %v4333
        %v4374 = vpack.c.b16 %v4338, %v4336
        %v4375 = vpack.c.b16 %v4339, %v4337
        %v4376 = vpack.c.b16 %v4342, %v4340
        %v4377 = vpack.c.b16 %v4343, %v4341
        %v4378 = vpack.c.b16 %v4346, %v4344
        %v4379 = vpack.c.b16 %v4347, %v4345
        %4412 = vmatprep.subr.bf16.mxu0 %v4363
        %4413 = vmatpush1.bf16.msra.mxu0 %v4362
        %4414 = vmatprep.subr.bf16.mxu0 %v4361
        %4415 = vmatpush1.bf16.msra.mxu0 %v4360
        %4416 = vmatprep.subr.bf16.mxu0 %v4359
        %4417 = vmatpush1.bf16.msra.mxu0 %v4358
        %4418 = vmatprep.subr.bf16.mxu0 %v4357
        %4419 = vmatpush1.bf16.msra.mxu0 %v4356
        %4420 = vmatprep.subr.bf16.mxu0 %v4355
        %4421 = vmatpush1.bf16.msra.mxu0 %v4354
        %4422 = vmatprep.subr.bf16.mxu0 %v4353
        %4423 = vmatpush1.bf16.msra.mxu0 %v4352
        %4424 = vmatprep.subr.bf16.mxu0 %v4351
        %4425 = vmatpush1.bf16.msra.mxu0 %v4350
        %4426 = vmatprep.subr.bf16.mxu0 %v4349
        %4427 = vmatpush1.bf16.msra.mxu0 %v4348
        %4428 = vmatprep.subr.bf16.mxu0 %v4379
        %4429 = vmatpush2.bf16.msra.mxu0 %v4378
        %4430 = vmatprep.subr.bf16.mxu0 %v4377
        %4431 = vmatpush2.bf16.msra.mxu0 %v4376
        %4432 = vmatprep.subr.bf16.mxu0 %v4375
        %4433 = vmatpush2.bf16.msra.mxu0 %v4374
        %4434 = vmatprep.subr.bf16.mxu0 %v4373
        %4435 = vmatpush2.bf16.msra.mxu0 %v4372
        %4436 = vmatprep.subr.bf16.mxu0 %v4371
        %4437 = vmatpush2.bf16.msra.mxu0 %v4370
        %4438 = vmatprep.subr.bf16.mxu0 %v4369
        %4439 = vmatpush2.bf16.msra.mxu0 %v4368
        %4440 = vmatprep.subr.bf16.mxu0 %v4367
        %4441 = vmatpush2.bf16.msra.mxu0 %v4366
        %4442 = vmatprep.subr.bf16.mxu0 %v4365
        %4443 = vmatpush2.bf16.msra.mxu0 %v4364
        %4444 = vmatprep.mubr.bf16.mxu0 %v4249
        %4445 = vmatmul.mubr.bf16.gmra.mxu0 %v4248
        %v4446 = vpop.f32.mrf.mxu0
        %v4447 = vadd.f32 0.0, %v4446
        %v4448 = vpop.f32.mrf.mxu0
        %v4449 = vadd.f32 0.0, %v4448
        %v4450 = vpop.f32.mrf.mxu0
        %v4451 = vpop.f32.mrf.mxu0
        %4452 = vdwg.mxu0
        %v4453 = vadd.f32 %v4207, %v4447
        %v4454 = vadd.f32 %v4208, %v4449
        %s4455 = scalar_lea.vmem %s11, 1792
        %v4456 = vld [vmem:[%s4455] sm:$0xff]
        %v4457 = vld [vmem:[%s4455 + $0x8] sm:$0xff]
        %v4458 = vld [vmem:[%s4455 + $0x10] sm:$0xff]
        %v4459 = vld [vmem:[%s4455 + $0x18] sm:$0xff]
        %v4460 = vld [vmem:[%s4455 + $0x20] sm:$0xff]
        %v4461 = vld [vmem:[%s4455 + $0x28] sm:$0xff]
        %v4462 = vld [vmem:[%s4455 + $0x30] sm:$0xff]
        %v4463 = vld [vmem:[%s4455 + $0x38] sm:$0xff]
        %v4464 = vld [vmem:[%s4455 + $0x40] sm:$0xff]
        %v4465 = vld [vmem:[%s4455 + $0x48] sm:$0xff]
        %v4466 = vld [vmem:[%s4455 + $0x50] sm:$0xff]
        %v4467 = vld [vmem:[%s4455 + $0x58] sm:$0xff]
        %v4468 = vld [vmem:[%s4455 + $0x60] sm:$0xff]
        %v4469 = vld [vmem:[%s4455 + $0x68] sm:$0xff]
        %v4470 = vld [vmem:[%s4455 + $0x70] sm:$0xff]
        %v4471 = vld [vmem:[%s4455 + $0x78] sm:$0xff]
        %v4472 = vld [vmem:[%s4455 + $0x80] sm:$0xff]
        %v4473 = vld [vmem:[%s4455 + $0x88] sm:$0xff]
        %v4474 = vld [vmem:[%s4455 + $0x90] sm:$0xff]
        %v4475 = vld [vmem:[%s4455 + $0x98] sm:$0xff]
        %v4476 = vld [vmem:[%s4455 + $0xa0] sm:$0xff]
        %v4477 = vld [vmem:[%s4455 + $0xa8] sm:$0xff]
        %v4478 = vld [vmem:[%s4455 + $0xb0] sm:$0xff]
        %v4479 = vld [vmem:[%s4455 + $0xb8] sm:$0xff]
        %v4480 = vld [vmem:[%s4455 + $0xc0] sm:$0xff]
        %v4481 = vld [vmem:[%s4455 + $0xc8] sm:$0xff]
        %v4482 = vld [vmem:[%s4455 + $0xd0] sm:$0xff]
        %v4483 = vld [vmem:[%s4455 + $0xd8] sm:$0xff]
        %v4484 = vld [vmem:[%s4455 + $0xe0] sm:$0xff]
        %v4485 = vld [vmem:[%s4455 + $0xe8] sm:$0xff]
        %v4486 = vld [vmem:[%s4455 + $0xf0] sm:$0xff]
        %v4487 = vld [vmem:[%s4455 + $0xf8] sm:$0xff]
        %v4488 = vrot.slane %v2802, 7
        %v4489 = vrot.slane %v2804, 6
        %v4490 = vsel %vm2807, %v4489, %v4488
        %v4491 = vrot.slane %v2803, 7
        %v4492 = vrot.slane %v2805, 6
        %v4493 = vsel %vm2807, %v4492, %v4491
        %v4494 = vpack.c.b16 %v4490, %v4490
        %v4495 = vpack.c.b16 %v4493, %v4493
        %v4530 = vunpack.c.l.b16 %v4456
        %v4531 = vunpack.c.h.b16 %v4456
        %v4532 = vunpack.c.l.b16 %v4457
        %v4533 = vunpack.c.h.b16 %v4457
        %v4534 = vunpack.c.l.b16 %v4458
        %v4535 = vunpack.c.h.b16 %v4458
        %v4536 = vunpack.c.l.b16 %v4459
        %v4537 = vunpack.c.h.b16 %v4459
        %v4538 = vunpack.c.l.b16 %v4460
        %v4539 = vunpack.c.h.b16 %v4460
        %v4540 = vunpack.c.l.b16 %v4461
        %v4541 = vunpack.c.h.b16 %v4461
        %v4542 = vunpack.c.l.b16 %v4462
        %v4543 = vunpack.c.h.b16 %v4462
        %v4544 = vunpack.c.l.b16 %v4463
        %v4545 = vunpack.c.h.b16 %v4463
        %v4546 = vunpack.c.l.b16 %v4464
        %v4547 = vunpack.c.h.b16 %v4464
        %v4548 = vunpack.c.l.b16 %v4465
        %v4549 = vunpack.c.h.b16 %v4465
        %v4550 = vunpack.c.l.b16 %v4466
        %v4551 = vunpack.c.h.b16 %v4466
        %v4552 = vunpack.c.l.b16 %v4467
        %v4553 = vunpack.c.h.b16 %v4467
        %v4554 = vunpack.c.l.b16 %v4468
        %v4555 = vunpack.c.h.b16 %v4468
        %v4556 = vunpack.c.l.b16 %v4469
        %v4557 = vunpack.c.h.b16 %v4469
        %v4558 = vunpack.c.l.b16 %v4470
        %v4559 = vunpack.c.h.b16 %v4470
        %v4560 = vunpack.c.l.b16 %v4471
        %v4561 = vunpack.c.h.b16 %v4471
        %v4562 = vunpack.c.l.b16 %v4472
        %v4563 = vunpack.c.h.b16 %v4472
        %v4564 = vunpack.c.l.b16 %v4473
        %v4565 = vunpack.c.h.b16 %v4473
        %v4566 = vunpack.c.l.b16 %v4474
        %v4567 = vunpack.c.h.b16 %v4474
        %v4568 = vunpack.c.l.b16 %v4475
        %v4569 = vunpack.c.h.b16 %v4475
        %v4570 = vunpack.c.l.b16 %v4476
        %v4571 = vunpack.c.h.b16 %v4476
        %v4572 = vunpack.c.l.b16 %v4477
        %v4573 = vunpack.c.h.b16 %v4477
        %v4574 = vunpack.c.l.b16 %v4478
        %v4575 = vunpack.c.h.b16 %v4478
        %v4576 = vunpack.c.l.b16 %v4479
        %v4577 = vunpack.c.h.b16 %v4479
        %v4578 = vunpack.c.l.b16 %v4480
        %v4579 = vunpack.c.h.b16 %v4480
        %v4580 = vunpack.c.l.b16 %v4481
        %v4581 = vunpack.c.h.b16 %v4481
        %v4582 = vunpack.c.l.b16 %v4482
        %v4583 = vunpack.c.h.b16 %v4482
        %v4584 = vunpack.c.l.b16 %v4483
        %v4585 = vunpack.c.h.b16 %v4483
        %v4586 = vunpack.c.l.b16 %v4484
        %v4587 = vunpack.c.h.b16 %v4484
        %v4588 = vunpack.c.l.b16 %v4485
        %v4589 = vunpack.c.h.b16 %v4485
        %v4590 = vunpack.c.l.b16 %v4486
        %v4591 = vunpack.c.h.b16 %v4486
        %v4592 = vunpack.c.l.b16 %v4487
        %v4593 = vunpack.c.h.b16 %v4487
        %v4594 = vpack.c.b16 %v4532, %v4530
        %v4595 = vpack.c.b16 %v4533, %v4531
        %v4596 = vpack.c.b16 %v4536, %v4534
        %v4597 = vpack.c.b16 %v4537, %v4535
        %v4598 = vpack.c.b16 %v4540, %v4538
        %v4599 = vpack.c.b16 %v4541, %v4539
        %v4600 = vpack.c.b16 %v4544, %v4542
        %v4601 = vpack.c.b16 %v4545, %v4543
        %v4602 = vpack.c.b16 %v4548, %v4546
        %v4603 = vpack.c.b16 %v4549, %v4547
        %v4604 = vpack.c.b16 %v4552, %v4550
        %v4605 = vpack.c.b16 %v4553, %v4551
        %v4606 = vpack.c.b16 %v4556, %v4554
        %v4607 = vpack.c.b16 %v4557, %v4555
        %v4608 = vpack.c.b16 %v4560, %v4558
        %v4609 = vpack.c.b16 %v4561, %v4559
        %v4610 = vpack.c.b16 %v4564, %v4562
        %v4611 = vpack.c.b16 %v4565, %v4563
        %v4612 = vpack.c.b16 %v4568, %v4566
        %v4613 = vpack.c.b16 %v4569, %v4567
        %v4614 = vpack.c.b16 %v4572, %v4570
        %v4615 = vpack.c.b16 %v4573, %v4571
        %v4616 = vpack.c.b16 %v4576, %v4574
        %v4617 = vpack.c.b16 %v4577, %v4575
        %v4618 = vpack.c.b16 %v4580, %v4578
        %v4619 = vpack.c.b16 %v4581, %v4579
        %v4620 = vpack.c.b16 %v4584, %v4582
        %v4621 = vpack.c.b16 %v4585, %v4583
        %v4622 = vpack.c.b16 %v4588, %v4586
        %v4623 = vpack.c.b16 %v4589, %v4587
        %v4624 = vpack.c.b16 %v4592, %v4590
        %v4625 = vpack.c.b16 %v4593, %v4591
        %4658 = vmatprep.subr.bf16.mxu0 %v4609
        %4659 = vmatpush1.bf16.msra.mxu0 %v4608
        %4660 = vmatprep.subr.bf16.mxu0 %v4607
        %4661 = vmatpush1.bf16.msra.mxu0 %v4606
        %4662 = vmatprep.subr.bf16.mxu0 %v4605
        %4663 = vmatpush1.bf16.msra.mxu0 %v4604
        %4664 = vmatprep.subr.bf16.mxu0 %v4603
        %4665 = vmatpush1.bf16.msra.mxu0 %v4602
        %4666 = vmatprep.subr.bf16.mxu0 %v4601
        %4667 = vmatpush1.bf16.msra.mxu0 %v4600
        %4668 = vmatprep.subr.bf16.mxu0 %v4599
        %4669 = vmatpush1.bf16.msra.mxu0 %v4598
        %4670 = vmatprep.subr.bf16.mxu0 %v4597
        %4671 = vmatpush1.bf16.msra.mxu0 %v4596
        %4672 = vmatprep.subr.bf16.mxu0 %v4595
        %4673 = vmatpush1.bf16.msra.mxu0 %v4594
        %4674 = vmatprep.subr.bf16.mxu0 %v4625
        %4675 = vmatpush2.bf16.msra.mxu0 %v4624
        %4676 = vmatprep.subr.bf16.mxu0 %v4623
        %4677 = vmatpush2.bf16.msra.mxu0 %v4622
        %4678 = vmatprep.subr.bf16.mxu0 %v4621
        %4679 = vmatpush2.bf16.msra.mxu0 %v4620
        %4680 = vmatprep.subr.bf16.mxu0 %v4619
        %4681 = vmatpush2.bf16.msra.mxu0 %v4618
        %4682 = vmatprep.subr.bf16.mxu0 %v4617
        %4683 = vmatpush2.bf16.msra.mxu0 %v4616
        %4684 = vmatprep.subr.bf16.mxu0 %v4615
        %4685 = vmatpush2.bf16.msra.mxu0 %v4614
        %4686 = vmatprep.subr.bf16.mxu0 %v4613
        %4687 = vmatpush2.bf16.msra.mxu0 %v4612
        %4688 = vmatprep.subr.bf16.mxu0 %v4611
        %4689 = vmatpush2.bf16.msra.mxu0 %v4610
        %4690 = vmatprep.mubr.bf16.mxu0 %v4495
        %4691 = vmatmul.mubr.bf16.gmra.mxu0 %v4494
        %v4692 = vpop.f32.mrf.mxu0
        %v4693 = vadd.f32 0.0, %v4692
        %v4694 = vpop.f32.mrf.mxu0
        %v4695 = vadd.f32 0.0, %v4694
        %v4696 = vpop.f32.mrf.mxu0
        %v4697 = vpop.f32.mrf.mxu0
        %4698 = vdwg.mxu0
        %v4699 = vadd.f32 %v4453, %v4693
        %v4700 = vadd.f32 %v4454, %v4695
        %v4701 = vld [vmem:[%s12] sm:$0x3]
        %v4703 = vlaneseq
        %v4704 = vshrl.u32 %v4703, 7
        %v4705 = vsub.s32 0, %v4704
        %v4706 = vrot.slane %v4701, %v4705
        %v4707 = vlaneseq
        %v4708 = vshrl.u32 %v4707, 7
        %v4709 = vsub.s32 1, %v4708
        %v4710 = vrot.slane %v4701, %v4709
        %v4713 = vadd.f32 %v4699, %v4706
        %v4714 = vadd.f32 %v4700, %v4710
        %vm4715 = vcmask 123904
        %v4716 = vsel %vm4715, %v4713, -inf
        %4717 = vmax.xlane.f32.xlu0 %v4716
        %v4718 = vpop.xlane.xlu0 %4717
        %vm4719 = vcmask 255104
        %v4720 = vsel %vm4719, %v4713, -inf
        %4721 = vmax.xlane.f32.xlu0 %v4720
        %v4722 = vpop.xlane.xlu0 %4721
        %vm4723 = vcmask 386304
        %v4724 = vsel %vm4723, %v4713, -inf
        %4725 = vmax.xlane.f32.xlu0 %v4724
        %v4726 = vpop.xlane.xlu0 %4725
        %vm4727 = vcmask 517504
        %v4728 = vsel %vm4727, %v4713, -inf
        %4729 = vmax.xlane.f32.xlu0 %v4728
        %v4730 = vpop.xlane.xlu0 %4729
        %vm4731 = vcmask 648704
        %v4732 = vsel %vm4731, %v4713, -inf
        %4733 = vmax.xlane.f32.xlu0 %v4732
        %v4734 = vpop.xlane.xlu0 %4733
        %vm4735 = vcmask 779904
        %v4736 = vsel %vm4735, %v4713, -inf
        %4737 = vmax.xlane.f32.xlu0 %v4736
        %v4738 = vpop.xlane.xlu0 %4737
        %vm4739 = vcmask 911104
        %v4740 = vsel %vm4739, %v4713, -inf
        %4741 = vmax.xlane.f32.xlu0 %v4740
        %v4742 = vpop.xlane.xlu0 %4741
        %vm4743 = vcmask 1042304
        %v4744 = vsel %vm4743, %v4713, -inf
        %4745 = vmax.xlane.f32.xlu0 %v4744
        %v4746 = vpop.xlane.xlu0 %4745
        %v4747 = vsel %vm4715, %v4714, -inf
        %4748 = vmax.xlane.f32.xlu0 %v4747
        %v4749 = vpop.xlane.xlu0 %4748
        %v4750 = vsel %vm4719, %v4714, -inf
        %4751 = vmax.xlane.f32.xlu0 %v4750
        %v4752 = vpop.xlane.xlu0 %4751
        %v4753 = vsel %vm4723, %v4714, -inf
        %4754 = vmax.xlane.f32.xlu0 %v4753
        %v4755 = vpop.xlane.xlu0 %4754
        %v4756 = vsel %vm4727, %v4714, -inf
        %4757 = vmax.xlane.f32.xlu0 %v4756
        %v4758 = vpop.xlane.xlu0 %4757
        %v4759 = vsel %vm4731, %v4714, -inf
        %4760 = vmax.xlane.f32.xlu0 %v4759
        %v4761 = vpop.xlane.xlu0 %4760
        %v4762 = vsel %vm4735, %v4714, -inf
        %4763 = vmax.xlane.f32.xlu0 %v4762
        %v4764 = vpop.xlane.xlu0 %4763
        %v4765 = vsel %vm4739, %v4714, -inf
        %4766 = vmax.xlane.f32.xlu0 %v4765
        %v4767 = vpop.xlane.xlu0 %4766
        %v4768 = vsel %vm4743, %v4714, -inf
        %4769 = vmax.xlane.f32.xlu0 %v4768
        %v4770 = vpop.xlane.xlu0 %4769
        %vm4771 = vcmask 7168
        %v4772 = vsel %vm4771, %v4718, %v4722
        %vm4773 = vcmask 15360
        %v4774 = vsel %vm4773, %v4772, %v4726
        %vm4775 = vcmask 23552
        %v4776 = vsel %vm4775, %v4774, %v4730
        %vm4777 = vcmask 31744
        %v4778 = vsel %vm4777, %v4776, %v4734
        %vm4779 = vcmask 39936
        %v4780 = vsel %vm4779, %v4778, %v4738
        %vm4781 = vcmask 48128
        %v4782 = vsel %vm4781, %v4780, %v4742
        %vm4783 = vcmask 56320
        %v4784 = vsel %vm4783, %v4782, %v4746
        %v4785 = vsel %vm1641, %v4784, %v4749
        %vm4786 = vcmask 72704
        %v4787 = vsel %vm4786, %v4785, %v4752
        %vm4788 = vcmask 80896
        %v4789 = vsel %vm4788, %v4787, %v4755
        %vm4790 = vcmask 89088
        %v4791 = vsel %vm4790, %v4789, %v4758
        %vm4792 = vcmask 97280
        %v4793 = vsel %vm4792, %v4791, %v4761
        %vm4794 = vcmask 105472
        %v4795 = vsel %vm4794, %v4793, %v4764
        %vm4796 = vcmask 113664
        %v4797 = vsel %vm4796, %v4795, %v4767
        %vm4798 = vcmask 121856
        %v4799 = vsel %vm4798, %v4797, %v4770
        %v4800 = vld [vmem:[%s13] sm:$0xff]
        %v4801 = vld [vmem:[%s13 + $0x8] sm:$0xff]
        %v4802 = vld [vmem:[#allocation3] sm:$0x1]
        %v4804 = vlaneseq
        %v4805 = vshrl.u32 %v4804, 7
        %v4806 = vsub.s32 0, %v4805
        %v4807 = vrot.slane %v4802, %v4806
        %vm4809 = vcmask 130048
        %v4811 = vsel %vm4809, %v4799, 0
        %4813 = vmatprep.subr.mxu0 0.0
        %4814 = vmatpush1.msra.mxu0 0.0
        %4815 = vmatprep.subr.mxu0 0.0
        %4816 = vmatpush1.msra.mxu0 0.0
        %4817 = vmatprep.subr.mxu0 0.0
        %4818 = vmatpush1.msra.mxu0 0.0
        %4819 = vmatprep.subr.mxu0 0.0
        %4820 = vmatpush1.msra.mxu0 0.0
        %4821 = vmatprep.subr.mxu0 0.0
        %4822 = vmatpush1.msra.mxu0 0.0
        %4823 = vmatprep.subr.mxu0 0.0
        %4824 = vmatpush1.msra.mxu0 0.0
        %4825 = vmatprep.subr.mxu0 0.0
        %4826 = vmatpush1.msra.mxu0 0.0
        %4827 = vmatprep.subr.mxu0 0.0
        %4828 = vmatpush1.msra.mxu0 0.0
        %4829 = vmatprep.subr.mxu0 0.0
        %4830 = vmatpush1.msra.mxu0 0.0
        %4831 = vmatprep.subr.mxu0 0.0
        %4832 = vmatpush1.msra.mxu0 0.0
        %4833 = vmatprep.subr.mxu0 0.0
        %4834 = vmatpush1.msra.mxu0 0.0
        %4835 = vmatprep.subr.mxu0 0.0
        %4836 = vmatpush1.msra.mxu0 0.0
        %4837 = vmatprep.subr.mxu0 0.0
        %4838 = vmatpush1.msra.mxu0 0.0
        %4839 = vmatprep.subr.mxu0 0.0
        %4840 = vmatpush1.msra.mxu0 0.0
        %4841 = vmatprep.subr.mxu0 0.0
        %4842 = vmatpush1.msra.mxu0 %v4801
        %4843 = vmatprep.subr.mxu0 0.0
        %4844 = vmatpush1.msra.mxu0 %v4800
        %4845 = vmatprep.subr.mxu0 0.0
        %4846 = vmatpush2.msra.mxu0 0.0
        %4847 = vmatprep.subr.mxu0 0.0
        %4848 = vmatpush2.msra.mxu0 0.0
        %4849 = vmatprep.subr.mxu0 0.0
        %4850 = vmatpush2.msra.mxu0 0.0
        %4851 = vmatprep.subr.mxu0 0.0
        %4852 = vmatpush2.msra.mxu0 0.0
        %4853 = vmatprep.subr.mxu0 0.0
        %4854 = vmatpush2.msra.mxu0 0.0
        %4855 = vmatprep.subr.mxu0 0.0
        %4856 = vmatpush2.msra.mxu0 0.0
        %4857 = vmatprep.subr.mxu0 0.0
        %4858 = vmatpush2.msra.mxu0 0.0
        %4859 = vmatprep.subr.mxu0 0.0
        %4860 = vmatpush2.msra.mxu0 0.0
        %4861 = vmatprep.subr.mxu0 0.0
        %4862 = vmatpush2.msra.mxu0 0.0
        %4863 = vmatprep.subr.mxu0 0.0
        %4864 = vmatpush2.msra.mxu0 0.0
        %4865 = vmatprep.subr.mxu0 0.0
        %4866 = vmatpush2.msra.mxu0 0.0
        %4867 = vmatprep.subr.mxu0 0.0
        %4868 = vmatpush2.msra.mxu0 0.0
        %4869 = vmatprep.subr.mxu0 0.0
        %4870 = vmatpush2.msra.mxu0 0.0
        %4871 = vmatprep.subr.mxu0 0.0
        %4872 = vmatpush2.msra.mxu0 0.0
        %4873 = vmatprep.subr.mxu0 0.0
        %4874 = vmatpush2.msra.mxu0 0.0
        %4875 = vmatprep.subr.mxu0 0.0
        %4876 = vmatpush2.msra.mxu0 0.0
        %4877 = vmatprep.mubr.f32.mxu0 0.0
        %4878 = vmatmul.mubr.f32.gmra.mxu0 %v4811
        %v4879 = vpop.f32.mrf.mxu0
        %v4880 = vadd.f32 %v4807, %v4879
        %v4881 = vpop.f32.mrf.mxu0
        %4882 = vdwg.mxu0
        %v4883 = vxor.u32 %v4880, 2147483648
        %v4884 = vmul.f32 %v4883, 1.442695
        %v4885 = vpow.pop %v4884
        %v4886 = vadd.f32 %v4885, 1.0
        %v4887 = vrcp.pop %v4886
        %v4888 = vmul.f32 1.0, %v4887
        %vm4889 = vcmask 1024
        %4890 = vst.msk [vmem:[%s15] sm:$0x3] %vm4889, %v4888
      $region92: #{disc_forward.1} parent=79 // pred_fallthru
        _
      // Predicated region
      $region93: #{disc_forward.1} parent=79 // pred_check
        %p4891 = pneg %p391
      $region94: #{disc_forward.1} parent=79 // pred_check_branch
        %4893 = sbr.rel (%p4891) target = $region96
      $region95: #{disc_forward.1} parent=79 // pred_region
        _
      $region96: #{disc_forward.1} parent=79 // pred_fallthru
        _
      // Predicated region
      $region97: #{disc_forward.1} parent=79 // pred_check
        %p4894 = pneg %p391
      $region98: #{disc_forward.1} parent=79 // pred_check_branch
        %4896 = sbr.rel (%p4894) target = $region100
      $region99: #{disc_forward.1} parent=79 // pred_region
        _
      $region100: #{disc_forward.1} parent=79 // pred_fallthru
        _
    $region80: #{disc_forward.1} parent=5 // pred_fallthru
      _
    %p4897 = scmp.le.s32.totalorder 2, %s23
    // Predicated region
    $region101: #{disc_forward.1} parent=5 // pred_check
      %p4898 = pneg %p4897
    $region102: #{disc_forward.1} parent=5 // pred_check_branch
      %4900 = sbr.rel (%p4898) target = $region104
    $region103: #{disc_forward.1} parent=5 // pred_region
      %s4901 = ssub.s32 %s23, 2
    $region104: #{disc_forward.1} parent=5 // pred_fallthru
      _
  $region6: #{disc_forward.1} parent=0 // loop_footer
    %s27 = sadd.s32 1, %s23
  $region7: #{disc_forward.1} parent=0 // loop_footer_branch
    %22 = sbr.rel target = $region3
  $region8: #{disc_forward.1} parent=0 // loop_exit
    _

</llo_original>
